<compile_context>
chip_gen: v7x
topology: tpu7x:2x2x1
jax: 0.10.0
libtpu: 0.0.40
codegen_flags: <defaults>
</compile_context>

<pallas_src>
import functools

import jax
import jax.numpy as jnp
from jax.experimental import pallas as pl
from jax.experimental.pallas import tpu as pltpu


def _residual_block_kernel(x_ref, a1_ref, a2_ref, p_ref, m_ref, o_ref,
                           *, N, C, H, W):
    """Fused residual block, all-f32 VPU path.

    x_ref  : (N*C, H*W) f32   activations; rows are (n, c) pairs, lanes = H*W
    a1/a2  : (9, N*C, N*C) f32 per-tap batch-block-diagonal conv weights
    p_ref  : (N*C, 6)    f32   columns = [b1, gamma1, beta1, b2, gamma2, beta2]
    m_ref  : (9, H*W)    f32   per-tap SAME-padding masks (1 inside the image)
    o_ref  : (N*C, H*W)  f32   output
    """
    HW = H * W
    NC = N * C
    eps = 1e-5
    inv_n = 1.0 / (N * HW)

    x = x_ref[...]                       # conv1 input + residual
    p = p_ref[...]
    masks = m_ref[...]                   # hoisted: loaded once, used by both convs

    def conv3x3(act, a_ref, bias_rows):
        # 3x3 SAME conv on the VPU: per-tap cyclic lane roll + boundary mask,
        # then broadcast FMAs against the (NC, NC) tap weight block.
        # (MXU intentionally skipped: at C=4 it would be ~98% idle.)
        y = jnp.zeros_like(act)
        for t in range(9):
            dh, dw = t // 3, t % 3
            k = (dh - 1) * W + (dw - 1)          # flat in-image offset of tap t
            if k == 0:
                xs = act                          # centre tap: mask is all ones
            else:
                xs = pltpu.roll(act, shift=(-k) % HW, axis=1) * masks[t:t + 1, :]
            at = a_ref[t]                         # (NC, NC) weights for tap t
            for q in range(NC):
                y = y + at[:, q:q + 1] * xs[q:q + 1, :]
        return y + bias_rows

    def channel_total(v):
        # v: (NC, 1) per-row lane sums -> per-channel totals over the batch,
        # already tiled back to every row (sublane roll-reduce, no relayout).
        tot = v
        for n in range(1, N):
            tot = tot + pltpu.roll(v, shift=n * C, axis=0)
        return tot

    def batchnorm(y, gamma_rows, beta_rows):
        # training-mode BN: biased batch stats over (N, H, W); two-pass
        # (centered) variance avoids E[x^2] - E[x]^2 cancellation.
        mean = channel_total(jnp.sum(y, axis=1, keepdims=True)) * inv_n
        d = y - mean
        var = channel_total(jnp.sum(d * d, axis=1, keepdims=True)) * inv_n
        return d * (jax.lax.rsqrt(var + eps) * gamma_rows) + beta_rows

    # conv1 -> bn1 -> relu
    h = conv3x3(x, a1_ref, p[:, 0:1])
    h = batchnorm(h, p[:, 1:2], p[:, 2:3])
    h = jnp.maximum(h, 0.0)

    # conv2 -> bn2 -> +residual -> relu   (lane-dense, full-width store)
    y = conv3x3(h, a2_ref, p[:, 3:4])
    y = batchnorm(y, p[:, 4:5], p[:, 5:6])
    o_ref[...] = jnp.maximum(y + x, 0.0)


def residual_block(x_nchw, w1, b1, w2, b2, gamma1, beta1, gamma2, beta2):
    """x_nchw: (N, C, H, W) f32.  Conv weights w*: (3, 3, C_in, C_out) (HWIO).

    BatchNorm uses training-mode batch statistics (a freshly constructed
    nn.BatchNorm2d in train(), as in the reference module's forward).
    """
    N, C, H, W = x_nchw.shape
    HW, NC = H * W, N * C

    # (N*C, H*W): pure reshape of NCHW -- no transpose, no extra HBM traffic.
    x2 = x_nchw.reshape(NC, HW).astype(jnp.float32)

    def block_weights(w):
        # (3,3,Ci,Co) HWIO -> (9, N*Co, N*Ci) batch-block-diagonal tap matrices:
        # A[t, n*C+co, n'*C+ci] = w[tap=t, ci, co] if n == n' else 0.
        wt = jnp.transpose(w.reshape(9, C, C), (0, 2, 1))       # (tap, co, ci)
        eye = jnp.eye(N, dtype=jnp.float32)
        a = wt[:, None, :, None, :] * eye[None, :, None, :, None]
        return a.reshape(9, NC, NC).astype(jnp.float32)

    a1 = block_weights(w1)
    a2 = block_weights(w2)

    def per_row(v):  # (C,) -> (N*C,): row n*C+c carries the value for channel c
        return jnp.tile(v, N)

    params = jnp.stack([per_row(b1), per_row(gamma1), per_row(beta1),
                        per_row(b2), per_row(gamma2), per_row(beta2)],
                       axis=1).astype(jnp.float32)               # (NC, 6)

    # per-tap SAME-padding boundary masks over one image's flattened (H, W)
    ii = jnp.arange(H)
    jj = jnp.arange(W)
    mask_rows = []
    for dh in range(3):
        for dw in range(3):
            row_ok = (ii + (dh - 1) >= 0) & (ii + (dh - 1) < H)
            col_ok = (jj + (dw - 1) >= 0) & (jj + (dw - 1) < W)
            m = (row_ok[:, None] & col_ok[None, :]).astype(jnp.float32)
            mask_rows.append(m.reshape(-1))
    masks = jnp.stack(mask_rows, axis=0)                          # (9, HW)

    vmem = pl.BlockSpec(memory_space=pltpu.MemorySpace.VMEM)
    out2 = pl.pallas_call(
        functools.partial(_residual_block_kernel, N=N, C=C, H=H, W=W),
        in_specs=[vmem, vmem, vmem, vmem, vmem],
        out_specs=vmem,
        out_shape=jax.ShapeDtypeStruct((NC, HW), jnp.float32),
    )(x2, a1, a2, params, masks)

    return out2.reshape(N, C, H, W)    # pure reshape back to the caller's NCHW


def residual_block_ref(x_nchw, w1, b1, w2, b2, gamma1, beta1, gamma2, beta2):
    """Pure-JAX reference (training-mode BN, biases included), for checking."""
    eps = 1e-5
    x = jnp.transpose(x_nchw, (0, 2, 3, 1)).astype(jnp.float32)
    dn = jax.lax.conv_dimension_numbers(x.shape, w1.shape,
                                        ('NHWC', 'HWIO', 'NHWC'))

    def conv(inp, w, b):
        y = jax.lax.conv_general_dilated(inp, w, (1, 1), 'SAME',
                                         dimension_numbers=dn,
                                         precision=jax.lax.Precision.HIGHEST)
        return y + b

    def bn(y, g, bt):
        mean = jnp.mean(y, axis=(0, 1, 2), keepdims=True)
        var = jnp.mean((y - mean) ** 2, axis=(0, 1, 2), keepdims=True)
        return (y - mean) / jnp.sqrt(var + eps) * g + bt

    h = jax.nn.relu(bn(conv(x, w1, b1), gamma1, beta1))
    h = bn(conv(h, w2, b2), gamma2, beta2)
    out = jax.nn.relu(h + x)
    return jnp.transpose(out, (0, 3, 1, 2))


if __name__ == "__main__":
    N, C, H, W = 2, 4, 16, 16

    key = jax.random.PRNGKey(0)
    kx, kw1, kb1, kw2, kb2 = jax.random.split(key, 5)

    # input, NCHW like PyTorch
    x = jax.random.normal(kx, (N, C, H, W), dtype=jnp.float32)

    # Conv2d(channels, channels, 3, padding=1): default PyTorch init range
    fan_in = C * 3 * 3
    bound = 1.0 / (fan_in ** 0.5)
    w1 = jax.random.uniform(kw1, (3, 3, C, C), jnp.float32, -bound, bound)
    b1 = jax.random.uniform(kb1, (C,), jnp.float32, -bound, bound)
    w2 = jax.random.uniform(kw2, (3, 3, C, C), jnp.float32, -bound, bound)
    b2 = jax.random.uniform(kb2, (C,), jnp.float32, -bound, bound)

    # BatchNorm2d default init: weight=1, bias=0
    gamma1 = jnp.ones((C,), jnp.float32)
    beta1 = jnp.zeros((C,), jnp.float32)
    gamma2 = jnp.ones((C,), jnp.float32)
    beta2 = jnp.zeros((C,), jnp.float32)

    out = residual_block(x, w1, b1, w2, b2, gamma1, beta1, gamma2, beta2)
    out = jax.block_until_ready(out)

    ref = residual_block_ref(x, w1, b1, w2, b2, gamma1, beta1, gamma2, beta2)
    ref = jax.block_until_ready(ref)

    assert out.shape == (N, C, H, W)
    err = float(jnp.max(jnp.abs(out - ref)))
    # all-f32 kernel -> tight tolerance (previous bf16-MXU version needed 5e-2)
    assert jnp.allclose(out, ref, atol=1e-3, rtol=1e-3), f"max abs err = {err}"

    print("KERNEL_OK")
</pallas_src>

<mosaic_0001>
module attributes {stable_mosaic.version = 11 : i64} {
  func.func @_residual_block_kernel(%arg0: memref<8x256xf32, #tpu.memory_space<vmem>>, %arg1: memref<9x8x8xf32, #tpu.memory_space<vmem>>, %arg2: memref<9x8x8xf32, #tpu.memory_space<vmem>>, %arg3: memref<8x6xf32, #tpu.memory_space<vmem>>, %arg4: memref<9x256xf32, #tpu.memory_space<vmem>>, %arg5: memref<8x256xf32, #tpu.memory_space<vmem>>) attributes {dimension_semantics = [], scalar_prefetch = 0 : i64, scratch_operands = 0 : i64, tpu.core_type = #tpu.core_type<tc>} {
    %c0 = arith.constant 0 : index
    %c0_0 = arith.constant 0 : index
    %0 = vector.load %arg0[%c0, %c0_0] : memref<8x256xf32, #tpu.memory_space<vmem>>, vector<8x256xf32>
    %c0_1 = arith.constant 0 : index
    %c0_2 = arith.constant 0 : index
    %1 = vector.load %arg3[%c0_1, %c0_2] : memref<8x6xf32, #tpu.memory_space<vmem>>, vector<8x6xf32>
    %c0_3 = arith.constant 0 : index
    %c0_4 = arith.constant 0 : index
    %2 = vector.load %arg4[%c0_3, %c0_4] : memref<9x256xf32, #tpu.memory_space<vmem>>, vector<9x256xf32>
    %3 = vector.extract_strided_slice %1 {offsets = [0, 0], sizes = [8, 1], strides = [1, 1]} : vector<8x6xf32> to vector<8x1xf32>
    %cst = arith.constant 0.000000e+00 : f32
    %4 = vector.broadcast %cst : f32 to vector<8x256xf32>
    %c17_i32 = arith.constant 17 : i32
    %5 = tpu.dynamic_rotate %0 by %c17_i32 dim 1 : vector<8x256xf32>, i32 -> vector<8x256xf32>
    %6 = vector.extract_strided_slice %2 {offsets = [0, 0], sizes = [1, 256], strides = [1, 1]} : vector<9x256xf32> to vector<1x256xf32>
    %7 = vector.broadcast %6 : vector<1x256xf32> to vector<8x256xf32>
    %8 = arith.mulf %5, %7 : vector<8x256xf32>
    %c0_5 = arith.constant 0 : index
    %c0_6 = arith.constant 0 : index
    %c0_7 = arith.constant 0 : index
    %9 = vector.load %arg1[%c0_5, %c0_6, %c0_7] : memref<9x8x8xf32, #tpu.memory_space<vmem>>, vector<1x8x8xf32>
    %10 = vector.shape_cast %9 : vector<1x8x8xf32> to vector<8x8xf32>
    %11 = vector.extract_strided_slice %10 {offsets = [0, 0], sizes = [8, 1], strides = [1, 1]} : vector<8x8xf32> to vector<8x1xf32>
    %12 = vector.extract_strided_slice %8 {offsets = [0, 0], sizes = [1, 256], strides = [1, 1]} : vector<8x256xf32> to vector<1x256xf32>
    %13 = vector.broadcast %11 : vector<8x1xf32> to vector<8x256xf32>
    %14 = vector.broadcast %12 : vector<1x256xf32> to vector<8x256xf32>
    %15 = arith.mulf %13, %14 : vector<8x256xf32>
    %16 = arith.addf %4, %15 : vector<8x256xf32>
    %17 = vector.extract_strided_slice %10 {offsets = [0, 1], sizes = [8, 1], strides = [1, 1]} : vector<8x8xf32> to vector<8x1xf32>
    %18 = vector.extract_strided_slice %8 {offsets = [1, 0], sizes = [1, 256], strides = [1, 1]} : vector<8x256xf32> to vector<1x256xf32>
    %19 = vector.broadcast %17 : vector<8x1xf32> to vector<8x256xf32>
    %20 = vector.broadcast %18 : vector<1x256xf32> to vector<8x256xf32>
    %21 = arith.mulf %19, %20 : vector<8x256xf32>
    %22 = arith.addf %16, %21 : vector<8x256xf32>
    %23 = vector.extract_strided_slice %10 {offsets = [0, 2], sizes = [8, 1], strides = [1, 1]} : vector<8x8xf32> to vector<8x1xf32>
    %24 = vector.extract_strided_slice %8 {offsets = [2, 0], sizes = [1, 256], strides = [1, 1]} : vector<8x256xf32> to vector<1x256xf32>
    %25 = vector.broadcast %23 : vector<8x1xf32> to vector<8x256xf32>
    %26 = vector.broadcast %24 : vector<1x256xf32> to vector<8x256xf32>
    %27 = arith.mulf %25, %26 : vector<8x256xf32>
    %28 = arith.addf %22, %27 : vector<8x256xf32>
    %29 = vector.extract_strided_slice %10 {offsets = [0, 3], sizes = [8, 1], strides = [1, 1]} : vector<8x8xf32> to vector<8x1xf32>
    %30 = vector.extract_strided_slice %8 {offsets = [3, 0], sizes = [1, 256], strides = [1, 1]} : vector<8x256xf32> to vector<1x256xf32>
    %31 = vector.broadcast %29 : vector<8x1xf32> to vector<8x256xf32>
    %32 = vector.broadcast %30 : vector<1x256xf32> to vector<8x256xf32>
    %33 = arith.mulf %31, %32 : vector<8x256xf32>
    %34 = arith.addf %28, %33 : vector<8x256xf32>
    %35 = vector.extract_strided_slice %10 {offsets = [0, 4], sizes = [8, 1], strides = [1, 1]} : vector<8x8xf32> to vector<8x1xf32>
    %36 = vector.extract_strided_slice %8 {offsets = [4, 0], sizes = [1, 256], strides = [1, 1]} : vector<8x256xf32> to vector<1x256xf32>
    %37 = vector.broadcast %35 : vector<8x1xf32> to vector<8x256xf32>
    %38 = vector.broadcast %36 : vector<1x256xf32> to vector<8x256xf32>
    %39 = arith.mulf %37, %38 : vector<8x256xf32>
    %40 = arith.addf %34, %39 : vector<8x256xf32>
    %41 = vector.extract_strided_slice %10 {offsets = [0, 5], sizes = [8, 1], strides = [1, 1]} : vector<8x8xf32> to vector<8x1xf32>
    %42 = vector.extract_strided_slice %8 {offsets = [5, 0], sizes = [1, 256], strides = [1, 1]} : vector<8x256xf32> to vector<1x256xf32>
    %43 = vector.broadcast %41 : vector<8x1xf32> to vector<8x256xf32>
    %44 = vector.broadcast %42 : vector<1x256xf32> to vector<8x256xf32>
    %45 = arith.mulf %43, %44 : vector<8x256xf32>
    %46 = arith.addf %40, %45 : vector<8x256xf32>
    %47 = vector.extract_strided_slice %10 {offsets = [0, 6], sizes = [8, 1], strides = [1, 1]} : vector<8x8xf32> to vector<8x1xf32>
    %48 = vector.extract_strided_slice %8 {offsets = [6, 0], sizes = [1, 256], strides = [1, 1]} : vector<8x256xf32> to vector<1x256xf32>
    %49 = vector.broadcast %47 : vector<8x1xf32> to vector<8x256xf32>
    %50 = vector.broadcast %48 : vector<1x256xf32> to vector<8x256xf32>
    %51 = arith.mulf %49, %50 : vector<8x256xf32>
    %52 = arith.addf %46, %51 : vector<8x256xf32>
    %53 = vector.extract_strided_slice %10 {offsets = [0, 7], sizes = [8, 1], strides = [1, 1]} : vector<8x8xf32> to vector<8x1xf32>
    %54 = vector.extract_strided_slice %8 {offsets = [7, 0], sizes = [1, 256], strides = [1, 1]} : vector<8x256xf32> to vector<1x256xf32>
    %55 = vector.broadcast %53 : vector<8x1xf32> to vector<8x256xf32>
    %56 = vector.broadcast %54 : vector<1x256xf32> to vector<8x256xf32>
    %57 = arith.mulf %55, %56 : vector<8x256xf32>
    %58 = arith.addf %52, %57 : vector<8x256xf32>
    %c16_i32 = arith.constant 16 : i32
    %59 = tpu.dynamic_rotate %0 by %c16_i32 dim 1 : vector<8x256xf32>, i32 -> vector<8x256xf32>
    %60 = vector.extract_strided_slice %2 {offsets = [1, 0], sizes = [1, 256], strides = [1, 1]} : vector<9x256xf32> to vector<1x256xf32>
    %61 = vector.broadcast %60 : vector<1x256xf32> to vector<8x256xf32>
    %62 = arith.mulf %59, %61 : vector<8x256xf32>
    %c1 = arith.constant 1 : index
    %c0_8 = arith.constant 0 : index
    %c0_9 = arith.constant 0 : index
    %63 = vector.load %arg1[%c1, %c0_8, %c0_9] : memref<9x8x8xf32, #tpu.memory_space<vmem>>, vector<1x8x8xf32>
    %64 = vector.shape_cast %63 : vector<1x8x8xf32> to vector<8x8xf32>
    %65 = vector.extract_strided_slice %64 {offsets = [0, 0], sizes = [8, 1], strides = [1, 1]} : vector<8x8xf32> to vector<8x1xf32>
    %66 = vector.extract_strided_slice %62 {offsets = [0, 0], sizes = [1, 256], strides = [1, 1]} : vector<8x256xf32> to vector<1x256xf32>
    %67 = vector.broadcast %65 : vector<8x1xf32> to vector<8x256xf32>
    %68 = vector.broadcast %66 : vector<1x256xf32> to vector<8x256xf32>
    %69 = arith.mulf %67, %68 : vector<8x256xf32>
    %70 = arith.addf %58, %69 : vector<8x256xf32>
    %71 = vector.extract_strided_slice %64 {offsets = [0, 1], sizes = [8, 1], strides = [1, 1]} : vector<8x8xf32> to vector<8x1xf32>
    %72 = vector.extract_strided_slice %62 {offsets = [1, 0], sizes = [1, 256], strides = [1, 1]} : vector<8x256xf32> to vector<1x256xf32>
    %73 = vector.broadcast %71 : vector<8x1xf32> to vector<8x256xf32>
    %74 = vector.broadcast %72 : vector<1x256xf32> to vector<8x256xf32>
    %75 = arith.mulf %73, %74 : vector<8x256xf32>
    %76 = arith.addf %70, %75 : vector<8x256xf32>
    %77 = vector.extract_strided_slice %64 {offsets = [0, 2], sizes = [8, 1], strides = [1, 1]} : vector<8x8xf32> to vector<8x1xf32>
    %78 = vector.extract_strided_slice %62 {offsets = [2, 0], sizes = [1, 256], strides = [1, 1]} : vector<8x256xf32> to vector<1x256xf32>
    %79 = vector.broadcast %77 : vector<8x1xf32> to vector<8x256xf32>
    %80 = vector.broadcast %78 : vector<1x256xf32> to vector<8x256xf32>
    %81 = arith.mulf %79, %80 : vector<8x256xf32>
    %82 = arith.addf %76, %81 : vector<8x256xf32>
    %83 = vector.extract_strided_slice %64 {offsets = [0, 3], sizes = [8, 1], strides = [1, 1]} : vector<8x8xf32> to vector<8x1xf32>
    %84 = vector.extract_strided_slice %62 {offsets = [3, 0], sizes = [1, 256], strides = [1, 1]} : vector<8x256xf32> to vector<1x256xf32>
    %85 = vector.broadcast %83 : vector<8x1xf32> to vector<8x256xf32>
    %86 = vector.broadcast %84 : vector<1x256xf32> to vector<8x256xf32>
    %87 = arith.mulf %85, %86 : vector<8x256xf32>
    %88 = arith.addf %82, %87 : vector<8x256xf32>
    %89 = vector.extract_strided_slice %64 {offsets = [0, 4], sizes = [8, 1], strides = [1, 1]} : vector<8x8xf32> to vector<8x1xf32>
    %90 = vector.extract_strided_slice %62 {offsets = [4, 0], sizes = [1, 256], strides = [1, 1]} : vector<8x256xf32> to vector<1x256xf32>
    %91 = vector.broadcast %89 : vector<8x1xf32> to vector<8x256xf32>
    %92 = vector.broadcast %90 : vector<1x256xf32> to vector<8x256xf32>
    %93 = arith.mulf %91, %92 : vector<8x256xf32>
    %94 = arith.addf %88, %93 : vector<8x256xf32>
    %95 = vector.extract_strided_slice %64 {offsets = [0, 5], sizes = [8, 1], strides = [1, 1]} : vector<8x8xf32> to vector<8x1xf32>
    %96 = vector.extract_strided_slice %62 {offsets = [5, 0], sizes = [1, 256], strides = [1, 1]} : vector<8x256xf32> to vector<1x256xf32>
    %97 = vector.broadcast %95 : vector<8x1xf32> to vector<8x256xf32>
    %98 = vector.broadcast %96 : vector<1x256xf32> to vector<8x256xf32>
    %99 = arith.mulf %97, %98 : vector<8x256xf32>
    %100 = arith.addf %94, %99 : vector<8x256xf32>
    %101 = vector.extract_strided_slice %64 {offsets = [0, 6], sizes = [8, 1], strides = [1, 1]} : vector<8x8xf32> to vector<8x1xf32>
    %102 = vector.extract_strided_slice %62 {offsets = [6, 0], sizes = [1, 256], strides = [1, 1]} : vector<8x256xf32> to vector<1x256xf32>
    %103 = vector.broadcast %101 : vector<8x1xf32> to vector<8x256xf32>
    %104 = vector.broadcast %102 : vector<1x256xf32> to vector<8x256xf32>
    %105 = arith.mulf %103, %104 : vector<8x256xf32>
    %106 = arith.addf %100, %105 : vector<8x256xf32>
    %107 = vector.extract_strided_slice %64 {offsets = [0, 7], sizes = [8, 1], strides = [1, 1]} : vector<8x8xf32> to vector<8x1xf32>
    %108 = vector.extract_strided_slice %62 {offsets = [7, 0], sizes = [1, 256], strides = [1, 1]} : vector<8x256xf32> to vector<1x256xf32>
    %109 = vector.broadcast %107 : vector<8x1xf32> to vector<8x256xf32>
    %110 = vector.broadcast %108 : vector<1x256xf32> to vector<8x256xf32>
    %111 = arith.mulf %109, %110 : vector<8x256xf32>
    %112 = arith.addf %106, %111 : vector<8x256xf32>
    %c15_i32 = arith.constant 15 : i32
    %113 = tpu.dynamic_rotate %0 by %c15_i32 dim 1 : vector<8x256xf32>, i32 -> vector<8x256xf32>
    %114 = vector.extract_strided_slice %2 {offsets = [2, 0], sizes = [1, 256], strides = [1, 1]} : vector<9x256xf32> to vector<1x256xf32>
    %115 = vector.broadcast %114 : vector<1x256xf32> to vector<8x256xf32>
    %116 = arith.mulf %113, %115 : vector<8x256xf32>
    %c2 = arith.constant 2 : index
    %c0_10 = arith.constant 0 : index
    %c0_11 = arith.constant 0 : index
    %117 = vector.load %arg1[%c2, %c0_10, %c0_11] : memref<9x8x8xf32, #tpu.memory_space<vmem>>, vector<1x8x8xf32>
    %118 = vector.shape_cast %117 : vector<1x8x8xf32> to vector<8x8xf32>
    %119 = vector.extract_strided_slice %118 {offsets = [0, 0], sizes = [8, 1], strides = [1, 1]} : vector<8x8xf32> to vector<8x1xf32>
    %120 = vector.extract_strided_slice %116 {offsets = [0, 0], sizes = [1, 256], strides = [1, 1]} : vector<8x256xf32> to vector<1x256xf32>
    %121 = vector.broadcast %119 : vector<8x1xf32> to vector<8x256xf32>
    %122 = vector.broadcast %120 : vector<1x256xf32> to vector<8x256xf32>
    %123 = arith.mulf %121, %122 : vector<8x256xf32>
    %124 = arith.addf %112, %123 : vector<8x256xf32>
    %125 = vector.extract_strided_slice %118 {offsets = [0, 1], sizes = [8, 1], strides = [1, 1]} : vector<8x8xf32> to vector<8x1xf32>
    %126 = vector.extract_strided_slice %116 {offsets = [1, 0], sizes = [1, 256], strides = [1, 1]} : vector<8x256xf32> to vector<1x256xf32>
    %127 = vector.broadcast %125 : vector<8x1xf32> to vector<8x256xf32>
    %128 = vector.broadcast %126 : vector<1x256xf32> to vector<8x256xf32>
    %129 = arith.mulf %127, %128 : vector<8x256xf32>
    %130 = arith.addf %124, %129 : vector<8x256xf32>
    %131 = vector.extract_strided_slice %118 {offsets = [0, 2], sizes = [8, 1], strides = [1, 1]} : vector<8x8xf32> to vector<8x1xf32>
    %132 = vector.extract_strided_slice %116 {offsets = [2, 0], sizes = [1, 256], strides = [1, 1]} : vector<8x256xf32> to vector<1x256xf32>
    %133 = vector.broadcast %131 : vector<8x1xf32> to vector<8x256xf32>
    %134 = vector.broadcast %132 : vector<1x256xf32> to vector<8x256xf32>
    %135 = arith.mulf %133, %134 : vector<8x256xf32>
    %136 = arith.addf %130, %135 : vector<8x256xf32>
    %137 = vector.extract_strided_slice %118 {offsets = [0, 3], sizes = [8, 1], strides = [1, 1]} : vector<8x8xf32> to vector<8x1xf32>
    %138 = vector.extract_strided_slice %116 {offsets = [3, 0], sizes = [1, 256], strides = [1, 1]} : vector<8x256xf32> to vector<1x256xf32>
    %139 = vector.broadcast %137 : vector<8x1xf32> to vector<8x256xf32>
    %140 = vector.broadcast %138 : vector<1x256xf32> to vector<8x256xf32>
    %141 = arith.mulf %139, %140 : vector<8x256xf32>
    %142 = arith.addf %136, %141 : vector<8x256xf32>
    %143 = vector.extract_strided_slice %118 {offsets = [0, 4], sizes = [8, 1], strides = [1, 1]} : vector<8x8xf32> to vector<8x1xf32>
    %144 = vector.extract_strided_slice %116 {offsets = [4, 0], sizes = [1, 256], strides = [1, 1]} : vector<8x256xf32> to vector<1x256xf32>
    %145 = vector.broadcast %143 : vector<8x1xf32> to vector<8x256xf32>
    %146 = vector.broadcast %144 : vector<1x256xf32> to vector<8x256xf32>
    %147 = arith.mulf %145, %146 : vector<8x256xf32>
    %148 = arith.addf %142, %147 : vector<8x256xf32>
    %149 = vector.extract_strided_slice %118 {offsets = [0, 5], sizes = [8, 1], strides = [1, 1]} : vector<8x8xf32> to vector<8x1xf32>
    %150 = vector.extract_strided_slice %116 {offsets = [5, 0], sizes = [1, 256], strides = [1, 1]} : vector<8x256xf32> to vector<1x256xf32>
    %151 = vector.broadcast %149 : vector<8x1xf32> to vector<8x256xf32>
    %152 = vector.broadcast %150 : vector<1x256xf32> to vector<8x256xf32>
    %153 = arith.mulf %151, %152 : vector<8x256xf32>
    %154 = arith.addf %148, %153 : vector<8x256xf32>
    %155 = vector.extract_strided_slice %118 {offsets = [0, 6], sizes = [8, 1], strides = [1, 1]} : vector<8x8xf32> to vector<8x1xf32>
    %156 = vector.extract_strided_slice %116 {offsets = [6, 0], sizes = [1, 256], strides = [1, 1]} : vector<8x256xf32> to vector<1x256xf32>
    %157 = vector.broadcast %155 : vector<8x1xf32> to vector<8x256xf32>
    %158 = vector.broadcast %156 : vector<1x256xf32> to vector<8x256xf32>
    %159 = arith.mulf %157, %158 : vector<8x256xf32>
    %160 = arith.addf %154, %159 : vector<8x256xf32>
    %161 = vector.extract_strided_slice %118 {offsets = [0, 7], sizes = [8, 1], strides = [1, 1]} : vector<8x8xf32> to vector<8x1xf32>
    %162 = vector.extract_strided_slice %116 {offsets = [7, 0], sizes = [1, 256], strides = [1, 1]} : vector<8x256xf32> to vector<1x256xf32>
    %163 = vector.broadcast %161 : vector<8x1xf32> to vector<8x256xf32>
    %164 = vector.broadcast %162 : vector<1x256xf32> to vector<8x256xf32>
    %165 = arith.mulf %163, %164 : vector<8x256xf32>
    %166 = arith.addf %160, %165 : vector<8x256xf32>
    %c1_i32 = arith.constant 1 : i32
    %167 = tpu.dynamic_rotate %0 by %c1_i32 dim 1 : vector<8x256xf32>, i32 -> vector<8x256xf32>
    %168 = vector.extract_strided_slice %2 {offsets = [3, 0], sizes = [1, 256], strides = [1, 1]} : vector<9x256xf32> to vector<1x256xf32>
    %169 = vector.broadcast %168 : vector<1x256xf32> to vector<8x256xf32>
    %170 = arith.mulf %167, %169 : vector<8x256xf32>
    %c3 = arith.constant 3 : index
    %c0_12 = arith.constant 0 : index
    %c0_13 = arith.constant 0 : index
    %171 = vector.load %arg1[%c3, %c0_12, %c0_13] : memref<9x8x8xf32, #tpu.memory_space<vmem>>, vector<1x8x8xf32>
    %172 = vector.shape_cast %171 : vector<1x8x8xf32> to vector<8x8xf32>
    %173 = vector.extract_strided_slice %172 {offsets = [0, 0], sizes = [8, 1], strides = [1, 1]} : vector<8x8xf32> to vector<8x1xf32>
    %174 = vector.extract_strided_slice %170 {offsets = [0, 0], sizes = [1, 256], strides = [1, 1]} : vector<8x256xf32> to vector<1x256xf32>
    %175 = vector.broadcast %173 : vector<8x1xf32> to vector<8x256xf32>
    %176 = vector.broadcast %174 : vector<1x256xf32> to vector<8x256xf32>
    %177 = arith.mulf %175, %176 : vector<8x256xf32>
    %178 = arith.addf %166, %177 : vector<8x256xf32>
    %179 = vector.extract_strided_slice %172 {offsets = [0, 1], sizes = [8, 1], strides = [1, 1]} : vector<8x8xf32> to vector<8x1xf32>
    %180 = vector.extract_strided_slice %170 {offsets = [1, 0], sizes = [1, 256], strides = [1, 1]} : vector<8x256xf32> to vector<1x256xf32>
    %181 = vector.broadcast %179 : vector<8x1xf32> to vector<8x256xf32>
    %182 = vector.broadcast %180 : vector<1x256xf32> to vector<8x256xf32>
    %183 = arith.mulf %181, %182 : vector<8x256xf32>
    %184 = arith.addf %178, %183 : vector<8x256xf32>
    %185 = vector.extract_strided_slice %172 {offsets = [0, 2], sizes = [8, 1], strides = [1, 1]} : vector<8x8xf32> to vector<8x1xf32>
    %186 = vector.extract_strided_slice %170 {offsets = [2, 0], sizes = [1, 256], strides = [1, 1]} : vector<8x256xf32> to vector<1x256xf32>
    %187 = vector.broadcast %185 : vector<8x1xf32> to vector<8x256xf32>
    %188 = vector.broadcast %186 : vector<1x256xf32> to vector<8x256xf32>
    %189 = arith.mulf %187, %188 : vector<8x256xf32>
    %190 = arith.addf %184, %189 : vector<8x256xf32>
    %191 = vector.extract_strided_slice %172 {offsets = [0, 3], sizes = [8, 1], strides = [1, 1]} : vector<8x8xf32> to vector<8x1xf32>
    %192 = vector.extract_strided_slice %170 {offsets = [3, 0], sizes = [1, 256], strides = [1, 1]} : vector<8x256xf32> to vector<1x256xf32>
    %193 = vector.broadcast %191 : vector<8x1xf32> to vector<8x256xf32>
    %194 = vector.broadcast %192 : vector<1x256xf32> to vector<8x256xf32>
    %195 = arith.mulf %193, %194 : vector<8x256xf32>
    %196 = arith.addf %190, %195 : vector<8x256xf32>
    %197 = vector.extract_strided_slice %172 {offsets = [0, 4], sizes = [8, 1], strides = [1, 1]} : vector<8x8xf32> to vector<8x1xf32>
    %198 = vector.extract_strided_slice %170 {offsets = [4, 0], sizes = [1, 256], strides = [1, 1]} : vector<8x256xf32> to vector<1x256xf32>
    %199 = vector.broadcast %197 : vector<8x1xf32> to vector<8x256xf32>
    %200 = vector.broadcast %198 : vector<1x256xf32> to vector<8x256xf32>
    %201 = arith.mulf %199, %200 : vector<8x256xf32>
    %202 = arith.addf %196, %201 : vector<8x256xf32>
    %203 = vector.extract_strided_slice %172 {offsets = [0, 5], sizes = [8, 1], strides = [1, 1]} : vector<8x8xf32> to vector<8x1xf32>
    %204 = vector.extract_strided_slice %170 {offsets = [5, 0], sizes = [1, 256], strides = [1, 1]} : vector<8x256xf32> to vector<1x256xf32>
    %205 = vector.broadcast %203 : vector<8x1xf32> to vector<8x256xf32>
    %206 = vector.broadcast %204 : vector<1x256xf32> to vector<8x256xf32>
    %207 = arith.mulf %205, %206 : vector<8x256xf32>
    %208 = arith.addf %202, %207 : vector<8x256xf32>
    %209 = vector.extract_strided_slice %172 {offsets = [0, 6], sizes = [8, 1], strides = [1, 1]} : vector<8x8xf32> to vector<8x1xf32>
    %210 = vector.extract_strided_slice %170 {offsets = [6, 0], sizes = [1, 256], strides = [1, 1]} : vector<8x256xf32> to vector<1x256xf32>
    %211 = vector.broadcast %209 : vector<8x1xf32> to vector<8x256xf32>
    %212 = vector.broadcast %210 : vector<1x256xf32> to vector<8x256xf32>
    %213 = arith.mulf %211, %212 : vector<8x256xf32>
    %214 = arith.addf %208, %213 : vector<8x256xf32>
    %215 = vector.extract_strided_slice %172 {offsets = [0, 7], sizes = [8, 1], strides = [1, 1]} : vector<8x8xf32> to vector<8x1xf32>
    %216 = vector.extract_strided_slice %170 {offsets = [7, 0], sizes = [1, 256], strides = [1, 1]} : vector<8x256xf32> to vector<1x256xf32>
    %217 = vector.broadcast %215 : vector<8x1xf32> to vector<8x256xf32>
    %218 = vector.broadcast %216 : vector<1x256xf32> to vector<8x256xf32>
    %219 = arith.mulf %217, %218 : vector<8x256xf32>
    %220 = arith.addf %214, %219 : vector<8x256xf32>
    %c4 = arith.constant 4 : index
    %c0_14 = arith.constant 0 : index
    %c0_15 = arith.constant 0 : index
    %221 = vector.load %arg1[%c4, %c0_14, %c0_15] : memref<9x8x8xf32, #tpu.memory_space<vmem>>, vector<1x8x8xf32>
    %222 = vector.shape_cast %221 : vector<1x8x8xf32> to vector<8x8xf32>
    %223 = vector.extract_strided_slice %222 {offsets = [0, 0], sizes = [8, 1], strides = [1, 1]} : vector<8x8xf32> to vector<8x1xf32>
    %224 = vector.extract_strided_slice %0 {offsets = [0, 0], sizes = [1, 256], strides = [1, 1]} : vector<8x256xf32> to vector<1x256xf32>
    %225 = vector.broadcast %223 : vector<8x1xf32> to vector<8x256xf32>
    %226 = vector.broadcast %224 : vector<1x256xf32> to vector<8x256xf32>
    %227 = arith.mulf %225, %226 : vector<8x256xf32>
    %228 = arith.addf %220, %227 : vector<8x256xf32>
    %229 = vector.extract_strided_slice %222 {offsets = [0, 1], sizes = [8, 1], strides = [1, 1]} : vector<8x8xf32> to vector<8x1xf32>
    %230 = vector.extract_strided_slice %0 {offsets = [1, 0], sizes = [1, 256], strides = [1, 1]} : vector<8x256xf32> to vector<1x256xf32>
    %231 = vector.broadcast %229 : vector<8x1xf32> to vector<8x256xf32>
    %232 = vector.broadcast %230 : vector<1x256xf32> to vector<8x256xf32>
    %233 = arith.mulf %231, %232 : vector<8x256xf32>
    %234 = arith.addf %228, %233 : vector<8x256xf32>
    %235 = vector.extract_strided_slice %222 {offsets = [0, 2], sizes = [8, 1], strides = [1, 1]} : vector<8x8xf32> to vector<8x1xf32>
    %236 = vector.extract_strided_slice %0 {offsets = [2, 0], sizes = [1, 256], strides = [1, 1]} : vector<8x256xf32> to vector<1x256xf32>
    %237 = vector.broadcast %235 : vector<8x1xf32> to vector<8x256xf32>
    %238 = vector.broadcast %236 : vector<1x256xf32> to vector<8x256xf32>
    %239 = arith.mulf %237, %238 : vector<8x256xf32>
    %240 = arith.addf %234, %239 : vector<8x256xf32>
    %241 = vector.extract_strided_slice %222 {offsets = [0, 3], sizes = [8, 1], strides = [1, 1]} : vector<8x8xf32> to vector<8x1xf32>
    %242 = vector.extract_strided_slice %0 {offsets = [3, 0], sizes = [1, 256], strides = [1, 1]} : vector<8x256xf32> to vector<1x256xf32>
    %243 = vector.broadcast %241 : vector<8x1xf32> to vector<8x256xf32>
    %244 = vector.broadcast %242 : vector<1x256xf32> to vector<8x256xf32>
    %245 = arith.mulf %243, %244 : vector<8x256xf32>
    %246 = arith.addf %240, %245 : vector<8x256xf32>
    %247 = vector.extract_strided_slice %222 {offsets = [0, 4], sizes = [8, 1], strides = [1, 1]} : vector<8x8xf32> to vector<8x1xf32>
    %248 = vector.extract_strided_slice %0 {offsets = [4, 0], sizes = [1, 256], strides = [1, 1]} : vector<8x256xf32> to vector<1x256xf32>
    %249 = vector.broadcast %247 : vector<8x1xf32> to vector<8x256xf32>
    %250 = vector.broadcast %248 : vector<1x256xf32> to vector<8x256xf32>
    %251 = arith.mulf %249, %250 : vector<8x256xf32>
    %252 = arith.addf %246, %251 : vector<8x256xf32>
    %253 = vector.extract_strided_slice %222 {offsets = [0, 5], sizes = [8, 1], strides = [1, 1]} : vector<8x8xf32> to vector<8x1xf32>
    %254 = vector.extract_strided_slice %0 {offsets = [5, 0], sizes = [1, 256], strides = [1, 1]} : vector<8x256xf32> to vector<1x256xf32>
    %255 = vector.broadcast %253 : vector<8x1xf32> to vector<8x256xf32>
    %256 = vector.broadcast %254 : vector<1x256xf32> to vector<8x256xf32>
    %257 = arith.mulf %255, %256 : vector<8x256xf32>
    %258 = arith.addf %252, %257 : vector<8x256xf32>
    %259 = vector.extract_strided_slice %222 {offsets = [0, 6], sizes = [8, 1], strides = [1, 1]} : vector<8x8xf32> to vector<8x1xf32>
    %260 = vector.extract_strided_slice %0 {offsets = [6, 0], sizes = [1, 256], strides = [1, 1]} : vector<8x256xf32> to vector<1x256xf32>
    %261 = vector.broadcast %259 : vector<8x1xf32> to vector<8x256xf32>
    %262 = vector.broadcast %260 : vector<1x256xf32> to vector<8x256xf32>
    %263 = arith.mulf %261, %262 : vector<8x256xf32>
    %264 = arith.addf %258, %263 : vector<8x256xf32>
    %265 = vector.extract_strided_slice %222 {offsets = [0, 7], sizes = [8, 1], strides = [1, 1]} : vector<8x8xf32> to vector<8x1xf32>
    %266 = vector.extract_strided_slice %0 {offsets = [7, 0], sizes = [1, 256], strides = [1, 1]} : vector<8x256xf32> to vector<1x256xf32>
    %267 = vector.broadcast %265 : vector<8x1xf32> to vector<8x256xf32>
    %268 = vector.broadcast %266 : vector<1x256xf32> to vector<8x256xf32>
    %269 = arith.mulf %267, %268 : vector<8x256xf32>
    %270 = arith.addf %264, %269 : vector<8x256xf32>
    %c255_i32 = arith.constant 255 : i32
    %271 = tpu.dynamic_rotate %0 by %c255_i32 dim 1 : vector<8x256xf32>, i32 -> vector<8x256xf32>
    %272 = vector.extract_strided_slice %2 {offsets = [5, 0], sizes = [1, 256], strides = [1, 1]} : vector<9x256xf32> to vector<1x256xf32>
    %273 = vector.broadcast %272 : vector<1x256xf32> to vector<8x256xf32>
    %274 = arith.mulf %271, %273 : vector<8x256xf32>
    %c5 = arith.constant 5 : index
    %c0_16 = arith.constant 0 : index
    %c0_17 = arith.constant 0 : index
    %275 = vector.load %arg1[%c5, %c0_16, %c0_17] : memref<9x8x8xf32, #tpu.memory_space<vmem>>, vector<1x8x8xf32>
    %276 = vector.shape_cast %275 : vector<1x8x8xf32> to vector<8x8xf32>
    %277 = vector.extract_strided_slice %276 {offsets = [0, 0], sizes = [8, 1], strides = [1, 1]} : vector<8x8xf32> to vector<8x1xf32>
    %278 = vector.extract_strided_slice %274 {offsets = [0, 0], sizes = [1, 256], strides = [1, 1]} : vector<8x256xf32> to vector<1x256xf32>
    %279 = vector.broadcast %277 : vector<8x1xf32> to vector<8x256xf32>
    %280 = vector.broadcast %278 : vector<1x256xf32> to vector<8x256xf32>
    %281 = arith.mulf %279, %280 : vector<8x256xf32>
    %282 = arith.addf %270, %281 : vector<8x256xf32>
    %283 = vector.extract_strided_slice %276 {offsets = [0, 1], sizes = [8, 1], strides = [1, 1]} : vector<8x8xf32> to vector<8x1xf32>
    %284 = vector.extract_strided_slice %274 {offsets = [1, 0], sizes = [1, 256], strides = [1, 1]} : vector<8x256xf32> to vector<1x256xf32>
    %285 = vector.broadcast %283 : vector<8x1xf32> to vector<8x256xf32>
    %286 = vector.broadcast %284 : vector<1x256xf32> to vector<8x256xf32>
    %287 = arith.mulf %285, %286 : vector<8x256xf32>
    %288 = arith.addf %282, %287 : vector<8x256xf32>
    %289 = vector.extract_strided_slice %276 {offsets = [0, 2], sizes = [8, 1], strides = [1, 1]} : vector<8x8xf32> to vector<8x1xf32>
    %290 = vector.extract_strided_slice %274 {offsets = [2, 0], sizes = [1, 256], strides = [1, 1]} : vector<8x256xf32> to vector<1x256xf32>
    %291 = vector.broadcast %289 : vector<8x1xf32> to vector<8x256xf32>
    %292 = vector.broadcast %290 : vector<1x256xf32> to vector<8x256xf32>
    %293 = arith.mulf %291, %292 : vector<8x256xf32>
    %294 = arith.addf %288, %293 : vector<8x256xf32>
    %295 = vector.extract_strided_slice %276 {offsets = [0, 3], sizes = [8, 1], strides = [1, 1]} : vector<8x8xf32> to vector<8x1xf32>
    %296 = vector.extract_strided_slice %274 {offsets = [3, 0], sizes = [1, 256], strides = [1, 1]} : vector<8x256xf32> to vector<1x256xf32>
    %297 = vector.broadcast %295 : vector<8x1xf32> to vector<8x256xf32>
    %298 = vector.broadcast %296 : vector<1x256xf32> to vector<8x256xf32>
    %299 = arith.mulf %297, %298 : vector<8x256xf32>
    %300 = arith.addf %294, %299 : vector<8x256xf32>
    %301 = vector.extract_strided_slice %276 {offsets = [0, 4], sizes = [8, 1], strides = [1, 1]} : vector<8x8xf32> to vector<8x1xf32>
    %302 = vector.extract_strided_slice %274 {offsets = [4, 0], sizes = [1, 256], strides = [1, 1]} : vector<8x256xf32> to vector<1x256xf32>
    %303 = vector.broadcast %301 : vector<8x1xf32> to vector<8x256xf32>
    %304 = vector.broadcast %302 : vector<1x256xf32> to vector<8x256xf32>
    %305 = arith.mulf %303, %304 : vector<8x256xf32>
    %306 = arith.addf %300, %305 : vector<8x256xf32>
    %307 = vector.extract_strided_slice %276 {offsets = [0, 5], sizes = [8, 1], strides = [1, 1]} : vector<8x8xf32> to vector<8x1xf32>
    %308 = vector.extract_strided_slice %274 {offsets = [5, 0], sizes = [1, 256], strides = [1, 1]} : vector<8x256xf32> to vector<1x256xf32>
    %309 = vector.broadcast %307 : vector<8x1xf32> to vector<8x256xf32>
    %310 = vector.broadcast %308 : vector<1x256xf32> to vector<8x256xf32>
    %311 = arith.mulf %309, %310 : vector<8x256xf32>
    %312 = arith.addf %306, %311 : vector<8x256xf32>
    %313 = vector.extract_strided_slice %276 {offsets = [0, 6], sizes = [8, 1], strides = [1, 1]} : vector<8x8xf32> to vector<8x1xf32>
    %314 = vector.extract_strided_slice %274 {offsets = [6, 0], sizes = [1, 256], strides = [1, 1]} : vector<8x256xf32> to vector<1x256xf32>
    %315 = vector.broadcast %313 : vector<8x1xf32> to vector<8x256xf32>
    %316 = vector.broadcast %314 : vector<1x256xf32> to vector<8x256xf32>
    %317 = arith.mulf %315, %316 : vector<8x256xf32>
    %318 = arith.addf %312, %317 : vector<8x256xf32>
    %319 = vector.extract_strided_slice %276 {offsets = [0, 7], sizes = [8, 1], strides = [1, 1]} : vector<8x8xf32> to vector<8x1xf32>
    %320 = vector.extract_strided_slice %274 {offsets = [7, 0], sizes = [1, 256], strides = [1, 1]} : vector<8x256xf32> to vector<1x256xf32>
    %321 = vector.broadcast %319 : vector<8x1xf32> to vector<8x256xf32>
    %322 = vector.broadcast %320 : vector<1x256xf32> to vector<8x256xf32>
    %323 = arith.mulf %321, %322 : vector<8x256xf32>
    %324 = arith.addf %318, %323 : vector<8x256xf32>
    %c241_i32 = arith.constant 241 : i32
    %325 = tpu.dynamic_rotate %0 by %c241_i32 dim 1 : vector<8x256xf32>, i32 -> vector<8x256xf32>
    %326 = vector.extract_strided_slice %2 {offsets = [6, 0], sizes = [1, 256], strides = [1, 1]} : vector<9x256xf32> to vector<1x256xf32>
    %327 = vector.broadcast %326 : vector<1x256xf32> to vector<8x256xf32>
    %328 = arith.mulf %325, %327 : vector<8x256xf32>
    %c6 = arith.constant 6 : index
    %c0_18 = arith.constant 0 : index
    %c0_19 = arith.constant 0 : index
    %329 = vector.load %arg1[%c6, %c0_18, %c0_19] : memref<9x8x8xf32, #tpu.memory_space<vmem>>, vector<1x8x8xf32>
    %330 = vector.shape_cast %329 : vector<1x8x8xf32> to vector<8x8xf32>
    %331 = vector.extract_strided_slice %330 {offsets = [0, 0], sizes = [8, 1], strides = [1, 1]} : vector<8x8xf32> to vector<8x1xf32>
    %332 = vector.extract_strided_slice %328 {offsets = [0, 0], sizes = [1, 256], strides = [1, 1]} : vector<8x256xf32> to vector<1x256xf32>
    %333 = vector.broadcast %331 : vector<8x1xf32> to vector<8x256xf32>
    %334 = vector.broadcast %332 : vector<1x256xf32> to vector<8x256xf32>
    %335 = arith.mulf %333, %334 : vector<8x256xf32>
    %336 = arith.addf %324, %335 : vector<8x256xf32>
    %337 = vector.extract_strided_slice %330 {offsets = [0, 1], sizes = [8, 1], strides = [1, 1]} : vector<8x8xf32> to vector<8x1xf32>
    %338 = vector.extract_strided_slice %328 {offsets = [1, 0], sizes = [1, 256], strides = [1, 1]} : vector<8x256xf32> to vector<1x256xf32>
    %339 = vector.broadcast %337 : vector<8x1xf32> to vector<8x256xf32>
    %340 = vector.broadcast %338 : vector<1x256xf32> to vector<8x256xf32>
    %341 = arith.mulf %339, %340 : vector<8x256xf32>
    %342 = arith.addf %336, %341 : vector<8x256xf32>
    %343 = vector.extract_strided_slice %330 {offsets = [0, 2], sizes = [8, 1], strides = [1, 1]} : vector<8x8xf32> to vector<8x1xf32>
    %344 = vector.extract_strided_slice %328 {offsets = [2, 0], sizes = [1, 256], strides = [1, 1]} : vector<8x256xf32> to vector<1x256xf32>
    %345 = vector.broadcast %343 : vector<8x1xf32> to vector<8x256xf32>
    %346 = vector.broadcast %344 : vector<1x256xf32> to vector<8x256xf32>
    %347 = arith.mulf %345, %346 : vector<8x256xf32>
    %348 = arith.addf %342, %347 : vector<8x256xf32>
    %349 = vector.extract_strided_slice %330 {offsets = [0, 3], sizes = [8, 1], strides = [1, 1]} : vector<8x8xf32> to vector<8x1xf32>
    %350 = vector.extract_strided_slice %328 {offsets = [3, 0], sizes = [1, 256], strides = [1, 1]} : vector<8x256xf32> to vector<1x256xf32>
    %351 = vector.broadcast %349 : vector<8x1xf32> to vector<8x256xf32>
    %352 = vector.broadcast %350 : vector<1x256xf32> to vector<8x256xf32>
    %353 = arith.mulf %351, %352 : vector<8x256xf32>
    %354 = arith.addf %348, %353 : vector<8x256xf32>
    %355 = vector.extract_strided_slice %330 {offsets = [0, 4], sizes = [8, 1], strides = [1, 1]} : vector<8x8xf32> to vector<8x1xf32>
    %356 = vector.extract_strided_slice %328 {offsets = [4, 0], sizes = [1, 256], strides = [1, 1]} : vector<8x256xf32> to vector<1x256xf32>
    %357 = vector.broadcast %355 : vector<8x1xf32> to vector<8x256xf32>
    %358 = vector.broadcast %356 : vector<1x256xf32> to vector<8x256xf32>
    %359 = arith.mulf %357, %358 : vector<8x256xf32>
    %360 = arith.addf %354, %359 : vector<8x256xf32>
    %361 = vector.extract_strided_slice %330 {offsets = [0, 5], sizes = [8, 1], strides = [1, 1]} : vector<8x8xf32> to vector<8x1xf32>
    %362 = vector.extract_strided_slice %328 {offsets = [5, 0], sizes = [1, 256], strides = [1, 1]} : vector<8x256xf32> to vector<1x256xf32>
    %363 = vector.broadcast %361 : vector<8x1xf32> to vector<8x256xf32>
    %364 = vector.broadcast %362 : vector<1x256xf32> to vector<8x256xf32>
    %365 = arith.mulf %363, %364 : vector<8x256xf32>
    %366 = arith.addf %360, %365 : vector<8x256xf32>
    %367 = vector.extract_strided_slice %330 {offsets = [0, 6], sizes = [8, 1], strides = [1, 1]} : vector<8x8xf32> to vector<8x1xf32>
    %368 = vector.extract_strided_slice %328 {offsets = [6, 0], sizes = [1, 256], strides = [1, 1]} : vector<8x256xf32> to vector<1x256xf32>
    %369 = vector.broadcast %367 : vector<8x1xf32> to vector<8x256xf32>
    %370 = vector.broadcast %368 : vector<1x256xf32> to vector<8x256xf32>
    %371 = arith.mulf %369, %370 : vector<8x256xf32>
    %372 = arith.addf %366, %371 : vector<8x256xf32>
    %373 = vector.extract_strided_slice %330 {offsets = [0, 7], sizes = [8, 1], strides = [1, 1]} : vector<8x8xf32> to vector<8x1xf32>
    %374 = vector.extract_strided_slice %328 {offsets = [7, 0], sizes = [1, 256], strides = [1, 1]} : vector<8x256xf32> to vector<1x256xf32>
    %375 = vector.broadcast %373 : vector<8x1xf32> to vector<8x256xf32>
    %376 = vector.broadcast %374 : vector<1x256xf32> to vector<8x256xf32>
    %377 = arith.mulf %375, %376 : vector<8x256xf32>
    %378 = arith.addf %372, %377 : vector<8x256xf32>
    %c240_i32 = arith.constant 240 : i32
    %379 = tpu.dynamic_rotate %0 by %c240_i32 dim 1 : vector<8x256xf32>, i32 -> vector<8x256xf32>
    %380 = vector.extract_strided_slice %2 {offsets = [7, 0], sizes = [1, 256], strides = [1, 1]} : vector<9x256xf32> to vector<1x256xf32>
    %381 = vector.broadcast %380 : vector<1x256xf32> to vector<8x256xf32>
    %382 = arith.mulf %379, %381 : vector<8x256xf32>
    %c7 = arith.constant 7 : index
    %c0_20 = arith.constant 0 : index
    %c0_21 = arith.constant 0 : index
    %383 = vector.load %arg1[%c7, %c0_20, %c0_21] : memref<9x8x8xf32, #tpu.memory_space<vmem>>, vector<1x8x8xf32>
    %384 = vector.shape_cast %383 : vector<1x8x8xf32> to vector<8x8xf32>
    %385 = vector.extract_strided_slice %384 {offsets = [0, 0], sizes = [8, 1], strides = [1, 1]} : vector<8x8xf32> to vector<8x1xf32>
    %386 = vector.extract_strided_slice %382 {offsets = [0, 0], sizes = [1, 256], strides = [1, 1]} : vector<8x256xf32> to vector<1x256xf32>
    %387 = vector.broadcast %385 : vector<8x1xf32> to vector<8x256xf32>
    %388 = vector.broadcast %386 : vector<1x256xf32> to vector<8x256xf32>
    %389 = arith.mulf %387, %388 : vector<8x256xf32>
    %390 = arith.addf %378, %389 : vector<8x256xf32>
    %391 = vector.extract_strided_slice %384 {offsets = [0, 1], sizes = [8, 1], strides = [1, 1]} : vector<8x8xf32> to vector<8x1xf32>
    %392 = vector.extract_strided_slice %382 {offsets = [1, 0], sizes = [1, 256], strides = [1, 1]} : vector<8x256xf32> to vector<1x256xf32>
    %393 = vector.broadcast %391 : vector<8x1xf32> to vector<8x256xf32>
    %394 = vector.broadcast %392 : vector<1x256xf32> to vector<8x256xf32>
    %395 = arith.mulf %393, %394 : vector<8x256xf32>
    %396 = arith.addf %390, %395 : vector<8x256xf32>
    %397 = vector.extract_strided_slice %384 {offsets = [0, 2], sizes = [8, 1], strides = [1, 1]} : vector<8x8xf32> to vector<8x1xf32>
    %398 = vector.extract_strided_slice %382 {offsets = [2, 0], sizes = [1, 256], strides = [1, 1]} : vector<8x256xf32> to vector<1x256xf32>
    %399 = vector.broadcast %397 : vector<8x1xf32> to vector<8x256xf32>
    %400 = vector.broadcast %398 : vector<1x256xf32> to vector<8x256xf32>
    %401 = arith.mulf %399, %400 : vector<8x256xf32>
    %402 = arith.addf %396, %401 : vector<8x256xf32>
    %403 = vector.extract_strided_slice %384 {offsets = [0, 3], sizes = [8, 1], strides = [1, 1]} : vector<8x8xf32> to vector<8x1xf32>
    %404 = vector.extract_strided_slice %382 {offsets = [3, 0], sizes = [1, 256], strides = [1, 1]} : vector<8x256xf32> to vector<1x256xf32>
    %405 = vector.broadcast %403 : vector<8x1xf32> to vector<8x256xf32>
    %406 = vector.broadcast %404 : vector<1x256xf32> to vector<8x256xf32>
    %407 = arith.mulf %405, %406 : vector<8x256xf32>
    %408 = arith.addf %402, %407 : vector<8x256xf32>
    %409 = vector.extract_strided_slice %384 {offsets = [0, 4], sizes = [8, 1], strides = [1, 1]} : vector<8x8xf32> to vector<8x1xf32>
    %410 = vector.extract_strided_slice %382 {offsets = [4, 0], sizes = [1, 256], strides = [1, 1]} : vector<8x256xf32> to vector<1x256xf32>
    %411 = vector.broadcast %409 : vector<8x1xf32> to vector<8x256xf32>
    %412 = vector.broadcast %410 : vector<1x256xf32> to vector<8x256xf32>
    %413 = arith.mulf %411, %412 : vector<8x256xf32>
    %414 = arith.addf %408, %413 : vector<8x256xf32>
    %415 = vector.extract_strided_slice %384 {offsets = [0, 5], sizes = [8, 1], strides = [1, 1]} : vector<8x8xf32> to vector<8x1xf32>
    %416 = vector.extract_strided_slice %382 {offsets = [5, 0], sizes = [1, 256], strides = [1, 1]} : vector<8x256xf32> to vector<1x256xf32>
    %417 = vector.broadcast %415 : vector<8x1xf32> to vector<8x256xf32>
    %418 = vector.broadcast %416 : vector<1x256xf32> to vector<8x256xf32>
    %419 = arith.mulf %417, %418 : vector<8x256xf32>
    %420 = arith.addf %414, %419 : vector<8x256xf32>
    %421 = vector.extract_strided_slice %384 {offsets = [0, 6], sizes = [8, 1], strides = [1, 1]} : vector<8x8xf32> to vector<8x1xf32>
    %422 = vector.extract_strided_slice %382 {offsets = [6, 0], sizes = [1, 256], strides = [1, 1]} : vector<8x256xf32> to vector<1x256xf32>
    %423 = vector.broadcast %421 : vector<8x1xf32> to vector<8x256xf32>
    %424 = vector.broadcast %422 : vector<1x256xf32> to vector<8x256xf32>
    %425 = arith.mulf %423, %424 : vector<8x256xf32>
    %426 = arith.addf %420, %425 : vector<8x256xf32>
    %427 = vector.extract_strided_slice %384 {offsets = [0, 7], sizes = [8, 1], strides = [1, 1]} : vector<8x8xf32> to vector<8x1xf32>
    %428 = vector.extract_strided_slice %382 {offsets = [7, 0], sizes = [1, 256], strides = [1, 1]} : vector<8x256xf32> to vector<1x256xf32>
    %429 = vector.broadcast %427 : vector<8x1xf32> to vector<8x256xf32>
    %430 = vector.broadcast %428 : vector<1x256xf32> to vector<8x256xf32>
    %431 = arith.mulf %429, %430 : vector<8x256xf32>
    %432 = arith.addf %426, %431 : vector<8x256xf32>
    %c239_i32 = arith.constant 239 : i32
    %433 = tpu.dynamic_rotate %0 by %c239_i32 dim 1 : vector<8x256xf32>, i32 -> vector<8x256xf32>
    %434 = vector.extract_strided_slice %2 {offsets = [8, 0], sizes = [1, 256], strides = [1, 1]} : vector<9x256xf32> to vector<1x256xf32>
    %435 = vector.broadcast %434 : vector<1x256xf32> to vector<8x256xf32>
    %436 = arith.mulf %433, %435 : vector<8x256xf32>
    %c8 = arith.constant 8 : index
    %c0_22 = arith.constant 0 : index
    %c0_23 = arith.constant 0 : index
    %437 = vector.load %arg1[%c8, %c0_22, %c0_23] : memref<9x8x8xf32, #tpu.memory_space<vmem>>, vector<1x8x8xf32>
    %438 = vector.shape_cast %437 : vector<1x8x8xf32> to vector<8x8xf32>
    %439 = vector.extract_strided_slice %438 {offsets = [0, 0], sizes = [8, 1], strides = [1, 1]} : vector<8x8xf32> to vector<8x1xf32>
    %440 = vector.extract_strided_slice %436 {offsets = [0, 0], sizes = [1, 256], strides = [1, 1]} : vector<8x256xf32> to vector<1x256xf32>
    %441 = vector.broadcast %439 : vector<8x1xf32> to vector<8x256xf32>
    %442 = vector.broadcast %440 : vector<1x256xf32> to vector<8x256xf32>
    %443 = arith.mulf %441, %442 : vector<8x256xf32>
    %444 = arith.addf %432, %443 : vector<8x256xf32>
    %445 = vector.extract_strided_slice %438 {offsets = [0, 1], sizes = [8, 1], strides = [1, 1]} : vector<8x8xf32> to vector<8x1xf32>
    %446 = vector.extract_strided_slice %436 {offsets = [1, 0], sizes = [1, 256], strides = [1, 1]} : vector<8x256xf32> to vector<1x256xf32>
    %447 = vector.broadcast %445 : vector<8x1xf32> to vector<8x256xf32>
    %448 = vector.broadcast %446 : vector<1x256xf32> to vector<8x256xf32>
    %449 = arith.mulf %447, %448 : vector<8x256xf32>
    %450 = arith.addf %444, %449 : vector<8x256xf32>
    %451 = vector.extract_strided_slice %438 {offsets = [0, 2], sizes = [8, 1], strides = [1, 1]} : vector<8x8xf32> to vector<8x1xf32>
    %452 = vector.extract_strided_slice %436 {offsets = [2, 0], sizes = [1, 256], strides = [1, 1]} : vector<8x256xf32> to vector<1x256xf32>
    %453 = vector.broadcast %451 : vector<8x1xf32> to vector<8x256xf32>
    %454 = vector.broadcast %452 : vector<1x256xf32> to vector<8x256xf32>
    %455 = arith.mulf %453, %454 : vector<8x256xf32>
    %456 = arith.addf %450, %455 : vector<8x256xf32>
    %457 = vector.extract_strided_slice %438 {offsets = [0, 3], sizes = [8, 1], strides = [1, 1]} : vector<8x8xf32> to vector<8x1xf32>
    %458 = vector.extract_strided_slice %436 {offsets = [3, 0], sizes = [1, 256], strides = [1, 1]} : vector<8x256xf32> to vector<1x256xf32>
    %459 = vector.broadcast %457 : vector<8x1xf32> to vector<8x256xf32>
    %460 = vector.broadcast %458 : vector<1x256xf32> to vector<8x256xf32>
    %461 = arith.mulf %459, %460 : vector<8x256xf32>
    %462 = arith.addf %456, %461 : vector<8x256xf32>
    %463 = vector.extract_strided_slice %438 {offsets = [0, 4], sizes = [8, 1], strides = [1, 1]} : vector<8x8xf32> to vector<8x1xf32>
    %464 = vector.extract_strided_slice %436 {offsets = [4, 0], sizes = [1, 256], strides = [1, 1]} : vector<8x256xf32> to vector<1x256xf32>
    %465 = vector.broadcast %463 : vector<8x1xf32> to vector<8x256xf32>
    %466 = vector.broadcast %464 : vector<1x256xf32> to vector<8x256xf32>
    %467 = arith.mulf %465, %466 : vector<8x256xf32>
    %468 = arith.addf %462, %467 : vector<8x256xf32>
    %469 = vector.extract_strided_slice %438 {offsets = [0, 5], sizes = [8, 1], strides = [1, 1]} : vector<8x8xf32> to vector<8x1xf32>
    %470 = vector.extract_strided_slice %436 {offsets = [5, 0], sizes = [1, 256], strides = [1, 1]} : vector<8x256xf32> to vector<1x256xf32>
    %471 = vector.broadcast %469 : vector<8x1xf32> to vector<8x256xf32>
    %472 = vector.broadcast %470 : vector<1x256xf32> to vector<8x256xf32>
    %473 = arith.mulf %471, %472 : vector<8x256xf32>
    %474 = arith.addf %468, %473 : vector<8x256xf32>
    %475 = vector.extract_strided_slice %438 {offsets = [0, 6], sizes = [8, 1], strides = [1, 1]} : vector<8x8xf32> to vector<8x1xf32>
    %476 = vector.extract_strided_slice %436 {offsets = [6, 0], sizes = [1, 256], strides = [1, 1]} : vector<8x256xf32> to vector<1x256xf32>
    %477 = vector.broadcast %475 : vector<8x1xf32> to vector<8x256xf32>
    %478 = vector.broadcast %476 : vector<1x256xf32> to vector<8x256xf32>
    %479 = arith.mulf %477, %478 : vector<8x256xf32>
    %480 = arith.addf %474, %479 : vector<8x256xf32>
    %481 = vector.extract_strided_slice %438 {offsets = [0, 7], sizes = [8, 1], strides = [1, 1]} : vector<8x8xf32> to vector<8x1xf32>
    %482 = vector.extract_strided_slice %436 {offsets = [7, 0], sizes = [1, 256], strides = [1, 1]} : vector<8x256xf32> to vector<1x256xf32>
    %483 = vector.broadcast %481 : vector<8x1xf32> to vector<8x256xf32>
    %484 = vector.broadcast %482 : vector<1x256xf32> to vector<8x256xf32>
    %485 = arith.mulf %483, %484 : vector<8x256xf32>
    %486 = arith.addf %480, %485 : vector<8x256xf32>
    %487 = vector.broadcast %3 : vector<8x1xf32> to vector<8x256xf32>
    %488 = arith.addf %486, %487 : vector<8x256xf32>
    %489 = vector.extract_strided_slice %1 {offsets = [0, 1], sizes = [8, 1], strides = [1, 1]} : vector<8x6xf32> to vector<8x1xf32>
    %490 = vector.extract_strided_slice %1 {offsets = [0, 2], sizes = [8, 1], strides = [1, 1]} : vector<8x6xf32> to vector<8x1xf32>
    %cst_24 = arith.constant dense<0.000000e+00> : vector<8xf32>
    %491 = vector.multi_reduction <add>, %488, %cst_24 [1] : vector<8x256xf32> to vector<8xf32>
    %492 = vector.shape_cast %491 : vector<8xf32> to vector<8x1xf32>
    %c4_i32 = arith.constant 4 : i32
    %493 = tpu.dynamic_rotate %492 by %c4_i32 dim 0 : vector<8x1xf32>, i32 -> vector<8x1xf32>
    %494 = arith.addf %492, %493 : vector<8x1xf32>
    %cst_25 = arith.constant 0.001953125 : f32
    %495 = vector.broadcast %cst_25 : f32 to vector<8x1xf32>
    %496 = arith.mulf %494, %495 : vector<8x1xf32>
    %497 = vector.broadcast %496 : vector<8x1xf32> to vector<8x256xf32>
    %498 = arith.subf %488, %497 : vector<8x256xf32>
    %499 = arith.mulf %498, %498 : vector<8x256xf32>
    %cst_26 = arith.constant dense<0.000000e+00> : vector<8xf32>
    %500 = vector.multi_reduction <add>, %499, %cst_26 [1] : vector<8x256xf32> to vector<8xf32>
    %501 = vector.shape_cast %500 : vector<8xf32> to vector<8x1xf32>
    %c4_i32_27 = arith.constant 4 : i32
    %502 = tpu.dynamic_rotate %501 by %c4_i32_27 dim 0 : vector<8x1xf32>, i32 -> vector<8x1xf32>
    %503 = arith.addf %501, %502 : vector<8x1xf32>
    %cst_28 = arith.constant 0.001953125 : f32
    %504 = vector.broadcast %cst_28 : f32 to vector<8x1xf32>
    %505 = arith.mulf %503, %504 : vector<8x1xf32>
    %cst_29 = arith.constant 9.99999974E-6 : f32
    %506 = vector.broadcast %cst_29 : f32 to vector<8x1xf32>
    %507 = arith.addf %505, %506 : vector<8x1xf32>
    %508 = math.rsqrt %507 : vector<8x1xf32>
    %509 = arith.mulf %508, %489 : vector<8x1xf32>
    %510 = vector.broadcast %509 : vector<8x1xf32> to vector<8x256xf32>
    %511 = arith.mulf %498, %510 : vector<8x256xf32>
    %512 = vector.broadcast %490 : vector<8x1xf32> to vector<8x256xf32>
    %513 = arith.addf %511, %512 : vector<8x256xf32>
    %cst_30 = arith.constant 0.000000e+00 : f32
    %514 = vector.broadcast %cst_30 : f32 to vector<8x256xf32>
    %515 = arith.maximumf %513, %514 : vector<8x256xf32>
    %516 = vector.extract_strided_slice %1 {offsets = [0, 3], sizes = [8, 1], strides = [1, 1]} : vector<8x6xf32> to vector<8x1xf32>
    %cst_31 = arith.constant 0.000000e+00 : f32
    %517 = vector.broadcast %cst_31 : f32 to vector<8x256xf32>
    %c17_i32_32 = arith.constant 17 : i32
    %518 = tpu.dynamic_rotate %515 by %c17_i32_32 dim 1 : vector<8x256xf32>, i32 -> vector<8x256xf32>
    %519 = vector.extract_strided_slice %2 {offsets = [0, 0], sizes = [1, 256], strides = [1, 1]} : vector<9x256xf32> to vector<1x256xf32>
    %520 = vector.broadcast %519 : vector<1x256xf32> to vector<8x256xf32>
    %521 = arith.mulf %518, %520 : vector<8x256xf32>
    %c0_33 = arith.constant 0 : index
    %c0_34 = arith.constant 0 : index
    %c0_35 = arith.constant 0 : index
    %522 = vector.load %arg2[%c0_33, %c0_34, %c0_35] : memref<9x8x8xf32, #tpu.memory_space<vmem>>, vector<1x8x8xf32>
    %523 = vector.shape_cast %522 : vector<1x8x8xf32> to vector<8x8xf32>
    %524 = vector.extract_strided_slice %523 {offsets = [0, 0], sizes = [8, 1], strides = [1, 1]} : vector<8x8xf32> to vector<8x1xf32>
    %525 = vector.extract_strided_slice %521 {offsets = [0, 0], sizes = [1, 256], strides = [1, 1]} : vector<8x256xf32> to vector<1x256xf32>
    %526 = vector.broadcast %524 : vector<8x1xf32> to vector<8x256xf32>
    %527 = vector.broadcast %525 : vector<1x256xf32> to vector<8x256xf32>
    %528 = arith.mulf %526, %527 : vector<8x256xf32>
    %529 = arith.addf %517, %528 : vector<8x256xf32>
    %530 = vector.extract_strided_slice %523 {offsets = [0, 1], sizes = [8, 1], strides = [1, 1]} : vector<8x8xf32> to vector<8x1xf32>
    %531 = vector.extract_strided_slice %521 {offsets = [1, 0], sizes = [1, 256], strides = [1, 1]} : vector<8x256xf32> to vector<1x256xf32>
    %532 = vector.broadcast %530 : vector<8x1xf32> to vector<8x256xf32>
    %533 = vector.broadcast %531 : vector<1x256xf32> to vector<8x256xf32>
    %534 = arith.mulf %532, %533 : vector<8x256xf32>
    %535 = arith.addf %529, %534 : vector<8x256xf32>
    %536 = vector.extract_strided_slice %523 {offsets = [0, 2], sizes = [8, 1], strides = [1, 1]} : vector<8x8xf32> to vector<8x1xf32>
    %537 = vector.extract_strided_slice %521 {offsets = [2, 0], sizes = [1, 256], strides = [1, 1]} : vector<8x256xf32> to vector<1x256xf32>
    %538 = vector.broadcast %536 : vector<8x1xf32> to vector<8x256xf32>
    %539 = vector.broadcast %537 : vector<1x256xf32> to vector<8x256xf32>
    %540 = arith.mulf %538, %539 : vector<8x256xf32>
    %541 = arith.addf %535, %540 : vector<8x256xf32>
    %542 = vector.extract_strided_slice %523 {offsets = [0, 3], sizes = [8, 1], strides = [1, 1]} : vector<8x8xf32> to vector<8x1xf32>
    %543 = vector.extract_strided_slice %521 {offsets = [3, 0], sizes = [1, 256], strides = [1, 1]} : vector<8x256xf32> to vector<1x256xf32>
    %544 = vector.broadcast %542 : vector<8x1xf32> to vector<8x256xf32>
    %545 = vector.broadcast %543 : vector<1x256xf32> to vector<8x256xf32>
    %546 = arith.mulf %544, %545 : vector<8x256xf32>
    %547 = arith.addf %541, %546 : vector<8x256xf32>
    %548 = vector.extract_strided_slice %523 {offsets = [0, 4], sizes = [8, 1], strides = [1, 1]} : vector<8x8xf32> to vector<8x1xf32>
    %549 = vector.extract_strided_slice %521 {offsets = [4, 0], sizes = [1, 256], strides = [1, 1]} : vector<8x256xf32> to vector<1x256xf32>
    %550 = vector.broadcast %548 : vector<8x1xf32> to vector<8x256xf32>
    %551 = vector.broadcast %549 : vector<1x256xf32> to vector<8x256xf32>
    %552 = arith.mulf %550, %551 : vector<8x256xf32>
    %553 = arith.addf %547, %552 : vector<8x256xf32>
    %554 = vector.extract_strided_slice %523 {offsets = [0, 5], sizes = [8, 1], strides = [1, 1]} : vector<8x8xf32> to vector<8x1xf32>
    %555 = vector.extract_strided_slice %521 {offsets = [5, 0], sizes = [1, 256], strides = [1, 1]} : vector<8x256xf32> to vector<1x256xf32>
    %556 = vector.broadcast %554 : vector<8x1xf32> to vector<8x256xf32>
    %557 = vector.broadcast %555 : vector<1x256xf32> to vector<8x256xf32>
    %558 = arith.mulf %556, %557 : vector<8x256xf32>
    %559 = arith.addf %553, %558 : vector<8x256xf32>
    %560 = vector.extract_strided_slice %523 {offsets = [0, 6], sizes = [8, 1], strides = [1, 1]} : vector<8x8xf32> to vector<8x1xf32>
    %561 = vector.extract_strided_slice %521 {offsets = [6, 0], sizes = [1, 256], strides = [1, 1]} : vector<8x256xf32> to vector<1x256xf32>
    %562 = vector.broadcast %560 : vector<8x1xf32> to vector<8x256xf32>
    %563 = vector.broadcast %561 : vector<1x256xf32> to vector<8x256xf32>
    %564 = arith.mulf %562, %563 : vector<8x256xf32>
    %565 = arith.addf %559, %564 : vector<8x256xf32>
    %566 = vector.extract_strided_slice %523 {offsets = [0, 7], sizes = [8, 1], strides = [1, 1]} : vector<8x8xf32> to vector<8x1xf32>
    %567 = vector.extract_strided_slice %521 {offsets = [7, 0], sizes = [1, 256], strides = [1, 1]} : vector<8x256xf32> to vector<1x256xf32>
    %568 = vector.broadcast %566 : vector<8x1xf32> to vector<8x256xf32>
    %569 = vector.broadcast %567 : vector<1x256xf32> to vector<8x256xf32>
    %570 = arith.mulf %568, %569 : vector<8x256xf32>
    %571 = arith.addf %565, %570 : vector<8x256xf32>
    %c16_i32_36 = arith.constant 16 : i32
    %572 = tpu.dynamic_rotate %515 by %c16_i32_36 dim 1 : vector<8x256xf32>, i32 -> vector<8x256xf32>
    %573 = vector.extract_strided_slice %2 {offsets = [1, 0], sizes = [1, 256], strides = [1, 1]} : vector<9x256xf32> to vector<1x256xf32>
    %574 = vector.broadcast %573 : vector<1x256xf32> to vector<8x256xf32>
    %575 = arith.mulf %572, %574 : vector<8x256xf32>
    %c1_37 = arith.constant 1 : index
    %c0_38 = arith.constant 0 : index
    %c0_39 = arith.constant 0 : index
    %576 = vector.load %arg2[%c1_37, %c0_38, %c0_39] : memref<9x8x8xf32, #tpu.memory_space<vmem>>, vector<1x8x8xf32>
    %577 = vector.shape_cast %576 : vector<1x8x8xf32> to vector<8x8xf32>
    %578 = vector.extract_strided_slice %577 {offsets = [0, 0], sizes = [8, 1], strides = [1, 1]} : vector<8x8xf32> to vector<8x1xf32>
    %579 = vector.extract_strided_slice %575 {offsets = [0, 0], sizes = [1, 256], strides = [1, 1]} : vector<8x256xf32> to vector<1x256xf32>
    %580 = vector.broadcast %578 : vector<8x1xf32> to vector<8x256xf32>
    %581 = vector.broadcast %579 : vector<1x256xf32> to vector<8x256xf32>
    %582 = arith.mulf %580, %581 : vector<8x256xf32>
    %583 = arith.addf %571, %582 : vector<8x256xf32>
    %584 = vector.extract_strided_slice %577 {offsets = [0, 1], sizes = [8, 1], strides = [1, 1]} : vector<8x8xf32> to vector<8x1xf32>
    %585 = vector.extract_strided_slice %575 {offsets = [1, 0], sizes = [1, 256], strides = [1, 1]} : vector<8x256xf32> to vector<1x256xf32>
    %586 = vector.broadcast %584 : vector<8x1xf32> to vector<8x256xf32>
    %587 = vector.broadcast %585 : vector<1x256xf32> to vector<8x256xf32>
    %588 = arith.mulf %586, %587 : vector<8x256xf32>
    %589 = arith.addf %583, %588 : vector<8x256xf32>
    %590 = vector.extract_strided_slice %577 {offsets = [0, 2], sizes = [8, 1], strides = [1, 1]} : vector<8x8xf32> to vector<8x1xf32>
    %591 = vector.extract_strided_slice %575 {offsets = [2, 0], sizes = [1, 256], strides = [1, 1]} : vector<8x256xf32> to vector<1x256xf32>
    %592 = vector.broadcast %590 : vector<8x1xf32> to vector<8x256xf32>
    %593 = vector.broadcast %591 : vector<1x256xf32> to vector<8x256xf32>
    %594 = arith.mulf %592, %593 : vector<8x256xf32>
    %595 = arith.addf %589, %594 : vector<8x256xf32>
    %596 = vector.extract_strided_slice %577 {offsets = [0, 3], sizes = [8, 1], strides = [1, 1]} : vector<8x8xf32> to vector<8x1xf32>
    %597 = vector.extract_strided_slice %575 {offsets = [3, 0], sizes = [1, 256], strides = [1, 1]} : vector<8x256xf32> to vector<1x256xf32>
    %598 = vector.broadcast %596 : vector<8x1xf32> to vector<8x256xf32>
    %599 = vector.broadcast %597 : vector<1x256xf32> to vector<8x256xf32>
    %600 = arith.mulf %598, %599 : vector<8x256xf32>
    %601 = arith.addf %595, %600 : vector<8x256xf32>
    %602 = vector.extract_strided_slice %577 {offsets = [0, 4], sizes = [8, 1], strides = [1, 1]} : vector<8x8xf32> to vector<8x1xf32>
    %603 = vector.extract_strided_slice %575 {offsets = [4, 0], sizes = [1, 256], strides = [1, 1]} : vector<8x256xf32> to vector<1x256xf32>
    %604 = vector.broadcast %602 : vector<8x1xf32> to vector<8x256xf32>
    %605 = vector.broadcast %603 : vector<1x256xf32> to vector<8x256xf32>
    %606 = arith.mulf %604, %605 : vector<8x256xf32>
    %607 = arith.addf %601, %606 : vector<8x256xf32>
    %608 = vector.extract_strided_slice %577 {offsets = [0, 5], sizes = [8, 1], strides = [1, 1]} : vector<8x8xf32> to vector<8x1xf32>
    %609 = vector.extract_strided_slice %575 {offsets = [5, 0], sizes = [1, 256], strides = [1, 1]} : vector<8x256xf32> to vector<1x256xf32>
    %610 = vector.broadcast %608 : vector<8x1xf32> to vector<8x256xf32>
    %611 = vector.broadcast %609 : vector<1x256xf32> to vector<8x256xf32>
    %612 = arith.mulf %610, %611 : vector<8x256xf32>
    %613 = arith.addf %607, %612 : vector<8x256xf32>
    %614 = vector.extract_strided_slice %577 {offsets = [0, 6], sizes = [8, 1], strides = [1, 1]} : vector<8x8xf32> to vector<8x1xf32>
    %615 = vector.extract_strided_slice %575 {offsets = [6, 0], sizes = [1, 256], strides = [1, 1]} : vector<8x256xf32> to vector<1x256xf32>
    %616 = vector.broadcast %614 : vector<8x1xf32> to vector<8x256xf32>
    %617 = vector.broadcast %615 : vector<1x256xf32> to vector<8x256xf32>
    %618 = arith.mulf %616, %617 : vector<8x256xf32>
    %619 = arith.addf %613, %618 : vector<8x256xf32>
    %620 = vector.extract_strided_slice %577 {offsets = [0, 7], sizes = [8, 1], strides = [1, 1]} : vector<8x8xf32> to vector<8x1xf32>
    %621 = vector.extract_strided_slice %575 {offsets = [7, 0], sizes = [1, 256], strides = [1, 1]} : vector<8x256xf32> to vector<1x256xf32>
    %622 = vector.broadcast %620 : vector<8x1xf32> to vector<8x256xf32>
    %623 = vector.broadcast %621 : vector<1x256xf32> to vector<8x256xf32>
    %624 = arith.mulf %622, %623 : vector<8x256xf32>
    %625 = arith.addf %619, %624 : vector<8x256xf32>
    %c15_i32_40 = arith.constant 15 : i32
    %626 = tpu.dynamic_rotate %515 by %c15_i32_40 dim 1 : vector<8x256xf32>, i32 -> vector<8x256xf32>
    %627 = vector.extract_strided_slice %2 {offsets = [2, 0], sizes = [1, 256], strides = [1, 1]} : vector<9x256xf32> to vector<1x256xf32>
    %628 = vector.broadcast %627 : vector<1x256xf32> to vector<8x256xf32>
    %629 = arith.mulf %626, %628 : vector<8x256xf32>
    %c2_41 = arith.constant 2 : index
    %c0_42 = arith.constant 0 : index
    %c0_43 = arith.constant 0 : index
    %630 = vector.load %arg2[%c2_41, %c0_42, %c0_43] : memref<9x8x8xf32, #tpu.memory_space<vmem>>, vector<1x8x8xf32>
    %631 = vector.shape_cast %630 : vector<1x8x8xf32> to vector<8x8xf32>
    %632 = vector.extract_strided_slice %631 {offsets = [0, 0], sizes = [8, 1], strides = [1, 1]} : vector<8x8xf32> to vector<8x1xf32>
    %633 = vector.extract_strided_slice %629 {offsets = [0, 0], sizes = [1, 256], strides = [1, 1]} : vector<8x256xf32> to vector<1x256xf32>
    %634 = vector.broadcast %632 : vector<8x1xf32> to vector<8x256xf32>
    %635 = vector.broadcast %633 : vector<1x256xf32> to vector<8x256xf32>
    %636 = arith.mulf %634, %635 : vector<8x256xf32>
    %637 = arith.addf %625, %636 : vector<8x256xf32>
    %638 = vector.extract_strided_slice %631 {offsets = [0, 1], sizes = [8, 1], strides = [1, 1]} : vector<8x8xf32> to vector<8x1xf32>
    %639 = vector.extract_strided_slice %629 {offsets = [1, 0], sizes = [1, 256], strides = [1, 1]} : vector<8x256xf32> to vector<1x256xf32>
    %640 = vector.broadcast %638 : vector<8x1xf32> to vector<8x256xf32>
    %641 = vector.broadcast %639 : vector<1x256xf32> to vector<8x256xf32>
    %642 = arith.mulf %640, %641 : vector<8x256xf32>
    %643 = arith.addf %637, %642 : vector<8x256xf32>
    %644 = vector.extract_strided_slice %631 {offsets = [0, 2], sizes = [8, 1], strides = [1, 1]} : vector<8x8xf32> to vector<8x1xf32>
    %645 = vector.extract_strided_slice %629 {offsets = [2, 0], sizes = [1, 256], strides = [1, 1]} : vector<8x256xf32> to vector<1x256xf32>
    %646 = vector.broadcast %644 : vector<8x1xf32> to vector<8x256xf32>
    %647 = vector.broadcast %645 : vector<1x256xf32> to vector<8x256xf32>
    %648 = arith.mulf %646, %647 : vector<8x256xf32>
    %649 = arith.addf %643, %648 : vector<8x256xf32>
    %650 = vector.extract_strided_slice %631 {offsets = [0, 3], sizes = [8, 1], strides = [1, 1]} : vector<8x8xf32> to vector<8x1xf32>
    %651 = vector.extract_strided_slice %629 {offsets = [3, 0], sizes = [1, 256], strides = [1, 1]} : vector<8x256xf32> to vector<1x256xf32>
    %652 = vector.broadcast %650 : vector<8x1xf32> to vector<8x256xf32>
    %653 = vector.broadcast %651 : vector<1x256xf32> to vector<8x256xf32>
    %654 = arith.mulf %652, %653 : vector<8x256xf32>
    %655 = arith.addf %649, %654 : vector<8x256xf32>
    %656 = vector.extract_strided_slice %631 {offsets = [0, 4], sizes = [8, 1], strides = [1, 1]} : vector<8x8xf32> to vector<8x1xf32>
    %657 = vector.extract_strided_slice %629 {offsets = [4, 0], sizes = [1, 256], strides = [1, 1]} : vector<8x256xf32> to vector<1x256xf32>
    %658 = vector.broadcast %656 : vector<8x1xf32> to vector<8x256xf32>
    %659 = vector.broadcast %657 : vector<1x256xf32> to vector<8x256xf32>
    %660 = arith.mulf %658, %659 : vector<8x256xf32>
    %661 = arith.addf %655, %660 : vector<8x256xf32>
    %662 = vector.extract_strided_slice %631 {offsets = [0, 5], sizes = [8, 1], strides = [1, 1]} : vector<8x8xf32> to vector<8x1xf32>
    %663 = vector.extract_strided_slice %629 {offsets = [5, 0], sizes = [1, 256], strides = [1, 1]} : vector<8x256xf32> to vector<1x256xf32>
    %664 = vector.broadcast %662 : vector<8x1xf32> to vector<8x256xf32>
    %665 = vector.broadcast %663 : vector<1x256xf32> to vector<8x256xf32>
    %666 = arith.mulf %664, %665 : vector<8x256xf32>
    %667 = arith.addf %661, %666 : vector<8x256xf32>
    %668 = vector.extract_strided_slice %631 {offsets = [0, 6], sizes = [8, 1], strides = [1, 1]} : vector<8x8xf32> to vector<8x1xf32>
    %669 = vector.extract_strided_slice %629 {offsets = [6, 0], sizes = [1, 256], strides = [1, 1]} : vector<8x256xf32> to vector<1x256xf32>
    %670 = vector.broadcast %668 : vector<8x1xf32> to vector<8x256xf32>
    %671 = vector.broadcast %669 : vector<1x256xf32> to vector<8x256xf32>
    %672 = arith.mulf %670, %671 : vector<8x256xf32>
    %673 = arith.addf %667, %672 : vector<8x256xf32>
    %674 = vector.extract_strided_slice %631 {offsets = [0, 7], sizes = [8, 1], strides = [1, 1]} : vector<8x8xf32> to vector<8x1xf32>
    %675 = vector.extract_strided_slice %629 {offsets = [7, 0], sizes = [1, 256], strides = [1, 1]} : vector<8x256xf32> to vector<1x256xf32>
    %676 = vector.broadcast %674 : vector<8x1xf32> to vector<8x256xf32>
    %677 = vector.broadcast %675 : vector<1x256xf32> to vector<8x256xf32>
    %678 = arith.mulf %676, %677 : vector<8x256xf32>
    %679 = arith.addf %673, %678 : vector<8x256xf32>
    %c1_i32_44 = arith.constant 1 : i32
    %680 = tpu.dynamic_rotate %515 by %c1_i32_44 dim 1 : vector<8x256xf32>, i32 -> vector<8x256xf32>
    %681 = vector.extract_strided_slice %2 {offsets = [3, 0], sizes = [1, 256], strides = [1, 1]} : vector<9x256xf32> to vector<1x256xf32>
    %682 = vector.broadcast %681 : vector<1x256xf32> to vector<8x256xf32>
    %683 = arith.mulf %680, %682 : vector<8x256xf32>
    %c3_45 = arith.constant 3 : index
    %c0_46 = arith.constant 0 : index
    %c0_47 = arith.constant 0 : index
    %684 = vector.load %arg2[%c3_45, %c0_46, %c0_47] : memref<9x8x8xf32, #tpu.memory_space<vmem>>, vector<1x8x8xf32>
    %685 = vector.shape_cast %684 : vector<1x8x8xf32> to vector<8x8xf32>
    %686 = vector.extract_strided_slice %685 {offsets = [0, 0], sizes = [8, 1], strides = [1, 1]} : vector<8x8xf32> to vector<8x1xf32>
    %687 = vector.extract_strided_slice %683 {offsets = [0, 0], sizes = [1, 256], strides = [1, 1]} : vector<8x256xf32> to vector<1x256xf32>
    %688 = vector.broadcast %686 : vector<8x1xf32> to vector<8x256xf32>
    %689 = vector.broadcast %687 : vector<1x256xf32> to vector<8x256xf32>
    %690 = arith.mulf %688, %689 : vector<8x256xf32>
    %691 = arith.addf %679, %690 : vector<8x256xf32>
    %692 = vector.extract_strided_slice %685 {offsets = [0, 1], sizes = [8, 1], strides = [1, 1]} : vector<8x8xf32> to vector<8x1xf32>
    %693 = vector.extract_strided_slice %683 {offsets = [1, 0], sizes = [1, 256], strides = [1, 1]} : vector<8x256xf32> to vector<1x256xf32>
    %694 = vector.broadcast %692 : vector<8x1xf32> to vector<8x256xf32>
    %695 = vector.broadcast %693 : vector<1x256xf32> to vector<8x256xf32>
    %696 = arith.mulf %694, %695 : vector<8x256xf32>
    %697 = arith.addf %691, %696 : vector<8x256xf32>
    %698 = vector.extract_strided_slice %685 {offsets = [0, 2], sizes = [8, 1], strides = [1, 1]} : vector<8x8xf32> to vector<8x1xf32>
    %699 = vector.extract_strided_slice %683 {offsets = [2, 0], sizes = [1, 256], strides = [1, 1]} : vector<8x256xf32> to vector<1x256xf32>
    %700 = vector.broadcast %698 : vector<8x1xf32> to vector<8x256xf32>
    %701 = vector.broadcast %699 : vector<1x256xf32> to vector<8x256xf32>
    %702 = arith.mulf %700, %701 : vector<8x256xf32>
    %703 = arith.addf %697, %702 : vector<8x256xf32>
    %704 = vector.extract_strided_slice %685 {offsets = [0, 3], sizes = [8, 1], strides = [1, 1]} : vector<8x8xf32> to vector<8x1xf32>
    %705 = vector.extract_strided_slice %683 {offsets = [3, 0], sizes = [1, 256], strides = [1, 1]} : vector<8x256xf32> to vector<1x256xf32>
    %706 = vector.broadcast %704 : vector<8x1xf32> to vector<8x256xf32>
    %707 = vector.broadcast %705 : vector<1x256xf32> to vector<8x256xf32>
    %708 = arith.mulf %706, %707 : vector<8x256xf32>
    %709 = arith.addf %703, %708 : vector<8x256xf32>
    %710 = vector.extract_strided_slice %685 {offsets = [0, 4], sizes = [8, 1], strides = [1, 1]} : vector<8x8xf32> to vector<8x1xf32>
    %711 = vector.extract_strided_slice %683 {offsets = [4, 0], sizes = [1, 256], strides = [1, 1]} : vector<8x256xf32> to vector<1x256xf32>
    %712 = vector.broadcast %710 : vector<8x1xf32> to vector<8x256xf32>
    %713 = vector.broadcast %711 : vector<1x256xf32> to vector<8x256xf32>
    %714 = arith.mulf %712, %713 : vector<8x256xf32>
    %715 = arith.addf %709, %714 : vector<8x256xf32>
    %716 = vector.extract_strided_slice %685 {offsets = [0, 5], sizes = [8, 1], strides = [1, 1]} : vector<8x8xf32> to vector<8x1xf32>
    %717 = vector.extract_strided_slice %683 {offsets = [5, 0], sizes = [1, 256], strides = [1, 1]} : vector<8x256xf32> to vector<1x256xf32>
    %718 = vector.broadcast %716 : vector<8x1xf32> to vector<8x256xf32>
    %719 = vector.broadcast %717 : vector<1x256xf32> to vector<8x256xf32>
    %720 = arith.mulf %718, %719 : vector<8x256xf32>
    %721 = arith.addf %715, %720 : vector<8x256xf32>
    %722 = vector.extract_strided_slice %685 {offsets = [0, 6], sizes = [8, 1], strides = [1, 1]} : vector<8x8xf32> to vector<8x1xf32>
    %723 = vector.extract_strided_slice %683 {offsets = [6, 0], sizes = [1, 256], strides = [1, 1]} : vector<8x256xf32> to vector<1x256xf32>
    %724 = vector.broadcast %722 : vector<8x1xf32> to vector<8x256xf32>
    %725 = vector.broadcast %723 : vector<1x256xf32> to vector<8x256xf32>
    %726 = arith.mulf %724, %725 : vector<8x256xf32>
    %727 = arith.addf %721, %726 : vector<8x256xf32>
    %728 = vector.extract_strided_slice %685 {offsets = [0, 7], sizes = [8, 1], strides = [1, 1]} : vector<8x8xf32> to vector<8x1xf32>
    %729 = vector.extract_strided_slice %683 {offsets = [7, 0], sizes = [1, 256], strides = [1, 1]} : vector<8x256xf32> to vector<1x256xf32>
    %730 = vector.broadcast %728 : vector<8x1xf32> to vector<8x256xf32>
    %731 = vector.broadcast %729 : vector<1x256xf32> to vector<8x256xf32>
    %732 = arith.mulf %730, %731 : vector<8x256xf32>
    %733 = arith.addf %727, %732 : vector<8x256xf32>
    %c4_48 = arith.constant 4 : index
    %c0_49 = arith.constant 0 : index
    %c0_50 = arith.constant 0 : index
    %734 = vector.load %arg2[%c4_48, %c0_49, %c0_50] : memref<9x8x8xf32, #tpu.memory_space<vmem>>, vector<1x8x8xf32>
    %735 = vector.shape_cast %734 : vector<1x8x8xf32> to vector<8x8xf32>
    %736 = vector.extract_strided_slice %735 {offsets = [0, 0], sizes = [8, 1], strides = [1, 1]} : vector<8x8xf32> to vector<8x1xf32>
    %737 = vector.extract_strided_slice %515 {offsets = [0, 0], sizes = [1, 256], strides = [1, 1]} : vector<8x256xf32> to vector<1x256xf32>
    %738 = vector.broadcast %736 : vector<8x1xf32> to vector<8x256xf32>
    %739 = vector.broadcast %737 : vector<1x256xf32> to vector<8x256xf32>
    %740 = arith.mulf %738, %739 : vector<8x256xf32>
    %741 = arith.addf %733, %740 : vector<8x256xf32>
    %742 = vector.extract_strided_slice %735 {offsets = [0, 1], sizes = [8, 1], strides = [1, 1]} : vector<8x8xf32> to vector<8x1xf32>
    %743 = vector.extract_strided_slice %515 {offsets = [1, 0], sizes = [1, 256], strides = [1, 1]} : vector<8x256xf32> to vector<1x256xf32>
    %744 = vector.broadcast %742 : vector<8x1xf32> to vector<8x256xf32>
    %745 = vector.broadcast %743 : vector<1x256xf32> to vector<8x256xf32>
    %746 = arith.mulf %744, %745 : vector<8x256xf32>
    %747 = arith.addf %741, %746 : vector<8x256xf32>
    %748 = vector.extract_strided_slice %735 {offsets = [0, 2], sizes = [8, 1], strides = [1, 1]} : vector<8x8xf32> to vector<8x1xf32>
    %749 = vector.extract_strided_slice %515 {offsets = [2, 0], sizes = [1, 256], strides = [1, 1]} : vector<8x256xf32> to vector<1x256xf32>
    %750 = vector.broadcast %748 : vector<8x1xf32> to vector<8x256xf32>
    %751 = vector.broadcast %749 : vector<1x256xf32> to vector<8x256xf32>
    %752 = arith.mulf %750, %751 : vector<8x256xf32>
    %753 = arith.addf %747, %752 : vector<8x256xf32>
    %754 = vector.extract_strided_slice %735 {offsets = [0, 3], sizes = [8, 1], strides = [1, 1]} : vector<8x8xf32> to vector<8x1xf32>
    %755 = vector.extract_strided_slice %515 {offsets = [3, 0], sizes = [1, 256], strides = [1, 1]} : vector<8x256xf32> to vector<1x256xf32>
    %756 = vector.broadcast %754 : vector<8x1xf32> to vector<8x256xf32>
    %757 = vector.broadcast %755 : vector<1x256xf32> to vector<8x256xf32>
    %758 = arith.mulf %756, %757 : vector<8x256xf32>
    %759 = arith.addf %753, %758 : vector<8x256xf32>
    %760 = vector.extract_strided_slice %735 {offsets = [0, 4], sizes = [8, 1], strides = [1, 1]} : vector<8x8xf32> to vector<8x1xf32>
    %761 = vector.extract_strided_slice %515 {offsets = [4, 0], sizes = [1, 256], strides = [1, 1]} : vector<8x256xf32> to vector<1x256xf32>
    %762 = vector.broadcast %760 : vector<8x1xf32> to vector<8x256xf32>
    %763 = vector.broadcast %761 : vector<1x256xf32> to vector<8x256xf32>
    %764 = arith.mulf %762, %763 : vector<8x256xf32>
    %765 = arith.addf %759, %764 : vector<8x256xf32>
    %766 = vector.extract_strided_slice %735 {offsets = [0, 5], sizes = [8, 1], strides = [1, 1]} : vector<8x8xf32> to vector<8x1xf32>
    %767 = vector.extract_strided_slice %515 {offsets = [5, 0], sizes = [1, 256], strides = [1, 1]} : vector<8x256xf32> to vector<1x256xf32>
    %768 = vector.broadcast %766 : vector<8x1xf32> to vector<8x256xf32>
    %769 = vector.broadcast %767 : vector<1x256xf32> to vector<8x256xf32>
    %770 = arith.mulf %768, %769 : vector<8x256xf32>
    %771 = arith.addf %765, %770 : vector<8x256xf32>
    %772 = vector.extract_strided_slice %735 {offsets = [0, 6], sizes = [8, 1], strides = [1, 1]} : vector<8x8xf32> to vector<8x1xf32>
    %773 = vector.extract_strided_slice %515 {offsets = [6, 0], sizes = [1, 256], strides = [1, 1]} : vector<8x256xf32> to vector<1x256xf32>
    %774 = vector.broadcast %772 : vector<8x1xf32> to vector<8x256xf32>
    %775 = vector.broadcast %773 : vector<1x256xf32> to vector<8x256xf32>
    %776 = arith.mulf %774, %775 : vector<8x256xf32>
    %777 = arith.addf %771, %776 : vector<8x256xf32>
    %778 = vector.extract_strided_slice %735 {offsets = [0, 7], sizes = [8, 1], strides = [1, 1]} : vector<8x8xf32> to vector<8x1xf32>
    %779 = vector.extract_strided_slice %515 {offsets = [7, 0], sizes = [1, 256], strides = [1, 1]} : vector<8x256xf32> to vector<1x256xf32>
    %780 = vector.broadcast %778 : vector<8x1xf32> to vector<8x256xf32>
    %781 = vector.broadcast %779 : vector<1x256xf32> to vector<8x256xf32>
    %782 = arith.mulf %780, %781 : vector<8x256xf32>
    %783 = arith.addf %777, %782 : vector<8x256xf32>
    %c255_i32_51 = arith.constant 255 : i32
    %784 = tpu.dynamic_rotate %515 by %c255_i32_51 dim 1 : vector<8x256xf32>, i32 -> vector<8x256xf32>
    %785 = vector.extract_strided_slice %2 {offsets = [5, 0], sizes = [1, 256], strides = [1, 1]} : vector<9x256xf32> to vector<1x256xf32>
    %786 = vector.broadcast %785 : vector<1x256xf32> to vector<8x256xf32>
    %787 = arith.mulf %784, %786 : vector<8x256xf32>
    %c5_52 = arith.constant 5 : index
    %c0_53 = arith.constant 0 : index
    %c0_54 = arith.constant 0 : index
    %788 = vector.load %arg2[%c5_52, %c0_53, %c0_54] : memref<9x8x8xf32, #tpu.memory_space<vmem>>, vector<1x8x8xf32>
    %789 = vector.shape_cast %788 : vector<1x8x8xf32> to vector<8x8xf32>
    %790 = vector.extract_strided_slice %789 {offsets = [0, 0], sizes = [8, 1], strides = [1, 1]} : vector<8x8xf32> to vector<8x1xf32>
    %791 = vector.extract_strided_slice %787 {offsets = [0, 0], sizes = [1, 256], strides = [1, 1]} : vector<8x256xf32> to vector<1x256xf32>
    %792 = vector.broadcast %790 : vector<8x1xf32> to vector<8x256xf32>
    %793 = vector.broadcast %791 : vector<1x256xf32> to vector<8x256xf32>
    %794 = arith.mulf %792, %793 : vector<8x256xf32>
    %795 = arith.addf %783, %794 : vector<8x256xf32>
    %796 = vector.extract_strided_slice %789 {offsets = [0, 1], sizes = [8, 1], strides = [1, 1]} : vector<8x8xf32> to vector<8x1xf32>
    %797 = vector.extract_strided_slice %787 {offsets = [1, 0], sizes = [1, 256], strides = [1, 1]} : vector<8x256xf32> to vector<1x256xf32>
    %798 = vector.broadcast %796 : vector<8x1xf32> to vector<8x256xf32>
    %799 = vector.broadcast %797 : vector<1x256xf32> to vector<8x256xf32>
    %800 = arith.mulf %798, %799 : vector<8x256xf32>
    %801 = arith.addf %795, %800 : vector<8x256xf32>
    %802 = vector.extract_strided_slice %789 {offsets = [0, 2], sizes = [8, 1], strides = [1, 1]} : vector<8x8xf32> to vector<8x1xf32>
    %803 = vector.extract_strided_slice %787 {offsets = [2, 0], sizes = [1, 256], strides = [1, 1]} : vector<8x256xf32> to vector<1x256xf32>
    %804 = vector.broadcast %802 : vector<8x1xf32> to vector<8x256xf32>
    %805 = vector.broadcast %803 : vector<1x256xf32> to vector<8x256xf32>
    %806 = arith.mulf %804, %805 : vector<8x256xf32>
    %807 = arith.addf %801, %806 : vector<8x256xf32>
    %808 = vector.extract_strided_slice %789 {offsets = [0, 3], sizes = [8, 1], strides = [1, 1]} : vector<8x8xf32> to vector<8x1xf32>
    %809 = vector.extract_strided_slice %787 {offsets = [3, 0], sizes = [1, 256], strides = [1, 1]} : vector<8x256xf32> to vector<1x256xf32>
    %810 = vector.broadcast %808 : vector<8x1xf32> to vector<8x256xf32>
    %811 = vector.broadcast %809 : vector<1x256xf32> to vector<8x256xf32>
    %812 = arith.mulf %810, %811 : vector<8x256xf32>
    %813 = arith.addf %807, %812 : vector<8x256xf32>
    %814 = vector.extract_strided_slice %789 {offsets = [0, 4], sizes = [8, 1], strides = [1, 1]} : vector<8x8xf32> to vector<8x1xf32>
    %815 = vector.extract_strided_slice %787 {offsets = [4, 0], sizes = [1, 256], strides = [1, 1]} : vector<8x256xf32> to vector<1x256xf32>
    %816 = vector.broadcast %814 : vector<8x1xf32> to vector<8x256xf32>
    %817 = vector.broadcast %815 : vector<1x256xf32> to vector<8x256xf32>
    %818 = arith.mulf %816, %817 : vector<8x256xf32>
    %819 = arith.addf %813, %818 : vector<8x256xf32>
    %820 = vector.extract_strided_slice %789 {offsets = [0, 5], sizes = [8, 1], strides = [1, 1]} : vector<8x8xf32> to vector<8x1xf32>
    %821 = vector.extract_strided_slice %787 {offsets = [5, 0], sizes = [1, 256], strides = [1, 1]} : vector<8x256xf32> to vector<1x256xf32>
    %822 = vector.broadcast %820 : vector<8x1xf32> to vector<8x256xf32>
    %823 = vector.broadcast %821 : vector<1x256xf32> to vector<8x256xf32>
    %824 = arith.mulf %822, %823 : vector<8x256xf32>
    %825 = arith.addf %819, %824 : vector<8x256xf32>
    %826 = vector.extract_strided_slice %789 {offsets = [0, 6], sizes = [8, 1], strides = [1, 1]} : vector<8x8xf32> to vector<8x1xf32>
    %827 = vector.extract_strided_slice %787 {offsets = [6, 0], sizes = [1, 256], strides = [1, 1]} : vector<8x256xf32> to vector<1x256xf32>
    %828 = vector.broadcast %826 : vector<8x1xf32> to vector<8x256xf32>
    %829 = vector.broadcast %827 : vector<1x256xf32> to vector<8x256xf32>
    %830 = arith.mulf %828, %829 : vector<8x256xf32>
    %831 = arith.addf %825, %830 : vector<8x256xf32>
    %832 = vector.extract_strided_slice %789 {offsets = [0, 7], sizes = [8, 1], strides = [1, 1]} : vector<8x8xf32> to vector<8x1xf32>
    %833 = vector.extract_strided_slice %787 {offsets = [7, 0], sizes = [1, 256], strides = [1, 1]} : vector<8x256xf32> to vector<1x256xf32>
    %834 = vector.broadcast %832 : vector<8x1xf32> to vector<8x256xf32>
    %835 = vector.broadcast %833 : vector<1x256xf32> to vector<8x256xf32>
    %836 = arith.mulf %834, %835 : vector<8x256xf32>
    %837 = arith.addf %831, %836 : vector<8x256xf32>
    %c241_i32_55 = arith.constant 241 : i32
    %838 = tpu.dynamic_rotate %515 by %c241_i32_55 dim 1 : vector<8x256xf32>, i32 -> vector<8x256xf32>
    %839 = vector.extract_strided_slice %2 {offsets = [6, 0], sizes = [1, 256], strides = [1, 1]} : vector<9x256xf32> to vector<1x256xf32>
    %840 = vector.broadcast %839 : vector<1x256xf32> to vector<8x256xf32>
    %841 = arith.mulf %838, %840 : vector<8x256xf32>
    %c6_56 = arith.constant 6 : index
    %c0_57 = arith.constant 0 : index
    %c0_58 = arith.constant 0 : index
    %842 = vector.load %arg2[%c6_56, %c0_57, %c0_58] : memref<9x8x8xf32, #tpu.memory_space<vmem>>, vector<1x8x8xf32>
    %843 = vector.shape_cast %842 : vector<1x8x8xf32> to vector<8x8xf32>
    %844 = vector.extract_strided_slice %843 {offsets = [0, 0], sizes = [8, 1], strides = [1, 1]} : vector<8x8xf32> to vector<8x1xf32>
    %845 = vector.extract_strided_slice %841 {offsets = [0, 0], sizes = [1, 256], strides = [1, 1]} : vector<8x256xf32> to vector<1x256xf32>
    %846 = vector.broadcast %844 : vector<8x1xf32> to vector<8x256xf32>
    %847 = vector.broadcast %845 : vector<1x256xf32> to vector<8x256xf32>
    %848 = arith.mulf %846, %847 : vector<8x256xf32>
    %849 = arith.addf %837, %848 : vector<8x256xf32>
    %850 = vector.extract_strided_slice %843 {offsets = [0, 1], sizes = [8, 1], strides = [1, 1]} : vector<8x8xf32> to vector<8x1xf32>
    %851 = vector.extract_strided_slice %841 {offsets = [1, 0], sizes = [1, 256], strides = [1, 1]} : vector<8x256xf32> to vector<1x256xf32>
    %852 = vector.broadcast %850 : vector<8x1xf32> to vector<8x256xf32>
    %853 = vector.broadcast %851 : vector<1x256xf32> to vector<8x256xf32>
    %854 = arith.mulf %852, %853 : vector<8x256xf32>
    %855 = arith.addf %849, %854 : vector<8x256xf32>
    %856 = vector.extract_strided_slice %843 {offsets = [0, 2], sizes = [8, 1], strides = [1, 1]} : vector<8x8xf32> to vector<8x1xf32>
    %857 = vector.extract_strided_slice %841 {offsets = [2, 0], sizes = [1, 256], strides = [1, 1]} : vector<8x256xf32> to vector<1x256xf32>
    %858 = vector.broadcast %856 : vector<8x1xf32> to vector<8x256xf32>
    %859 = vector.broadcast %857 : vector<1x256xf32> to vector<8x256xf32>
    %860 = arith.mulf %858, %859 : vector<8x256xf32>
    %861 = arith.addf %855, %860 : vector<8x256xf32>
    %862 = vector.extract_strided_slice %843 {offsets = [0, 3], sizes = [8, 1], strides = [1, 1]} : vector<8x8xf32> to vector<8x1xf32>
    %863 = vector.extract_strided_slice %841 {offsets = [3, 0], sizes = [1, 256], strides = [1, 1]} : vector<8x256xf32> to vector<1x256xf32>
    %864 = vector.broadcast %862 : vector<8x1xf32> to vector<8x256xf32>
    %865 = vector.broadcast %863 : vector<1x256xf32> to vector<8x256xf32>
    %866 = arith.mulf %864, %865 : vector<8x256xf32>
    %867 = arith.addf %861, %866 : vector<8x256xf32>
    %868 = vector.extract_strided_slice %843 {offsets = [0, 4], sizes = [8, 1], strides = [1, 1]} : vector<8x8xf32> to vector<8x1xf32>
    %869 = vector.extract_strided_slice %841 {offsets = [4, 0], sizes = [1, 256], strides = [1, 1]} : vector<8x256xf32> to vector<1x256xf32>
    %870 = vector.broadcast %868 : vector<8x1xf32> to vector<8x256xf32>
    %871 = vector.broadcast %869 : vector<1x256xf32> to vector<8x256xf32>
    %872 = arith.mulf %870, %871 : vector<8x256xf32>
    %873 = arith.addf %867, %872 : vector<8x256xf32>
    %874 = vector.extract_strided_slice %843 {offsets = [0, 5], sizes = [8, 1], strides = [1, 1]} : vector<8x8xf32> to vector<8x1xf32>
    %875 = vector.extract_strided_slice %841 {offsets = [5, 0], sizes = [1, 256], strides = [1, 1]} : vector<8x256xf32> to vector<1x256xf32>
    %876 = vector.broadcast %874 : vector<8x1xf32> to vector<8x256xf32>
    %877 = vector.broadcast %875 : vector<1x256xf32> to vector<8x256xf32>
    %878 = arith.mulf %876, %877 : vector<8x256xf32>
    %879 = arith.addf %873, %878 : vector<8x256xf32>
    %880 = vector.extract_strided_slice %843 {offsets = [0, 6], sizes = [8, 1], strides = [1, 1]} : vector<8x8xf32> to vector<8x1xf32>
    %881 = vector.extract_strided_slice %841 {offsets = [6, 0], sizes = [1, 256], strides = [1, 1]} : vector<8x256xf32> to vector<1x256xf32>
    %882 = vector.broadcast %880 : vector<8x1xf32> to vector<8x256xf32>
    %883 = vector.broadcast %881 : vector<1x256xf32> to vector<8x256xf32>
    %884 = arith.mulf %882, %883 : vector<8x256xf32>
    %885 = arith.addf %879, %884 : vector<8x256xf32>
    %886 = vector.extract_strided_slice %843 {offsets = [0, 7], sizes = [8, 1], strides = [1, 1]} : vector<8x8xf32> to vector<8x1xf32>
    %887 = vector.extract_strided_slice %841 {offsets = [7, 0], sizes = [1, 256], strides = [1, 1]} : vector<8x256xf32> to vector<1x256xf32>
    %888 = vector.broadcast %886 : vector<8x1xf32> to vector<8x256xf32>
    %889 = vector.broadcast %887 : vector<1x256xf32> to vector<8x256xf32>
    %890 = arith.mulf %888, %889 : vector<8x256xf32>
    %891 = arith.addf %885, %890 : vector<8x256xf32>
    %c240_i32_59 = arith.constant 240 : i32
    %892 = tpu.dynamic_rotate %515 by %c240_i32_59 dim 1 : vector<8x256xf32>, i32 -> vector<8x256xf32>
    %893 = vector.extract_strided_slice %2 {offsets = [7, 0], sizes = [1, 256], strides = [1, 1]} : vector<9x256xf32> to vector<1x256xf32>
    %894 = vector.broadcast %893 : vector<1x256xf32> to vector<8x256xf32>
    %895 = arith.mulf %892, %894 : vector<8x256xf32>
    %c7_60 = arith.constant 7 : index
    %c0_61 = arith.constant 0 : index
    %c0_62 = arith.constant 0 : index
    %896 = vector.load %arg2[%c7_60, %c0_61, %c0_62] : memref<9x8x8xf32, #tpu.memory_space<vmem>>, vector<1x8x8xf32>
    %897 = vector.shape_cast %896 : vector<1x8x8xf32> to vector<8x8xf32>
    %898 = vector.extract_strided_slice %897 {offsets = [0, 0], sizes = [8, 1], strides = [1, 1]} : vector<8x8xf32> to vector<8x1xf32>
    %899 = vector.extract_strided_slice %895 {offsets = [0, 0], sizes = [1, 256], strides = [1, 1]} : vector<8x256xf32> to vector<1x256xf32>
    %900 = vector.broadcast %898 : vector<8x1xf32> to vector<8x256xf32>
    %901 = vector.broadcast %899 : vector<1x256xf32> to vector<8x256xf32>
    %902 = arith.mulf %900, %901 : vector<8x256xf32>
    %903 = arith.addf %891, %902 : vector<8x256xf32>
    %904 = vector.extract_strided_slice %897 {offsets = [0, 1], sizes = [8, 1], strides = [1, 1]} : vector<8x8xf32> to vector<8x1xf32>
    %905 = vector.extract_strided_slice %895 {offsets = [1, 0], sizes = [1, 256], strides = [1, 1]} : vector<8x256xf32> to vector<1x256xf32>
    %906 = vector.broadcast %904 : vector<8x1xf32> to vector<8x256xf32>
    %907 = vector.broadcast %905 : vector<1x256xf32> to vector<8x256xf32>
    %908 = arith.mulf %906, %907 : vector<8x256xf32>
    %909 = arith.addf %903, %908 : vector<8x256xf32>
    %910 = vector.extract_strided_slice %897 {offsets = [0, 2], sizes = [8, 1], strides = [1, 1]} : vector<8x8xf32> to vector<8x1xf32>
    %911 = vector.extract_strided_slice %895 {offsets = [2, 0], sizes = [1, 256], strides = [1, 1]} : vector<8x256xf32> to vector<1x256xf32>
    %912 = vector.broadcast %910 : vector<8x1xf32> to vector<8x256xf32>
    %913 = vector.broadcast %911 : vector<1x256xf32> to vector<8x256xf32>
    %914 = arith.mulf %912, %913 : vector<8x256xf32>
    %915 = arith.addf %909, %914 : vector<8x256xf32>
    %916 = vector.extract_strided_slice %897 {offsets = [0, 3], sizes = [8, 1], strides = [1, 1]} : vector<8x8xf32> to vector<8x1xf32>
    %917 = vector.extract_strided_slice %895 {offsets = [3, 0], sizes = [1, 256], strides = [1, 1]} : vector<8x256xf32> to vector<1x256xf32>
    %918 = vector.broadcast %916 : vector<8x1xf32> to vector<8x256xf32>
    %919 = vector.broadcast %917 : vector<1x256xf32> to vector<8x256xf32>
    %920 = arith.mulf %918, %919 : vector<8x256xf32>
    %921 = arith.addf %915, %920 : vector<8x256xf32>
    %922 = vector.extract_strided_slice %897 {offsets = [0, 4], sizes = [8, 1], strides = [1, 1]} : vector<8x8xf32> to vector<8x1xf32>
    %923 = vector.extract_strided_slice %895 {offsets = [4, 0], sizes = [1, 256], strides = [1, 1]} : vector<8x256xf32> to vector<1x256xf32>
    %924 = vector.broadcast %922 : vector<8x1xf32> to vector<8x256xf32>
    %925 = vector.broadcast %923 : vector<1x256xf32> to vector<8x256xf32>
    %926 = arith.mulf %924, %925 : vector<8x256xf32>
    %927 = arith.addf %921, %926 : vector<8x256xf32>
    %928 = vector.extract_strided_slice %897 {offsets = [0, 5], sizes = [8, 1], strides = [1, 1]} : vector<8x8xf32> to vector<8x1xf32>
    %929 = vector.extract_strided_slice %895 {offsets = [5, 0], sizes = [1, 256], strides = [1, 1]} : vector<8x256xf32> to vector<1x256xf32>
    %930 = vector.broadcast %928 : vector<8x1xf32> to vector<8x256xf32>
    %931 = vector.broadcast %929 : vector<1x256xf32> to vector<8x256xf32>
    %932 = arith.mulf %930, %931 : vector<8x256xf32>
    %933 = arith.addf %927, %932 : vector<8x256xf32>
    %934 = vector.extract_strided_slice %897 {offsets = [0, 6], sizes = [8, 1], strides = [1, 1]} : vector<8x8xf32> to vector<8x1xf32>
    %935 = vector.extract_strided_slice %895 {offsets = [6, 0], sizes = [1, 256], strides = [1, 1]} : vector<8x256xf32> to vector<1x256xf32>
    %936 = vector.broadcast %934 : vector<8x1xf32> to vector<8x256xf32>
    %937 = vector.broadcast %935 : vector<1x256xf32> to vector<8x256xf32>
    %938 = arith.mulf %936, %937 : vector<8x256xf32>
    %939 = arith.addf %933, %938 : vector<8x256xf32>
    %940 = vector.extract_strided_slice %897 {offsets = [0, 7], sizes = [8, 1], strides = [1, 1]} : vector<8x8xf32> to vector<8x1xf32>
    %941 = vector.extract_strided_slice %895 {offsets = [7, 0], sizes = [1, 256], strides = [1, 1]} : vector<8x256xf32> to vector<1x256xf32>
    %942 = vector.broadcast %940 : vector<8x1xf32> to vector<8x256xf32>
    %943 = vector.broadcast %941 : vector<1x256xf32> to vector<8x256xf32>
    %944 = arith.mulf %942, %943 : vector<8x256xf32>
    %945 = arith.addf %939, %944 : vector<8x256xf32>
    %c239_i32_63 = arith.constant 239 : i32
    %946 = tpu.dynamic_rotate %515 by %c239_i32_63 dim 1 : vector<8x256xf32>, i32 -> vector<8x256xf32>
    %947 = vector.extract_strided_slice %2 {offsets = [8, 0], sizes = [1, 256], strides = [1, 1]} : vector<9x256xf32> to vector<1x256xf32>
    %948 = vector.broadcast %947 : vector<1x256xf32> to vector<8x256xf32>
    %949 = arith.mulf %946, %948 : vector<8x256xf32>
    %c8_64 = arith.constant 8 : index
    %c0_65 = arith.constant 0 : index
    %c0_66 = arith.constant 0 : index
    %950 = vector.load %arg2[%c8_64, %c0_65, %c0_66] : memref<9x8x8xf32, #tpu.memory_space<vmem>>, vector<1x8x8xf32>
    %951 = vector.shape_cast %950 : vector<1x8x8xf32> to vector<8x8xf32>
    %952 = vector.extract_strided_slice %951 {offsets = [0, 0], sizes = [8, 1], strides = [1, 1]} : vector<8x8xf32> to vector<8x1xf32>
    %953 = vector.extract_strided_slice %949 {offsets = [0, 0], sizes = [1, 256], strides = [1, 1]} : vector<8x256xf32> to vector<1x256xf32>
    %954 = vector.broadcast %952 : vector<8x1xf32> to vector<8x256xf32>
    %955 = vector.broadcast %953 : vector<1x256xf32> to vector<8x256xf32>
    %956 = arith.mulf %954, %955 : vector<8x256xf32>
    %957 = arith.addf %945, %956 : vector<8x256xf32>
    %958 = vector.extract_strided_slice %951 {offsets = [0, 1], sizes = [8, 1], strides = [1, 1]} : vector<8x8xf32> to vector<8x1xf32>
    %959 = vector.extract_strided_slice %949 {offsets = [1, 0], sizes = [1, 256], strides = [1, 1]} : vector<8x256xf32> to vector<1x256xf32>
    %960 = vector.broadcast %958 : vector<8x1xf32> to vector<8x256xf32>
    %961 = vector.broadcast %959 : vector<1x256xf32> to vector<8x256xf32>
    %962 = arith.mulf %960, %961 : vector<8x256xf32>
    %963 = arith.addf %957, %962 : vector<8x256xf32>
    %964 = vector.extract_strided_slice %951 {offsets = [0, 2], sizes = [8, 1], strides = [1, 1]} : vector<8x8xf32> to vector<8x1xf32>
    %965 = vector.extract_strided_slice %949 {offsets = [2, 0], sizes = [1, 256], strides = [1, 1]} : vector<8x256xf32> to vector<1x256xf32>
    %966 = vector.broadcast %964 : vector<8x1xf32> to vector<8x256xf32>
    %967 = vector.broadcast %965 : vector<1x256xf32> to vector<8x256xf32>
    %968 = arith.mulf %966, %967 : vector<8x256xf32>
    %969 = arith.addf %963, %968 : vector<8x256xf32>
    %970 = vector.extract_strided_slice %951 {offsets = [0, 3], sizes = [8, 1], strides = [1, 1]} : vector<8x8xf32> to vector<8x1xf32>
    %971 = vector.extract_strided_slice %949 {offsets = [3, 0], sizes = [1, 256], strides = [1, 1]} : vector<8x256xf32> to vector<1x256xf32>
    %972 = vector.broadcast %970 : vector<8x1xf32> to vector<8x256xf32>
    %973 = vector.broadcast %971 : vector<1x256xf32> to vector<8x256xf32>
    %974 = arith.mulf %972, %973 : vector<8x256xf32>
    %975 = arith.addf %969, %974 : vector<8x256xf32>
    %976 = vector.extract_strided_slice %951 {offsets = [0, 4], sizes = [8, 1], strides = [1, 1]} : vector<8x8xf32> to vector<8x1xf32>
    %977 = vector.extract_strided_slice %949 {offsets = [4, 0], sizes = [1, 256], strides = [1, 1]} : vector<8x256xf32> to vector<1x256xf32>
    %978 = vector.broadcast %976 : vector<8x1xf32> to vector<8x256xf32>
    %979 = vector.broadcast %977 : vector<1x256xf32> to vector<8x256xf32>
    %980 = arith.mulf %978, %979 : vector<8x256xf32>
    %981 = arith.addf %975, %980 : vector<8x256xf32>
    %982 = vector.extract_strided_slice %951 {offsets = [0, 5], sizes = [8, 1], strides = [1, 1]} : vector<8x8xf32> to vector<8x1xf32>
    %983 = vector.extract_strided_slice %949 {offsets = [5, 0], sizes = [1, 256], strides = [1, 1]} : vector<8x256xf32> to vector<1x256xf32>
    %984 = vector.broadcast %982 : vector<8x1xf32> to vector<8x256xf32>
    %985 = vector.broadcast %983 : vector<1x256xf32> to vector<8x256xf32>
    %986 = arith.mulf %984, %985 : vector<8x256xf32>
    %987 = arith.addf %981, %986 : vector<8x256xf32>
    %988 = vector.extract_strided_slice %951 {offsets = [0, 6], sizes = [8, 1], strides = [1, 1]} : vector<8x8xf32> to vector<8x1xf32>
    %989 = vector.extract_strided_slice %949 {offsets = [6, 0], sizes = [1, 256], strides = [1, 1]} : vector<8x256xf32> to vector<1x256xf32>
    %990 = vector.broadcast %988 : vector<8x1xf32> to vector<8x256xf32>
    %991 = vector.broadcast %989 : vector<1x256xf32> to vector<8x256xf32>
    %992 = arith.mulf %990, %991 : vector<8x256xf32>
    %993 = arith.addf %987, %992 : vector<8x256xf32>
    %994 = vector.extract_strided_slice %951 {offsets = [0, 7], sizes = [8, 1], strides = [1, 1]} : vector<8x8xf32> to vector<8x1xf32>
    %995 = vector.extract_strided_slice %949 {offsets = [7, 0], sizes = [1, 256], strides = [1, 1]} : vector<8x256xf32> to vector<1x256xf32>
    %996 = vector.broadcast %994 : vector<8x1xf32> to vector<8x256xf32>
    %997 = vector.broadcast %995 : vector<1x256xf32> to vector<8x256xf32>
    %998 = arith.mulf %996, %997 : vector<8x256xf32>
    %999 = arith.addf %993, %998 : vector<8x256xf32>
    %1000 = vector.broadcast %516 : vector<8x1xf32> to vector<8x256xf32>
    %1001 = arith.addf %999, %1000 : vector<8x256xf32>
    %1002 = vector.extract_strided_slice %1 {offsets = [0, 4], sizes = [8, 1], strides = [1, 1]} : vector<8x6xf32> to vector<8x1xf32>
    %1003 = vector.extract_strided_slice %1 {offsets = [0, 5], sizes = [8, 1], strides = [1, 1]} : vector<8x6xf32> to vector<8x1xf32>
    %cst_67 = arith.constant dense<0.000000e+00> : vector<8xf32>
    %1004 = vector.multi_reduction <add>, %1001, %cst_67 [1] : vector<8x256xf32> to vector<8xf32>
    %1005 = vector.shape_cast %1004 : vector<8xf32> to vector<8x1xf32>
    %c4_i32_68 = arith.constant 4 : i32
    %1006 = tpu.dynamic_rotate %1005 by %c4_i32_68 dim 0 : vector<8x1xf32>, i32 -> vector<8x1xf32>
    %1007 = arith.addf %1005, %1006 : vector<8x1xf32>
    %cst_69 = arith.constant 0.001953125 : f32
    %1008 = vector.broadcast %cst_69 : f32 to vector<8x1xf32>
    %1009 = arith.mulf %1007, %1008 : vector<8x1xf32>
    %1010 = vector.broadcast %1009 : vector<8x1xf32> to vector<8x256xf32>
    %1011 = arith.subf %1001, %1010 : vector<8x256xf32>
    %1012 = arith.mulf %1011, %1011 : vector<8x256xf32>
    %cst_70 = arith.constant dense<0.000000e+00> : vector<8xf32>
    %1013 = vector.multi_reduction <add>, %1012, %cst_70 [1] : vector<8x256xf32> to vector<8xf32>
    %1014 = vector.shape_cast %1013 : vector<8xf32> to vector<8x1xf32>
    %c4_i32_71 = arith.constant 4 : i32
    %1015 = tpu.dynamic_rotate %1014 by %c4_i32_71 dim 0 : vector<8x1xf32>, i32 -> vector<8x1xf32>
    %1016 = arith.addf %1014, %1015 : vector<8x1xf32>
    %cst_72 = arith.constant 0.001953125 : f32
    %1017 = vector.broadcast %cst_72 : f32 to vector<8x1xf32>
    %1018 = arith.mulf %1016, %1017 : vector<8x1xf32>
    %cst_73 = arith.constant 9.99999974E-6 : f32
    %1019 = vector.broadcast %cst_73 : f32 to vector<8x1xf32>
    %1020 = arith.addf %1018, %1019 : vector<8x1xf32>
    %1021 = math.rsqrt %1020 : vector<8x1xf32>
    %1022 = arith.mulf %1021, %1002 : vector<8x1xf32>
    %1023 = vector.broadcast %1022 : vector<8x1xf32> to vector<8x256xf32>
    %1024 = arith.mulf %1011, %1023 : vector<8x256xf32>
    %1025 = vector.broadcast %1003 : vector<8x1xf32> to vector<8x256xf32>
    %1026 = arith.addf %1024, %1025 : vector<8x256xf32>
    %1027 = arith.addf %1026, %0 : vector<8x256xf32>
    %cst_74 = arith.constant 0.000000e+00 : f32
    %1028 = vector.broadcast %cst_74 : f32 to vector<8x256xf32>
    %1029 = arith.maximumf %1027, %1028 : vector<8x256xf32>
    %c0_75 = arith.constant 0 : index
    %c0_76 = arith.constant 0 : index
    %1030 = vector.load %arg5[%c0_75, %c0_76] : memref<8x256xf32, #tpu.memory_space<vmem>>, vector<8x256xf32>
    tpu.vector_store %arg5[%c0_75, %c0_76], %1029 {strides = array<i32>} : memref<8x256xf32, #tpu.memory_space<vmem>>, vector<8x256xf32>,
    return
  }
}

</mosaic_0001>

<llo_original>
// kernel: tpu_custom_call.1
$region0: #{tpu_custom_call.1}
  #allocation0 [shape = 'u32[]', space=smem, size = 0x4, offset = 0x4, fixed_abs, tag = 'smem constant byte address 0x4 - core index']
  #allocation1 [shape = 'u32[144,128]{1,0:T(1,128)}', space=vmem, size = 0x12000, scoped, tag = 'internal scratch']
  %s0 = inlined_call_operand.vmem [shape: f32[8,256], index: 0, kind: input, shape index: {}]
  %s1 = inlined_call_operand.vmem [shape: f32[9,8,8], index: 1, kind: input, shape index: {}]
  %s2 = inlined_call_operand.vmem [shape: f32[9,8,8], index: 2, kind: input, shape index: {}]
  %s3 = inlined_call_operand.vmem [shape: f32[8,6], index: 3, kind: input, shape index: {}]
  %s4 = inlined_call_operand.vmem [shape: f32[9,256], index: 4, kind: input, shape index: {}]
  %s5 = inlined_call_operand.hbm [shape: f32[8,256], index: 5, kind: output, shape index: {}]
  %s6 = sld [smem:[#allocation0]]
  $region30: #{tpu_custom_call.1} parent=0
    _
  %s8 = ssub.s32 1, %s6
  %s9 = scalar_select 0, %s8, %s6
  $region1: #{tpu_custom_call.1} parent=0
    #allocation2 [shape = 'u8[8192]{0}', space=vmem, size = 0x2000, scoped, tag = 'output window, operand 0, single buffered']
    #allocation3 [shape = 's32[1]{0}', space=sflag, size = 0x4, scoped, tag = 'scoped memory for tpu_custom_call.1']
    %10 = vsyncpa [#allocation3], 0
    // Predicated region
    $region2: #{tpu_custom_call.1} parent=1 // pred_check
      _
    $region3: #{tpu_custom_call.1} parent=1 // pred_check_branch
      %12 = sbr.rel (0) target = $region5
    $region4: #{tpu_custom_call.1} parent=1 // pred_region
      _
    $region5: #{tpu_custom_call.1} parent=1 // pred_fallthru
      _
    // Predicated region
    $region6: #{tpu_custom_call.1} parent=1 // pred_check
      _
    $region7: #{tpu_custom_call.1} parent=1 // pred_check_branch
      %14 = sbr.rel (0) target = $region9
    $region8: #{tpu_custom_call.1} parent=1 // pred_region
      _
    $region9: #{tpu_custom_call.1} parent=1 // pred_fallthru
      _
    // Predicated region
    $region10: #{tpu_custom_call.1} parent=1 // pred_check
      _
    $region11: #{tpu_custom_call.1} parent=1 // pred_check_branch
      %16 = sbr.rel (0) target = $region13
    $region12: #{tpu_custom_call.1} parent=1 // pred_region
      _
    $region13: #{tpu_custom_call.1} parent=1 // pred_fallthru
      _
    // Predicated region
    $region14: #{tpu_custom_call.1} parent=1 // pred_check
      _
    $region15: #{tpu_custom_call.1} parent=1 // pred_check_branch
      %18 = sbr.rel (0) target = $region17
    $region16: #{tpu_custom_call.1} parent=1 // pred_region
      _
    $region17: #{tpu_custom_call.1} parent=1 // pred_fallthru
      _
    // Predicated region
    $region18: #{tpu_custom_call.1} parent=1 // pred_check
      _
    $region19: #{tpu_custom_call.1} parent=1 // pred_check_branch
      %20 = sbr.rel (0) target = $region21
    $region20: #{tpu_custom_call.1} parent=1 // pred_region
      _
    $region21: #{tpu_custom_call.1} parent=1 // pred_fallthru
      _
    %v21 = vld [vmem:[%s0] sm:$0xff]
    %v22 = vld [vmem:[%s0 + $0x8] sm:$0xff]
    %v23 = vld [vmem:[%s3] sm:$0xff]
    %v24 = vld [vmem:[%s4] sm:$0xff]
    %v25 = vld [vmem:[%s4 + $0x8] sm:$0xff]
    %v26 = vld [vmem:[%s4 + $0x10] sm:$0x1]
    %v27 = vld [vmem:[%s4 + $0x18] sm:$0x1]
    %28 = vrot.lane.b32.xlu0 %v21, 17
    %v29 = vpop.permute.xlu0 %28
    %30 = vrot.lane.b32.xlu0 %v22, 17
    %v31 = vpop.permute.xlu0 %30
    %v32 = vlaneseq
    %v33 = vand.u32 %v32, 127
    %vm34 = vcmp.lt.s32.totalorder %v33, 17
    %v35 = vsel %vm34, %v29, %v31
    %v36 = vsel %vm34, %v31, %v29
    %v37 = vlaneseq
    %v38 = vshrl.u32 %v37, 7
    %v39 = vsub.s32 0, %v38
    %v40 = vrot.slane %v24, %v39
    %v41 = vlaneseq
    %v42 = vshrl.u32 %v41, 7
    %v43 = vsub.s32 0, %v42
    %v44 = vrot.slane %v25, %v43
    %v45 = vmul.f32 %v36, %v40
    %v46 = vmul.f32 %v35, %v44
    %v47 = vld [vmem:[%s1] sm:$0xff]
    %49 = vset.pattern.permute.xlu0 0
    %50 = vperm.xlu0 %49, %v47
    %v51 = vpop.permute.xlu0 %50
    %v53 = vlaneseq
    %v54 = vshrl.u32 %v53, 7
    %v55 = vsub.s32 0, %v54
    %v56 = vrot.slane %v45, %v55
    %v57 = vlaneseq
    %v58 = vshrl.u32 %v57, 7
    %v59 = vsub.s32 0, %v58
    %v60 = vrot.slane %v46, %v59
    %v61 = vmul.f32 %v51, %v56
    %v62 = vmul.f32 %v51, %v60
    %v63 = vadd.f32 %v61, 0.0
    %v64 = vadd.f32 %v62, 0.0
    %65 = vset.pattern.permute.xlu0 1
    %66 = vperm.xlu0 %65, %v47
    %v67 = vpop.permute.xlu0 %66
    %v69 = vlaneseq
    %v70 = vshrl.u32 %v69, 7
    %v71 = vsub.s32 1, %v70
    %v72 = vrot.slane %v45, %v71
    %v73 = vlaneseq
    %v74 = vshrl.u32 %v73, 7
    %v75 = vsub.s32 1, %v74
    %v76 = vrot.slane %v46, %v75
    %v77 = vmul.f32 %v67, %v72
    %v78 = vmul.f32 %v67, %v76
    %v79 = vadd.f32 %v63, %v77
    %v80 = vadd.f32 %v64, %v78
    %81 = vset.pattern.permute.xlu0 2
    %82 = vperm.xlu0 %81, %v47
    %v83 = vpop.permute.xlu0 %82
    %v85 = vlaneseq
    %v86 = vshrl.u32 %v85, 7
    %v87 = vsub.s32 2, %v86
    %v88 = vrot.slane %v45, %v87
    %v89 = vlaneseq
    %v90 = vshrl.u32 %v89, 7
    %v91 = vsub.s32 2, %v90
    %v92 = vrot.slane %v46, %v91
    %v93 = vmul.f32 %v83, %v88
    %v94 = vmul.f32 %v83, %v92
    %v95 = vadd.f32 %v79, %v93
    %v96 = vadd.f32 %v80, %v94
    %97 = vset.pattern.permute.xlu0 3
    %98 = vperm.xlu0 %97, %v47
    %v99 = vpop.permute.xlu0 %98
    %v101 = vlaneseq
    %v102 = vshrl.u32 %v101, 7
    %v103 = vsub.s32 3, %v102
    %v104 = vrot.slane %v45, %v103
    %v105 = vlaneseq
    %v106 = vshrl.u32 %v105, 7
    %v107 = vsub.s32 3, %v106
    %v108 = vrot.slane %v46, %v107
    %v109 = vmul.f32 %v99, %v104
    %v110 = vmul.f32 %v99, %v108
    %v111 = vadd.f32 %v95, %v109
    %v112 = vadd.f32 %v96, %v110
    %113 = vset.pattern.permute.xlu0 4
    %114 = vperm.xlu0 %113, %v47
    %v115 = vpop.permute.xlu0 %114
    %v117 = vlaneseq
    %v118 = vshrl.u32 %v117, 7
    %v119 = vsub.s32 4, %v118
    %v120 = vrot.slane %v45, %v119
    %v121 = vlaneseq
    %v122 = vshrl.u32 %v121, 7
    %v123 = vsub.s32 4, %v122
    %v124 = vrot.slane %v46, %v123
    %v125 = vmul.f32 %v115, %v120
    %v126 = vmul.f32 %v115, %v124
    %v127 = vadd.f32 %v111, %v125
    %v128 = vadd.f32 %v112, %v126
    %129 = vset.pattern.permute.xlu0 5
    %130 = vperm.xlu0 %129, %v47
    %v131 = vpop.permute.xlu0 %130
    %v133 = vlaneseq
    %v134 = vshrl.u32 %v133, 7
    %v135 = vsub.s32 5, %v134
    %v136 = vrot.slane %v45, %v135
    %v137 = vlaneseq
    %v138 = vshrl.u32 %v137, 7
    %v139 = vsub.s32 5, %v138
    %v140 = vrot.slane %v46, %v139
    %v141 = vmul.f32 %v131, %v136
    %v142 = vmul.f32 %v131, %v140
    %v143 = vadd.f32 %v127, %v141
    %v144 = vadd.f32 %v128, %v142
    %145 = vset.pattern.permute.xlu0 6
    %146 = vperm.xlu0 %145, %v47
    %v147 = vpop.permute.xlu0 %146
    %v149 = vlaneseq
    %v150 = vshrl.u32 %v149, 7
    %v151 = vsub.s32 6, %v150
    %v152 = vrot.slane %v45, %v151
    %v153 = vlaneseq
    %v154 = vshrl.u32 %v153, 7
    %v155 = vsub.s32 6, %v154
    %v156 = vrot.slane %v46, %v155
    %v157 = vmul.f32 %v147, %v152
    %v158 = vmul.f32 %v147, %v156
    %v159 = vadd.f32 %v143, %v157
    %v160 = vadd.f32 %v144, %v158
    %161 = vset.pattern.permute.xlu0 7
    %162 = vperm.xlu0 %161, %v47
    %v163 = vpop.permute.xlu0 %162
    %v165 = vlaneseq
    %v166 = vshrl.u32 %v165, 7
    %v167 = vsub.s32 7, %v166
    %v168 = vrot.slane %v45, %v167
    %v169 = vlaneseq
    %v170 = vshrl.u32 %v169, 7
    %v171 = vsub.s32 7, %v170
    %v172 = vrot.slane %v46, %v171
    %v173 = vmul.f32 %v163, %v168
    %v174 = vmul.f32 %v163, %v172
    %v175 = vadd.f32 %v159, %v173
    %v176 = vadd.f32 %v160, %v174
    %177 = vrot.lane.b32.xlu0 %v21, 16
    %v178 = vpop.permute.xlu0 %177
    %179 = vrot.lane.b32.xlu0 %v22, 16
    %v180 = vpop.permute.xlu0 %179
    %vm181 = vcmp.lt.s32.totalorder %v33, 16
    %v182 = vsel %vm181, %v178, %v180
    %v183 = vsel %vm181, %v180, %v178
    %v184 = vlaneseq
    %v185 = vshrl.u32 %v184, 7
    %v186 = vsub.s32 1, %v185
    %v187 = vrot.slane %v24, %v186
    %v188 = vlaneseq
    %v189 = vshrl.u32 %v188, 7
    %v190 = vsub.s32 1, %v189
    %v191 = vrot.slane %v25, %v190
    %v192 = vmul.f32 %v183, %v187
    %v193 = vmul.f32 %v182, %v191
    %s194 = scalar_lea.vmem %s1, 8
    %v195 = vld [vmem:[%s194] sm:$0xff]
    %197 = vset.pattern.permute.xlu0 0
    %198 = vperm.xlu0 %197, %v195
    %v199 = vpop.permute.xlu0 %198
    %v201 = vlaneseq
    %v202 = vshrl.u32 %v201, 7
    %v203 = vsub.s32 0, %v202
    %v204 = vrot.slane %v192, %v203
    %v205 = vlaneseq
    %v206 = vshrl.u32 %v205, 7
    %v207 = vsub.s32 0, %v206
    %v208 = vrot.slane %v193, %v207
    %v209 = vmul.f32 %v199, %v204
    %v210 = vmul.f32 %v199, %v208
    %v211 = vadd.f32 %v175, %v209
    %v212 = vadd.f32 %v176, %v210
    %213 = vset.pattern.permute.xlu0 1
    %214 = vperm.xlu0 %213, %v195
    %v215 = vpop.permute.xlu0 %214
    %v217 = vlaneseq
    %v218 = vshrl.u32 %v217, 7
    %v219 = vsub.s32 1, %v218
    %v220 = vrot.slane %v192, %v219
    %v221 = vlaneseq
    %v222 = vshrl.u32 %v221, 7
    %v223 = vsub.s32 1, %v222
    %v224 = vrot.slane %v193, %v223
    %v225 = vmul.f32 %v215, %v220
    %v226 = vmul.f32 %v215, %v224
    %v227 = vadd.f32 %v211, %v225
    %v228 = vadd.f32 %v212, %v226
    %229 = vset.pattern.permute.xlu0 2
    %230 = vperm.xlu0 %229, %v195
    %v231 = vpop.permute.xlu0 %230
    %v233 = vlaneseq
    %v234 = vshrl.u32 %v233, 7
    %v235 = vsub.s32 2, %v234
    %v236 = vrot.slane %v192, %v235
    %v237 = vlaneseq
    %v238 = vshrl.u32 %v237, 7
    %v239 = vsub.s32 2, %v238
    %v240 = vrot.slane %v193, %v239
    %v241 = vmul.f32 %v231, %v236
    %v242 = vmul.f32 %v231, %v240
    %v243 = vadd.f32 %v227, %v241
    %v244 = vadd.f32 %v228, %v242
    %245 = vset.pattern.permute.xlu0 3
    %246 = vperm.xlu0 %245, %v195
    %v247 = vpop.permute.xlu0 %246
    %v249 = vlaneseq
    %v250 = vshrl.u32 %v249, 7
    %v251 = vsub.s32 3, %v250
    %v252 = vrot.slane %v192, %v251
    %v253 = vlaneseq
    %v254 = vshrl.u32 %v253, 7
    %v255 = vsub.s32 3, %v254
    %v256 = vrot.slane %v193, %v255
    %v257 = vmul.f32 %v247, %v252
    %v258 = vmul.f32 %v247, %v256
    %v259 = vadd.f32 %v243, %v257
    %v260 = vadd.f32 %v244, %v258
    %261 = vset.pattern.permute.xlu0 4
    %262 = vperm.xlu0 %261, %v195
    %v263 = vpop.permute.xlu0 %262
    %v265 = vlaneseq
    %v266 = vshrl.u32 %v265, 7
    %v267 = vsub.s32 4, %v266
    %v268 = vrot.slane %v192, %v267
    %v269 = vlaneseq
    %v270 = vshrl.u32 %v269, 7
    %v271 = vsub.s32 4, %v270
    %v272 = vrot.slane %v193, %v271
    %v273 = vmul.f32 %v263, %v268
    %v274 = vmul.f32 %v263, %v272
    %v275 = vadd.f32 %v259, %v273
    %v276 = vadd.f32 %v260, %v274
    %277 = vset.pattern.permute.xlu0 5
    %278 = vperm.xlu0 %277, %v195
    %v279 = vpop.permute.xlu0 %278
    %v281 = vlaneseq
    %v282 = vshrl.u32 %v281, 7
    %v283 = vsub.s32 5, %v282
    %v284 = vrot.slane %v192, %v283
    %v285 = vlaneseq
    %v286 = vshrl.u32 %v285, 7
    %v287 = vsub.s32 5, %v286
    %v288 = vrot.slane %v193, %v287
    %v289 = vmul.f32 %v279, %v284
    %v290 = vmul.f32 %v279, %v288
    %v291 = vadd.f32 %v275, %v289
    %v292 = vadd.f32 %v276, %v290
    %293 = vset.pattern.permute.xlu0 6
    %294 = vperm.xlu0 %293, %v195
    %v295 = vpop.permute.xlu0 %294
    %v297 = vlaneseq
    %v298 = vshrl.u32 %v297, 7
    %v299 = vsub.s32 6, %v298
    %v300 = vrot.slane %v192, %v299
    %v301 = vlaneseq
    %v302 = vshrl.u32 %v301, 7
    %v303 = vsub.s32 6, %v302
    %v304 = vrot.slane %v193, %v303
    %v305 = vmul.f32 %v295, %v300
    %v306 = vmul.f32 %v295, %v304
    %v307 = vadd.f32 %v291, %v305
    %v308 = vadd.f32 %v292, %v306
    %309 = vset.pattern.permute.xlu0 7
    %310 = vperm.xlu0 %309, %v195
    %v311 = vpop.permute.xlu0 %310
    %v313 = vlaneseq
    %v314 = vshrl.u32 %v313, 7
    %v315 = vsub.s32 7, %v314
    %v316 = vrot.slane %v192, %v315
    %v317 = vlaneseq
    %v318 = vshrl.u32 %v317, 7
    %v319 = vsub.s32 7, %v318
    %v320 = vrot.slane %v193, %v319
    %v321 = vmul.f32 %v311, %v316
    %v322 = vmul.f32 %v311, %v320
    %v323 = vadd.f32 %v307, %v321
    %v324 = vadd.f32 %v308, %v322
    %325 = vrot.lane.b32.xlu0 %v21, 15
    %v326 = vpop.permute.xlu0 %325
    %327 = vrot.lane.b32.xlu0 %v22, 15
    %v328 = vpop.permute.xlu0 %327
    %vm329 = vcmp.lt.s32.totalorder %v33, 15
    %v330 = vsel %vm329, %v326, %v328
    %v331 = vsel %vm329, %v328, %v326
    %v332 = vlaneseq
    %v333 = vshrl.u32 %v332, 7
    %v334 = vsub.s32 2, %v333
    %v335 = vrot.slane %v24, %v334
    %v336 = vlaneseq
    %v337 = vshrl.u32 %v336, 7
    %v338 = vsub.s32 2, %v337
    %v339 = vrot.slane %v25, %v338
    %v340 = vmul.f32 %v331, %v335
    %v341 = vmul.f32 %v330, %v339
    %s342 = scalar_lea.vmem %s1, 16
    %v343 = vld [vmem:[%s342] sm:$0xff]
    %345 = vset.pattern.permute.xlu0 0
    %346 = vperm.xlu0 %345, %v343
    %v347 = vpop.permute.xlu0 %346
    %v349 = vlaneseq
    %v350 = vshrl.u32 %v349, 7
    %v351 = vsub.s32 0, %v350
    %v352 = vrot.slane %v340, %v351
    %v353 = vlaneseq
    %v354 = vshrl.u32 %v353, 7
    %v355 = vsub.s32 0, %v354
    %v356 = vrot.slane %v341, %v355
    %v357 = vmul.f32 %v347, %v352
    %v358 = vmul.f32 %v347, %v356
    %v359 = vadd.f32 %v323, %v357
    %v360 = vadd.f32 %v324, %v358
    %361 = vset.pattern.permute.xlu0 1
    %362 = vperm.xlu0 %361, %v343
    %v363 = vpop.permute.xlu0 %362
    %v365 = vlaneseq
    %v366 = vshrl.u32 %v365, 7
    %v367 = vsub.s32 1, %v366
    %v368 = vrot.slane %v340, %v367
    %v369 = vlaneseq
    %v370 = vshrl.u32 %v369, 7
    %v371 = vsub.s32 1, %v370
    %v372 = vrot.slane %v341, %v371
    %v373 = vmul.f32 %v363, %v368
    %v374 = vmul.f32 %v363, %v372
    %v375 = vadd.f32 %v359, %v373
    %v376 = vadd.f32 %v360, %v374
    %377 = vset.pattern.permute.xlu0 2
    %378 = vperm.xlu0 %377, %v343
    %v379 = vpop.permute.xlu0 %378
    %v381 = vlaneseq
    %v382 = vshrl.u32 %v381, 7
    %v383 = vsub.s32 2, %v382
    %v384 = vrot.slane %v340, %v383
    %v385 = vlaneseq
    %v386 = vshrl.u32 %v385, 7
    %v387 = vsub.s32 2, %v386
    %v388 = vrot.slane %v341, %v387
    %v389 = vmul.f32 %v379, %v384
    %v390 = vmul.f32 %v379, %v388
    %v391 = vadd.f32 %v375, %v389
    %v392 = vadd.f32 %v376, %v390
    %393 = vset.pattern.permute.xlu0 3
    %394 = vperm.xlu0 %393, %v343
    %v395 = vpop.permute.xlu0 %394
    %v397 = vlaneseq
    %v398 = vshrl.u32 %v397, 7
    %v399 = vsub.s32 3, %v398
    %v400 = vrot.slane %v340, %v399
    %v401 = vlaneseq
    %v402 = vshrl.u32 %v401, 7
    %v403 = vsub.s32 3, %v402
    %v404 = vrot.slane %v341, %v403
    %v405 = vmul.f32 %v395, %v400
    %v406 = vmul.f32 %v395, %v404
    %v407 = vadd.f32 %v391, %v405
    %v408 = vadd.f32 %v392, %v406
    %409 = vset.pattern.permute.xlu0 4
    %410 = vperm.xlu0 %409, %v343
    %v411 = vpop.permute.xlu0 %410
    %v413 = vlaneseq
    %v414 = vshrl.u32 %v413, 7
    %v415 = vsub.s32 4, %v414
    %v416 = vrot.slane %v340, %v415
    %v417 = vlaneseq
    %v418 = vshrl.u32 %v417, 7
    %v419 = vsub.s32 4, %v418
    %v420 = vrot.slane %v341, %v419
    %v421 = vmul.f32 %v411, %v416
    %v422 = vmul.f32 %v411, %v420
    %v423 = vadd.f32 %v407, %v421
    %v424 = vadd.f32 %v408, %v422
    %425 = vset.pattern.permute.xlu0 5
    %426 = vperm.xlu0 %425, %v343
    %v427 = vpop.permute.xlu0 %426
    %v429 = vlaneseq
    %v430 = vshrl.u32 %v429, 7
    %v431 = vsub.s32 5, %v430
    %v432 = vrot.slane %v340, %v431
    %v433 = vlaneseq
    %v434 = vshrl.u32 %v433, 7
    %v435 = vsub.s32 5, %v434
    %v436 = vrot.slane %v341, %v435
    %v437 = vmul.f32 %v427, %v432
    %v438 = vmul.f32 %v427, %v436
    %v439 = vadd.f32 %v423, %v437
    %v440 = vadd.f32 %v424, %v438
    %441 = vset.pattern.permute.xlu0 6
    %442 = vperm.xlu0 %441, %v343
    %v443 = vpop.permute.xlu0 %442
    %v445 = vlaneseq
    %v446 = vshrl.u32 %v445, 7
    %v447 = vsub.s32 6, %v446
    %v448 = vrot.slane %v340, %v447
    %v449 = vlaneseq
    %v450 = vshrl.u32 %v449, 7
    %v451 = vsub.s32 6, %v450
    %v452 = vrot.slane %v341, %v451
    %v453 = vmul.f32 %v443, %v448
    %v454 = vmul.f32 %v443, %v452
    %v455 = vadd.f32 %v439, %v453
    %v456 = vadd.f32 %v440, %v454
    %457 = vset.pattern.permute.xlu0 7
    %458 = vperm.xlu0 %457, %v343
    %v459 = vpop.permute.xlu0 %458
    %v461 = vlaneseq
    %v462 = vshrl.u32 %v461, 7
    %v463 = vsub.s32 7, %v462
    %v464 = vrot.slane %v340, %v463
    %v465 = vlaneseq
    %v466 = vshrl.u32 %v465, 7
    %v467 = vsub.s32 7, %v466
    %v468 = vrot.slane %v341, %v467
    %v469 = vmul.f32 %v459, %v464
    %v470 = vmul.f32 %v459, %v468
    %v471 = vadd.f32 %v455, %v469
    %v472 = vadd.f32 %v456, %v470
    %473 = vrot.lane.b32.xlu0 %v21, 1
    %v474 = vpop.permute.xlu0 %473
    %475 = vrot.lane.b32.xlu0 %v22, 1
    %v476 = vpop.permute.xlu0 %475
    %vm477 = vcmp.lt.s32.totalorder %v33, 1
    %v478 = vsel %vm477, %v474, %v476
    %v479 = vsel %vm477, %v476, %v474
    %v480 = vlaneseq
    %v481 = vshrl.u32 %v480, 7
    %v482 = vsub.s32 3, %v481
    %v483 = vrot.slane %v24, %v482
    %v484 = vlaneseq
    %v485 = vshrl.u32 %v484, 7
    %v486 = vsub.s32 3, %v485
    %v487 = vrot.slane %v25, %v486
    %v488 = vmul.f32 %v479, %v483
    %v489 = vmul.f32 %v478, %v487
    %s490 = scalar_lea.vmem %s1, 24
    %v491 = vld [vmem:[%s490] sm:$0xff]
    %493 = vset.pattern.permute.xlu0 0
    %494 = vperm.xlu0 %493, %v491
    %v495 = vpop.permute.xlu0 %494
    %v497 = vlaneseq
    %v498 = vshrl.u32 %v497, 7
    %v499 = vsub.s32 0, %v498
    %v500 = vrot.slane %v488, %v499
    %v501 = vlaneseq
    %v502 = vshrl.u32 %v501, 7
    %v503 = vsub.s32 0, %v502
    %v504 = vrot.slane %v489, %v503
    %v505 = vmul.f32 %v495, %v500
    %v506 = vmul.f32 %v495, %v504
    %v507 = vadd.f32 %v471, %v505
    %v508 = vadd.f32 %v472, %v506
    %509 = vset.pattern.permute.xlu0 1
    %510 = vperm.xlu0 %509, %v491
    %v511 = vpop.permute.xlu0 %510
    %v513 = vlaneseq
    %v514 = vshrl.u32 %v513, 7
    %v515 = vsub.s32 1, %v514
    %v516 = vrot.slane %v488, %v515
    %v517 = vlaneseq
    %v518 = vshrl.u32 %v517, 7
    %v519 = vsub.s32 1, %v518
    %v520 = vrot.slane %v489, %v519
    %v521 = vmul.f32 %v511, %v516
    %v522 = vmul.f32 %v511, %v520
    %v523 = vadd.f32 %v507, %v521
    %v524 = vadd.f32 %v508, %v522
    %525 = vset.pattern.permute.xlu0 2
    %526 = vperm.xlu0 %525, %v491
    %v527 = vpop.permute.xlu0 %526
    %v529 = vlaneseq
    %v530 = vshrl.u32 %v529, 7
    %v531 = vsub.s32 2, %v530
    %v532 = vrot.slane %v488, %v531
    %v533 = vlaneseq
    %v534 = vshrl.u32 %v533, 7
    %v535 = vsub.s32 2, %v534
    %v536 = vrot.slane %v489, %v535
    %v537 = vmul.f32 %v527, %v532
    %v538 = vmul.f32 %v527, %v536
    %v539 = vadd.f32 %v523, %v537
    %v540 = vadd.f32 %v524, %v538
    %541 = vset.pattern.permute.xlu0 3
    %542 = vperm.xlu0 %541, %v491
    %v543 = vpop.permute.xlu0 %542
    %v545 = vlaneseq
    %v546 = vshrl.u32 %v545, 7
    %v547 = vsub.s32 3, %v546
    %v548 = vrot.slane %v488, %v547
    %v549 = vlaneseq
    %v550 = vshrl.u32 %v549, 7
    %v551 = vsub.s32 3, %v550
    %v552 = vrot.slane %v489, %v551
    %v553 = vmul.f32 %v543, %v548
    %v554 = vmul.f32 %v543, %v552
    %v555 = vadd.f32 %v539, %v553
    %v556 = vadd.f32 %v540, %v554
    %557 = vset.pattern.permute.xlu0 4
    %558 = vperm.xlu0 %557, %v491
    %v559 = vpop.permute.xlu0 %558
    %v561 = vlaneseq
    %v562 = vshrl.u32 %v561, 7
    %v563 = vsub.s32 4, %v562
    %v564 = vrot.slane %v488, %v563
    %v565 = vlaneseq
    %v566 = vshrl.u32 %v565, 7
    %v567 = vsub.s32 4, %v566
    %v568 = vrot.slane %v489, %v567
    %v569 = vmul.f32 %v559, %v564
    %v570 = vmul.f32 %v559, %v568
    %v571 = vadd.f32 %v555, %v569
    %v572 = vadd.f32 %v556, %v570
    %573 = vset.pattern.permute.xlu0 5
    %574 = vperm.xlu0 %573, %v491
    %v575 = vpop.permute.xlu0 %574
    %v577 = vlaneseq
    %v578 = vshrl.u32 %v577, 7
    %v579 = vsub.s32 5, %v578
    %v580 = vrot.slane %v488, %v579
    %v581 = vlaneseq
    %v582 = vshrl.u32 %v581, 7
    %v583 = vsub.s32 5, %v582
    %v584 = vrot.slane %v489, %v583
    %v585 = vmul.f32 %v575, %v580
    %v586 = vmul.f32 %v575, %v584
    %v587 = vadd.f32 %v571, %v585
    %v588 = vadd.f32 %v572, %v586
    %589 = vset.pattern.permute.xlu0 6
    %590 = vperm.xlu0 %589, %v491
    %v591 = vpop.permute.xlu0 %590
    %v593 = vlaneseq
    %v594 = vshrl.u32 %v593, 7
    %v595 = vsub.s32 6, %v594
    %v596 = vrot.slane %v488, %v595
    %v597 = vlaneseq
    %v598 = vshrl.u32 %v597, 7
    %v599 = vsub.s32 6, %v598
    %v600 = vrot.slane %v489, %v599
    %v601 = vmul.f32 %v591, %v596
    %v602 = vmul.f32 %v591, %v600
    %v603 = vadd.f32 %v587, %v601
    %v604 = vadd.f32 %v588, %v602
    %605 = vset.pattern.permute.xlu0 7
    %606 = vperm.xlu0 %605, %v491
    %v607 = vpop.permute.xlu0 %606
    %v609 = vlaneseq
    %v610 = vshrl.u32 %v609, 7
    %v611 = vsub.s32 7, %v610
    %v612 = vrot.slane %v488, %v611
    %v613 = vlaneseq
    %v614 = vshrl.u32 %v613, 7
    %v615 = vsub.s32 7, %v614
    %v616 = vrot.slane %v489, %v615
    %v617 = vmul.f32 %v607, %v612
    %v618 = vmul.f32 %v607, %v616
    %v619 = vadd.f32 %v603, %v617
    %v620 = vadd.f32 %v604, %v618
    %s621 = scalar_lea.vmem %s1, 32
    %v622 = vld [vmem:[%s621] sm:$0xff]
    %624 = vset.pattern.permute.xlu0 0
    %625 = vperm.xlu0 %624, %v622
    %v626 = vpop.permute.xlu0 %625
    %v628 = vlaneseq
    %v629 = vshrl.u32 %v628, 7
    %v630 = vsub.s32 0, %v629
    %v631 = vrot.slane %v21, %v630
    %v632 = vlaneseq
    %v633 = vshrl.u32 %v632, 7
    %v634 = vsub.s32 0, %v633
    %v635 = vrot.slane %v22, %v634
    %v636 = vmul.f32 %v626, %v631
    %v637 = vmul.f32 %v626, %v635
    %v638 = vadd.f32 %v619, %v636
    %v639 = vadd.f32 %v620, %v637
    %640 = vset.pattern.permute.xlu0 1
    %641 = vperm.xlu0 %640, %v622
    %v642 = vpop.permute.xlu0 %641
    %v644 = vlaneseq
    %v645 = vshrl.u32 %v644, 7
    %v646 = vsub.s32 1, %v645
    %v647 = vrot.slane %v21, %v646
    %v648 = vlaneseq
    %v649 = vshrl.u32 %v648, 7
    %v650 = vsub.s32 1, %v649
    %v651 = vrot.slane %v22, %v650
    %v652 = vmul.f32 %v642, %v647
    %v653 = vmul.f32 %v642, %v651
    %v654 = vadd.f32 %v638, %v652
    %v655 = vadd.f32 %v639, %v653
    %656 = vset.pattern.permute.xlu0 2
    %657 = vperm.xlu0 %656, %v622
    %v658 = vpop.permute.xlu0 %657
    %v660 = vlaneseq
    %v661 = vshrl.u32 %v660, 7
    %v662 = vsub.s32 2, %v661
    %v663 = vrot.slane %v21, %v662
    %v664 = vlaneseq
    %v665 = vshrl.u32 %v664, 7
    %v666 = vsub.s32 2, %v665
    %v667 = vrot.slane %v22, %v666
    %v668 = vmul.f32 %v658, %v663
    %v669 = vmul.f32 %v658, %v667
    %v670 = vadd.f32 %v654, %v668
    %v671 = vadd.f32 %v655, %v669
    %672 = vset.pattern.permute.xlu0 3
    %673 = vperm.xlu0 %672, %v622
    %v674 = vpop.permute.xlu0 %673
    %v676 = vlaneseq
    %v677 = vshrl.u32 %v676, 7
    %v678 = vsub.s32 3, %v677
    %v679 = vrot.slane %v21, %v678
    %v680 = vlaneseq
    %v681 = vshrl.u32 %v680, 7
    %v682 = vsub.s32 3, %v681
    %v683 = vrot.slane %v22, %v682
    %v684 = vmul.f32 %v674, %v679
    %v685 = vmul.f32 %v674, %v683
    %v686 = vadd.f32 %v670, %v684
    %v687 = vadd.f32 %v671, %v685
    %688 = vset.pattern.permute.xlu0 4
    %689 = vperm.xlu0 %688, %v622
    %v690 = vpop.permute.xlu0 %689
    %v692 = vlaneseq
    %v693 = vshrl.u32 %v692, 7
    %v694 = vsub.s32 4, %v693
    %v695 = vrot.slane %v21, %v694
    %v696 = vlaneseq
    %v697 = vshrl.u32 %v696, 7
    %v698 = vsub.s32 4, %v697
    %v699 = vrot.slane %v22, %v698
    %v700 = vmul.f32 %v690, %v695
    %v701 = vmul.f32 %v690, %v699
    %v702 = vadd.f32 %v686, %v700
    %v703 = vadd.f32 %v687, %v701
    %704 = vset.pattern.permute.xlu0 5
    %705 = vperm.xlu0 %704, %v622
    %v706 = vpop.permute.xlu0 %705
    %v708 = vlaneseq
    %v709 = vshrl.u32 %v708, 7
    %v710 = vsub.s32 5, %v709
    %v711 = vrot.slane %v21, %v710
    %v712 = vlaneseq
    %v713 = vshrl.u32 %v712, 7
    %v714 = vsub.s32 5, %v713
    %v715 = vrot.slane %v22, %v714
    %v716 = vmul.f32 %v706, %v711
    %v717 = vmul.f32 %v706, %v715
    %v718 = vadd.f32 %v702, %v716
    %v719 = vadd.f32 %v703, %v717
    %720 = vset.pattern.permute.xlu0 6
    %721 = vperm.xlu0 %720, %v622
    %v722 = vpop.permute.xlu0 %721
    %v724 = vlaneseq
    %v725 = vshrl.u32 %v724, 7
    %v726 = vsub.s32 6, %v725
    %v727 = vrot.slane %v21, %v726
    %v728 = vlaneseq
    %v729 = vshrl.u32 %v728, 7
    %v730 = vsub.s32 6, %v729
    %v731 = vrot.slane %v22, %v730
    %v732 = vmul.f32 %v722, %v727
    %v733 = vmul.f32 %v722, %v731
    %v734 = vadd.f32 %v718, %v732
    %v735 = vadd.f32 %v719, %v733
    %736 = vset.pattern.permute.xlu0 7
    %737 = vperm.xlu0 %736, %v622
    %v738 = vpop.permute.xlu0 %737
    %v740 = vlaneseq
    %v741 = vshrl.u32 %v740, 7
    %v742 = vsub.s32 7, %v741
    %v743 = vrot.slane %v21, %v742
    %v744 = vlaneseq
    %v745 = vshrl.u32 %v744, 7
    %v746 = vsub.s32 7, %v745
    %v747 = vrot.slane %v22, %v746
    %v748 = vmul.f32 %v738, %v743
    %v749 = vmul.f32 %v738, %v747
    %v750 = vadd.f32 %v734, %v748
    %v751 = vadd.f32 %v735, %v749
    %752 = vrot.lane.b32.xlu0 %v21, 127
    %v753 = vpop.permute.xlu0 %752
    %754 = vrot.lane.b32.xlu0 %v22, 127
    %v755 = vpop.permute.xlu0 %754
    %vm756 = vcmp.lt.s32.totalorder %v33, 127
    %v757 = vsel %vm756, %v753, %v755
    %v758 = vsel %vm756, %v755, %v753
    %v759 = vlaneseq
    %v760 = vshrl.u32 %v759, 7
    %v761 = vsub.s32 5, %v760
    %v762 = vrot.slane %v24, %v761
    %v763 = vlaneseq
    %v764 = vshrl.u32 %v763, 7
    %v765 = vsub.s32 5, %v764
    %v766 = vrot.slane %v25, %v765
    %v767 = vmul.f32 %v757, %v762
    %v768 = vmul.f32 %v758, %v766
    %s769 = scalar_lea.vmem %s1, 40
    %v770 = vld [vmem:[%s769] sm:$0xff]
    %772 = vset.pattern.permute.xlu0 0
    %773 = vperm.xlu0 %772, %v770
    %v774 = vpop.permute.xlu0 %773
    %v776 = vlaneseq
    %v777 = vshrl.u32 %v776, 7
    %v778 = vsub.s32 0, %v777
    %v779 = vrot.slane %v767, %v778
    %v780 = vlaneseq
    %v781 = vshrl.u32 %v780, 7
    %v782 = vsub.s32 0, %v781
    %v783 = vrot.slane %v768, %v782
    %v784 = vmul.f32 %v774, %v779
    %v785 = vmul.f32 %v774, %v783
    %v786 = vadd.f32 %v750, %v784
    %v787 = vadd.f32 %v751, %v785
    %788 = vset.pattern.permute.xlu0 1
    %789 = vperm.xlu0 %788, %v770
    %v790 = vpop.permute.xlu0 %789
    %v792 = vlaneseq
    %v793 = vshrl.u32 %v792, 7
    %v794 = vsub.s32 1, %v793
    %v795 = vrot.slane %v767, %v794
    %v796 = vlaneseq
    %v797 = vshrl.u32 %v796, 7
    %v798 = vsub.s32 1, %v797
    %v799 = vrot.slane %v768, %v798
    %v800 = vmul.f32 %v790, %v795
    %v801 = vmul.f32 %v790, %v799
    %v802 = vadd.f32 %v786, %v800
    %v803 = vadd.f32 %v787, %v801
    %804 = vset.pattern.permute.xlu0 2
    %805 = vperm.xlu0 %804, %v770
    %v806 = vpop.permute.xlu0 %805
    %v808 = vlaneseq
    %v809 = vshrl.u32 %v808, 7
    %v810 = vsub.s32 2, %v809
    %v811 = vrot.slane %v767, %v810
    %v812 = vlaneseq
    %v813 = vshrl.u32 %v812, 7
    %v814 = vsub.s32 2, %v813
    %v815 = vrot.slane %v768, %v814
    %v816 = vmul.f32 %v806, %v811
    %v817 = vmul.f32 %v806, %v815
    %v818 = vadd.f32 %v802, %v816
    %v819 = vadd.f32 %v803, %v817
    %820 = vset.pattern.permute.xlu0 3
    %821 = vperm.xlu0 %820, %v770
    %v822 = vpop.permute.xlu0 %821
    %v824 = vlaneseq
    %v825 = vshrl.u32 %v824, 7
    %v826 = vsub.s32 3, %v825
    %v827 = vrot.slane %v767, %v826
    %v828 = vlaneseq
    %v829 = vshrl.u32 %v828, 7
    %v830 = vsub.s32 3, %v829
    %v831 = vrot.slane %v768, %v830
    %v832 = vmul.f32 %v822, %v827
    %v833 = vmul.f32 %v822, %v831
    %v834 = vadd.f32 %v818, %v832
    %v835 = vadd.f32 %v819, %v833
    %836 = vset.pattern.permute.xlu0 4
    %837 = vperm.xlu0 %836, %v770
    %v838 = vpop.permute.xlu0 %837
    %v840 = vlaneseq
    %v841 = vshrl.u32 %v840, 7
    %v842 = vsub.s32 4, %v841
    %v843 = vrot.slane %v767, %v842
    %v844 = vlaneseq
    %v845 = vshrl.u32 %v844, 7
    %v846 = vsub.s32 4, %v845
    %v847 = vrot.slane %v768, %v846
    %v848 = vmul.f32 %v838, %v843
    %v849 = vmul.f32 %v838, %v847
    %v850 = vadd.f32 %v834, %v848
    %v851 = vadd.f32 %v835, %v849
    %852 = vset.pattern.permute.xlu0 5
    %853 = vperm.xlu0 %852, %v770
    %v854 = vpop.permute.xlu0 %853
    %v856 = vlaneseq
    %v857 = vshrl.u32 %v856, 7
    %v858 = vsub.s32 5, %v857
    %v859 = vrot.slane %v767, %v858
    %v860 = vlaneseq
    %v861 = vshrl.u32 %v860, 7
    %v862 = vsub.s32 5, %v861
    %v863 = vrot.slane %v768, %v862
    %v864 = vmul.f32 %v854, %v859
    %v865 = vmul.f32 %v854, %v863
    %v866 = vadd.f32 %v850, %v864
    %v867 = vadd.f32 %v851, %v865
    %868 = vset.pattern.permute.xlu0 6
    %869 = vperm.xlu0 %868, %v770
    %v870 = vpop.permute.xlu0 %869
    %v872 = vlaneseq
    %v873 = vshrl.u32 %v872, 7
    %v874 = vsub.s32 6, %v873
    %v875 = vrot.slane %v767, %v874
    %v876 = vlaneseq
    %v877 = vshrl.u32 %v876, 7
    %v878 = vsub.s32 6, %v877
    %v879 = vrot.slane %v768, %v878
    %v880 = vmul.f32 %v870, %v875
    %v881 = vmul.f32 %v870, %v879
    %v882 = vadd.f32 %v866, %v880
    %v883 = vadd.f32 %v867, %v881
    %884 = vset.pattern.permute.xlu0 7
    %885 = vperm.xlu0 %884, %v770
    %v886 = vpop.permute.xlu0 %885
    %v888 = vlaneseq
    %v889 = vshrl.u32 %v888, 7
    %v890 = vsub.s32 7, %v889
    %v891 = vrot.slane %v767, %v890
    %v892 = vlaneseq
    %v893 = vshrl.u32 %v892, 7
    %v894 = vsub.s32 7, %v893
    %v895 = vrot.slane %v768, %v894
    %v896 = vmul.f32 %v886, %v891
    %v897 = vmul.f32 %v886, %v895
    %v898 = vadd.f32 %v882, %v896
    %v899 = vadd.f32 %v883, %v897
    %900 = vrot.lane.b32.xlu0 %v21, 113
    %v901 = vpop.permute.xlu0 %900
    %902 = vrot.lane.b32.xlu0 %v22, 113
    %v903 = vpop.permute.xlu0 %902
    %vm904 = vcmp.lt.s32.totalorder %v33, 113
    %v905 = vsel %vm904, %v901, %v903
    %v906 = vsel %vm904, %v903, %v901
    %v907 = vlaneseq
    %v908 = vshrl.u32 %v907, 7
    %v909 = vsub.s32 6, %v908
    %v910 = vrot.slane %v24, %v909
    %v911 = vlaneseq
    %v912 = vshrl.u32 %v911, 7
    %v913 = vsub.s32 6, %v912
    %v914 = vrot.slane %v25, %v913
    %v915 = vmul.f32 %v905, %v910
    %v916 = vmul.f32 %v906, %v914
    %s917 = scalar_lea.vmem %s1, 48
    %v918 = vld [vmem:[%s917] sm:$0xff]
    %920 = vset.pattern.permute.xlu0 0
    %921 = vperm.xlu0 %920, %v918
    %v922 = vpop.permute.xlu0 %921
    %v924 = vlaneseq
    %v925 = vshrl.u32 %v924, 7
    %v926 = vsub.s32 0, %v925
    %v927 = vrot.slane %v915, %v926
    %v928 = vlaneseq
    %v929 = vshrl.u32 %v928, 7
    %v930 = vsub.s32 0, %v929
    %v931 = vrot.slane %v916, %v930
    %v932 = vmul.f32 %v922, %v927
    %v933 = vmul.f32 %v922, %v931
    %v934 = vadd.f32 %v898, %v932
    %v935 = vadd.f32 %v899, %v933
    %936 = vset.pattern.permute.xlu0 1
    %937 = vperm.xlu0 %936, %v918
    %v938 = vpop.permute.xlu0 %937
    %v940 = vlaneseq
    %v941 = vshrl.u32 %v940, 7
    %v942 = vsub.s32 1, %v941
    %v943 = vrot.slane %v915, %v942
    %v944 = vlaneseq
    %v945 = vshrl.u32 %v944, 7
    %v946 = vsub.s32 1, %v945
    %v947 = vrot.slane %v916, %v946
    %v948 = vmul.f32 %v938, %v943
    %v949 = vmul.f32 %v938, %v947
    %v950 = vadd.f32 %v934, %v948
    %v951 = vadd.f32 %v935, %v949
    %952 = vset.pattern.permute.xlu0 2
    %953 = vperm.xlu0 %952, %v918
    %v954 = vpop.permute.xlu0 %953
    %v956 = vlaneseq
    %v957 = vshrl.u32 %v956, 7
    %v958 = vsub.s32 2, %v957
    %v959 = vrot.slane %v915, %v958
    %v960 = vlaneseq
    %v961 = vshrl.u32 %v960, 7
    %v962 = vsub.s32 2, %v961
    %v963 = vrot.slane %v916, %v962
    %v964 = vmul.f32 %v954, %v959
    %v965 = vmul.f32 %v954, %v963
    %v966 = vadd.f32 %v950, %v964
    %v967 = vadd.f32 %v951, %v965
    %968 = vset.pattern.permute.xlu0 3
    %969 = vperm.xlu0 %968, %v918
    %v970 = vpop.permute.xlu0 %969
    %v972 = vlaneseq
    %v973 = vshrl.u32 %v972, 7
    %v974 = vsub.s32 3, %v973
    %v975 = vrot.slane %v915, %v974
    %v976 = vlaneseq
    %v977 = vshrl.u32 %v976, 7
    %v978 = vsub.s32 3, %v977
    %v979 = vrot.slane %v916, %v978
    %v980 = vmul.f32 %v970, %v975
    %v981 = vmul.f32 %v970, %v979
    %v982 = vadd.f32 %v966, %v980
    %v983 = vadd.f32 %v967, %v981
    %984 = vset.pattern.permute.xlu0 4
    %985 = vperm.xlu0 %984, %v918
    %v986 = vpop.permute.xlu0 %985
    %v988 = vlaneseq
    %v989 = vshrl.u32 %v988, 7
    %v990 = vsub.s32 4, %v989
    %v991 = vrot.slane %v915, %v990
    %v992 = vlaneseq
    %v993 = vshrl.u32 %v992, 7
    %v994 = vsub.s32 4, %v993
    %v995 = vrot.slane %v916, %v994
    %v996 = vmul.f32 %v986, %v991
    %v997 = vmul.f32 %v986, %v995
    %v998 = vadd.f32 %v982, %v996
    %v999 = vadd.f32 %v983, %v997
    %1000 = vset.pattern.permute.xlu0 5
    %1001 = vperm.xlu0 %1000, %v918
    %v1002 = vpop.permute.xlu0 %1001
    %v1004 = vlaneseq
    %v1005 = vshrl.u32 %v1004, 7
    %v1006 = vsub.s32 5, %v1005
    %v1007 = vrot.slane %v915, %v1006
    %v1008 = vlaneseq
    %v1009 = vshrl.u32 %v1008, 7
    %v1010 = vsub.s32 5, %v1009
    %v1011 = vrot.slane %v916, %v1010
    %v1012 = vmul.f32 %v1002, %v1007
    %v1013 = vmul.f32 %v1002, %v1011
    %v1014 = vadd.f32 %v998, %v1012
    %v1015 = vadd.f32 %v999, %v1013
    %1016 = vset.pattern.permute.xlu0 6
    %1017 = vperm.xlu0 %1016, %v918
    %v1018 = vpop.permute.xlu0 %1017
    %v1020 = vlaneseq
    %v1021 = vshrl.u32 %v1020, 7
    %v1022 = vsub.s32 6, %v1021
    %v1023 = vrot.slane %v915, %v1022
    %v1024 = vlaneseq
    %v1025 = vshrl.u32 %v1024, 7
    %v1026 = vsub.s32 6, %v1025
    %v1027 = vrot.slane %v916, %v1026
    %v1028 = vmul.f32 %v1018, %v1023
    %v1029 = vmul.f32 %v1018, %v1027
    %v1030 = vadd.f32 %v1014, %v1028
    %v1031 = vadd.f32 %v1015, %v1029
    %1032 = vset.pattern.permute.xlu0 7
    %1033 = vperm.xlu0 %1032, %v918
    %v1034 = vpop.permute.xlu0 %1033
    %v1036 = vlaneseq
    %v1037 = vshrl.u32 %v1036, 7
    %v1038 = vsub.s32 7, %v1037
    %v1039 = vrot.slane %v915, %v1038
    %v1040 = vlaneseq
    %v1041 = vshrl.u32 %v1040, 7
    %v1042 = vsub.s32 7, %v1041
    %v1043 = vrot.slane %v916, %v1042
    %v1044 = vmul.f32 %v1034, %v1039
    %v1045 = vmul.f32 %v1034, %v1043
    %v1046 = vadd.f32 %v1030, %v1044
    %v1047 = vadd.f32 %v1031, %v1045
    %1048 = vrot.lane.b32.xlu0 %v21, 112
    %v1049 = vpop.permute.xlu0 %1048
    %1050 = vrot.lane.b32.xlu0 %v22, 112
    %v1051 = vpop.permute.xlu0 %1050
    %vm1052 = vcmp.lt.s32.totalorder %v33, 112
    %v1053 = vsel %vm1052, %v1049, %v1051
    %v1054 = vsel %vm1052, %v1051, %v1049
    %v1055 = vlaneseq
    %v1056 = vshrl.u32 %v1055, 7
    %v1057 = vsub.s32 7, %v1056
    %v1058 = vrot.slane %v24, %v1057
    %v1059 = vlaneseq
    %v1060 = vshrl.u32 %v1059, 7
    %v1061 = vsub.s32 7, %v1060
    %v1062 = vrot.slane %v25, %v1061
    %v1063 = vmul.f32 %v1053, %v1058
    %v1064 = vmul.f32 %v1054, %v1062
    %s1065 = scalar_lea.vmem %s1, 56
    %v1066 = vld [vmem:[%s1065] sm:$0xff]
    %1068 = vset.pattern.permute.xlu0 0
    %1069 = vperm.xlu0 %1068, %v1066
    %v1070 = vpop.permute.xlu0 %1069
    %v1072 = vlaneseq
    %v1073 = vshrl.u32 %v1072, 7
    %v1074 = vsub.s32 0, %v1073
    %v1075 = vrot.slane %v1063, %v1074
    %v1076 = vlaneseq
    %v1077 = vshrl.u32 %v1076, 7
    %v1078 = vsub.s32 0, %v1077
    %v1079 = vrot.slane %v1064, %v1078
    %v1080 = vmul.f32 %v1070, %v1075
    %v1081 = vmul.f32 %v1070, %v1079
    %v1082 = vadd.f32 %v1046, %v1080
    %v1083 = vadd.f32 %v1047, %v1081
    %1084 = vset.pattern.permute.xlu0 1
    %1085 = vperm.xlu0 %1084, %v1066
    %v1086 = vpop.permute.xlu0 %1085
    %v1088 = vlaneseq
    %v1089 = vshrl.u32 %v1088, 7
    %v1090 = vsub.s32 1, %v1089
    %v1091 = vrot.slane %v1063, %v1090
    %v1092 = vlaneseq
    %v1093 = vshrl.u32 %v1092, 7
    %v1094 = vsub.s32 1, %v1093
    %v1095 = vrot.slane %v1064, %v1094
    %v1096 = vmul.f32 %v1086, %v1091
    %v1097 = vmul.f32 %v1086, %v1095
    %v1098 = vadd.f32 %v1082, %v1096
    %v1099 = vadd.f32 %v1083, %v1097
    %1100 = vset.pattern.permute.xlu0 2
    %1101 = vperm.xlu0 %1100, %v1066
    %v1102 = vpop.permute.xlu0 %1101
    %v1104 = vlaneseq
    %v1105 = vshrl.u32 %v1104, 7
    %v1106 = vsub.s32 2, %v1105
    %v1107 = vrot.slane %v1063, %v1106
    %v1108 = vlaneseq
    %v1109 = vshrl.u32 %v1108, 7
    %v1110 = vsub.s32 2, %v1109
    %v1111 = vrot.slane %v1064, %v1110
    %v1112 = vmul.f32 %v1102, %v1107
    %v1113 = vmul.f32 %v1102, %v1111
    %v1114 = vadd.f32 %v1098, %v1112
    %v1115 = vadd.f32 %v1099, %v1113
    %1116 = vset.pattern.permute.xlu0 3
    %1117 = vperm.xlu0 %1116, %v1066
    %v1118 = vpop.permute.xlu0 %1117
    %v1120 = vlaneseq
    %v1121 = vshrl.u32 %v1120, 7
    %v1122 = vsub.s32 3, %v1121
    %v1123 = vrot.slane %v1063, %v1122
    %v1124 = vlaneseq
    %v1125 = vshrl.u32 %v1124, 7
    %v1126 = vsub.s32 3, %v1125
    %v1127 = vrot.slane %v1064, %v1126
    %v1128 = vmul.f32 %v1118, %v1123
    %v1129 = vmul.f32 %v1118, %v1127
    %v1130 = vadd.f32 %v1114, %v1128
    %v1131 = vadd.f32 %v1115, %v1129
    %1132 = vset.pattern.permute.xlu0 4
    %1133 = vperm.xlu0 %1132, %v1066
    %v1134 = vpop.permute.xlu0 %1133
    %v1136 = vlaneseq
    %v1137 = vshrl.u32 %v1136, 7
    %v1138 = vsub.s32 4, %v1137
    %v1139 = vrot.slane %v1063, %v1138
    %v1140 = vlaneseq
    %v1141 = vshrl.u32 %v1140, 7
    %v1142 = vsub.s32 4, %v1141
    %v1143 = vrot.slane %v1064, %v1142
    %v1144 = vmul.f32 %v1134, %v1139
    %v1145 = vmul.f32 %v1134, %v1143
    %v1146 = vadd.f32 %v1130, %v1144
    %v1147 = vadd.f32 %v1131, %v1145
    %1148 = vset.pattern.permute.xlu0 5
    %1149 = vperm.xlu0 %1148, %v1066
    %v1150 = vpop.permute.xlu0 %1149
    %v1152 = vlaneseq
    %v1153 = vshrl.u32 %v1152, 7
    %v1154 = vsub.s32 5, %v1153
    %v1155 = vrot.slane %v1063, %v1154
    %v1156 = vlaneseq
    %v1157 = vshrl.u32 %v1156, 7
    %v1158 = vsub.s32 5, %v1157
    %v1159 = vrot.slane %v1064, %v1158
    %v1160 = vmul.f32 %v1150, %v1155
    %v1161 = vmul.f32 %v1150, %v1159
    %v1162 = vadd.f32 %v1146, %v1160
    %v1163 = vadd.f32 %v1147, %v1161
    %1164 = vset.pattern.permute.xlu0 6
    %1165 = vperm.xlu0 %1164, %v1066
    %v1166 = vpop.permute.xlu0 %1165
    %v1168 = vlaneseq
    %v1169 = vshrl.u32 %v1168, 7
    %v1170 = vsub.s32 6, %v1169
    %v1171 = vrot.slane %v1063, %v1170
    %v1172 = vlaneseq
    %v1173 = vshrl.u32 %v1172, 7
    %v1174 = vsub.s32 6, %v1173
    %v1175 = vrot.slane %v1064, %v1174
    %v1176 = vmul.f32 %v1166, %v1171
    %v1177 = vmul.f32 %v1166, %v1175
    %v1178 = vadd.f32 %v1162, %v1176
    %v1179 = vadd.f32 %v1163, %v1177
    %1180 = vset.pattern.permute.xlu0 7
    %1181 = vperm.xlu0 %1180, %v1066
    %v1182 = vpop.permute.xlu0 %1181
    %v1184 = vlaneseq
    %v1185 = vshrl.u32 %v1184, 7
    %v1186 = vsub.s32 7, %v1185
    %v1187 = vrot.slane %v1063, %v1186
    %v1188 = vlaneseq
    %v1189 = vshrl.u32 %v1188, 7
    %v1190 = vsub.s32 7, %v1189
    %v1191 = vrot.slane %v1064, %v1190
    %v1192 = vmul.f32 %v1182, %v1187
    %v1193 = vmul.f32 %v1182, %v1191
    %v1194 = vadd.f32 %v1178, %v1192
    %v1195 = vadd.f32 %v1179, %v1193
    %1196 = vrot.lane.b32.xlu0 %v21, 111
    %v1197 = vpop.permute.xlu0 %1196
    %1198 = vrot.lane.b32.xlu0 %v22, 111
    %v1199 = vpop.permute.xlu0 %1198
    %vm1200 = vcmp.lt.s32.totalorder %v33, 111
    %v1201 = vsel %vm1200, %v1197, %v1199
    %v1202 = vsel %vm1200, %v1199, %v1197
    %v1203 = vlaneseq
    %v1204 = vshrl.u32 %v1203, 7
    %v1205 = vsub.s32 0, %v1204
    %v1206 = vrot.slane %v26, %v1205
    %v1207 = vlaneseq
    %v1208 = vshrl.u32 %v1207, 7
    %v1209 = vsub.s32 0, %v1208
    %v1210 = vrot.slane %v27, %v1209
    %v1211 = vmul.f32 %v1201, %v1206
    %v1212 = vmul.f32 %v1202, %v1210
    %s1213 = scalar_lea.vmem %s1, 64
    %v1214 = vld [vmem:[%s1213] sm:$0xff]
    %1216 = vset.pattern.permute.xlu0 0
    %1217 = vperm.xlu0 %1216, %v1214
    %v1218 = vpop.permute.xlu0 %1217
    %v1220 = vlaneseq
    %v1221 = vshrl.u32 %v1220, 7
    %v1222 = vsub.s32 0, %v1221
    %v1223 = vrot.slane %v1211, %v1222
    %v1224 = vlaneseq
    %v1225 = vshrl.u32 %v1224, 7
    %v1226 = vsub.s32 0, %v1225
    %v1227 = vrot.slane %v1212, %v1226
    %v1228 = vmul.f32 %v1218, %v1223
    %v1229 = vmul.f32 %v1218, %v1227
    %v1230 = vadd.f32 %v1194, %v1228
    %v1231 = vadd.f32 %v1195, %v1229
    %1232 = vset.pattern.permute.xlu0 1
    %1233 = vperm.xlu0 %1232, %v1214
    %v1234 = vpop.permute.xlu0 %1233
    %v1236 = vlaneseq
    %v1237 = vshrl.u32 %v1236, 7
    %v1238 = vsub.s32 1, %v1237
    %v1239 = vrot.slane %v1211, %v1238
    %v1240 = vlaneseq
    %v1241 = vshrl.u32 %v1240, 7
    %v1242 = vsub.s32 1, %v1241
    %v1243 = vrot.slane %v1212, %v1242
    %v1244 = vmul.f32 %v1234, %v1239
    %v1245 = vmul.f32 %v1234, %v1243
    %v1246 = vadd.f32 %v1230, %v1244
    %v1247 = vadd.f32 %v1231, %v1245
    %1248 = vset.pattern.permute.xlu0 2
    %1249 = vperm.xlu0 %1248, %v1214
    %v1250 = vpop.permute.xlu0 %1249
    %v1252 = vlaneseq
    %v1253 = vshrl.u32 %v1252, 7
    %v1254 = vsub.s32 2, %v1253
    %v1255 = vrot.slane %v1211, %v1254
    %v1256 = vlaneseq
    %v1257 = vshrl.u32 %v1256, 7
    %v1258 = vsub.s32 2, %v1257
    %v1259 = vrot.slane %v1212, %v1258
    %v1260 = vmul.f32 %v1250, %v1255
    %v1261 = vmul.f32 %v1250, %v1259
    %v1262 = vadd.f32 %v1246, %v1260
    %v1263 = vadd.f32 %v1247, %v1261
    %1264 = vset.pattern.permute.xlu0 3
    %1265 = vperm.xlu0 %1264, %v1214
    %v1266 = vpop.permute.xlu0 %1265
    %v1268 = vlaneseq
    %v1269 = vshrl.u32 %v1268, 7
    %v1270 = vsub.s32 3, %v1269
    %v1271 = vrot.slane %v1211, %v1270
    %v1272 = vlaneseq
    %v1273 = vshrl.u32 %v1272, 7
    %v1274 = vsub.s32 3, %v1273
    %v1275 = vrot.slane %v1212, %v1274
    %v1276 = vmul.f32 %v1266, %v1271
    %v1277 = vmul.f32 %v1266, %v1275
    %v1278 = vadd.f32 %v1262, %v1276
    %v1279 = vadd.f32 %v1263, %v1277
    %1280 = vset.pattern.permute.xlu0 4
    %1281 = vperm.xlu0 %1280, %v1214
    %v1282 = vpop.permute.xlu0 %1281
    %v1284 = vlaneseq
    %v1285 = vshrl.u32 %v1284, 7
    %v1286 = vsub.s32 4, %v1285
    %v1287 = vrot.slane %v1211, %v1286
    %v1288 = vlaneseq
    %v1289 = vshrl.u32 %v1288, 7
    %v1290 = vsub.s32 4, %v1289
    %v1291 = vrot.slane %v1212, %v1290
    %v1292 = vmul.f32 %v1282, %v1287
    %v1293 = vmul.f32 %v1282, %v1291
    %v1294 = vadd.f32 %v1278, %v1292
    %v1295 = vadd.f32 %v1279, %v1293
    %1296 = vset.pattern.permute.xlu0 5
    %1297 = vperm.xlu0 %1296, %v1214
    %v1298 = vpop.permute.xlu0 %1297
    %v1300 = vlaneseq
    %v1301 = vshrl.u32 %v1300, 7
    %v1302 = vsub.s32 5, %v1301
    %v1303 = vrot.slane %v1211, %v1302
    %v1304 = vlaneseq
    %v1305 = vshrl.u32 %v1304, 7
    %v1306 = vsub.s32 5, %v1305
    %v1307 = vrot.slane %v1212, %v1306
    %v1308 = vmul.f32 %v1298, %v1303
    %v1309 = vmul.f32 %v1298, %v1307
    %v1310 = vadd.f32 %v1294, %v1308
    %v1311 = vadd.f32 %v1295, %v1309
    %1312 = vset.pattern.permute.xlu0 6
    %1313 = vperm.xlu0 %1312, %v1214
    %v1314 = vpop.permute.xlu0 %1313
    %v1316 = vlaneseq
    %v1317 = vshrl.u32 %v1316, 7
    %v1318 = vsub.s32 6, %v1317
    %v1319 = vrot.slane %v1211, %v1318
    %v1320 = vlaneseq
    %v1321 = vshrl.u32 %v1320, 7
    %v1322 = vsub.s32 6, %v1321
    %v1323 = vrot.slane %v1212, %v1322
    %v1324 = vmul.f32 %v1314, %v1319
    %v1325 = vmul.f32 %v1314, %v1323
    %v1326 = vadd.f32 %v1310, %v1324
    %v1327 = vadd.f32 %v1311, %v1325
    %1328 = vset.pattern.permute.xlu0 7
    %1329 = vperm.xlu0 %1328, %v1214
    %v1330 = vpop.permute.xlu0 %1329
    %v1332 = vlaneseq
    %v1333 = vshrl.u32 %v1332, 7
    %v1334 = vsub.s32 7, %v1333
    %v1335 = vrot.slane %v1211, %v1334
    %v1336 = vlaneseq
    %v1337 = vshrl.u32 %v1336, 7
    %v1338 = vsub.s32 7, %v1337
    %v1339 = vrot.slane %v1212, %v1338
    %v1340 = vmul.f32 %v1330, %v1335
    %v1341 = vmul.f32 %v1330, %v1339
    %v1342 = vadd.f32 %v1326, %v1340
    %v1343 = vadd.f32 %v1327, %v1341
    %1345 = vset.pattern.permute.xlu0 0
    %1346 = vperm.xlu0 %1345, %v23
    %v1347 = vpop.permute.xlu0 %1346
    %v1349 = vadd.f32 %v1342, %v1347
    %v1350 = vadd.f32 %v1343, %v1347
    %v1351 = vadd.f32 %v1349, %v1350
    %1352 = vadd.xlane.f32.xlu0 %v1351
    %v1353 = vpop.xlane.xlu0 %1352
    %v1354 = vrot.slane %v1353, 4
    %v1355 = vadd.f32 %v1353, %v1354
    %v1356 = vmul.f32 %v1355, 0.001953125
    %1358 = vset.pattern.permute.xlu0 0
    %1359 = vperm.xlu0 %1358, %v1356
    %v1360 = vpop.permute.xlu0 %1359
    %v1362 = vsub.f32 %v1349, %v1360
    %v1363 = vsub.f32 %v1350, %v1360
    %v1364 = vmul.f32 %v1362, %v1362
    %v1365 = vmul.f32 %v1363, %v1363
    %v1366 = vadd.f32 %v1364, %v1365
    %1367 = vadd.xlane.f32.xlu0 %v1366
    %v1368 = vpop.xlane.xlu0 %1367
    %v1369 = vrot.slane %v1368, 4
    %v1370 = vadd.f32 %v1368, %v1369
    %v1371 = vmul.f32 %v1370, 0.001953125
    %v1372 = vadd.f32 %v1371, 1e-05
    %v1373 = vrsqrt.pop %v1372
    %1374 = vrot.lane.b32.xlu0 %v23, 127
    %v1375 = vpop.permute.xlu0 %1374
    %v1377 = vmul.f32 %v1373, %v1375
    %1379 = vset.pattern.permute.xlu0 0
    %1380 = vperm.xlu0 %1379, %v1377
    %v1381 = vpop.permute.xlu0 %1380
    %v1383 = vmul.f32 %v1362, %v1381
    %v1384 = vmul.f32 %v1363, %v1381
    %1385 = vset.pattern.permute.xlu0 2
    %1386 = vperm.xlu0 %1385, %v23
    %v1387 = vpop.permute.xlu0 %1386
    %v1389 = vadd.f32 %v1383, %v1387
    %v1390 = vadd.f32 %v1384, %v1387
    %v1391 = vmax.f32 %v1389, 0.0
    %v1392 = vmax.f32 %v1390, 0.0
    %1393 = vrot.lane.b32.xlu0 %v1391, 17
    %v1394 = vpop.permute.xlu0 %1393
    %1395 = vrot.lane.b32.xlu0 %v1392, 17
    %v1396 = vpop.permute.xlu0 %1395
    %v1397 = vsel %vm34, %v1394, %v1396
    %v1398 = vsel %vm34, %v1396, %v1394
    %v1399 = vmul.f32 %v1398, %v40
    %v1400 = vmul.f32 %v1397, %v44
    %v1401 = vld [vmem:[%s2] sm:$0xff]
    %1403 = vset.pattern.permute.xlu0 0
    %1404 = vperm.xlu0 %1403, %v1401
    %v1405 = vpop.permute.xlu0 %1404
    %v1407 = vlaneseq
    %v1408 = vshrl.u32 %v1407, 7
    %v1409 = vsub.s32 0, %v1408
    %v1410 = vrot.slane %v1399, %v1409
    %v1411 = vlaneseq
    %v1412 = vshrl.u32 %v1411, 7
    %v1413 = vsub.s32 0, %v1412
    %v1414 = vrot.slane %v1400, %v1413
    %v1415 = vmul.f32 %v1405, %v1410
    %v1416 = vmul.f32 %v1405, %v1414
    %v1417 = vadd.f32 %v1415, 0.0
    %v1418 = vadd.f32 %v1416, 0.0
    %1419 = vset.pattern.permute.xlu0 1
    %1420 = vperm.xlu0 %1419, %v1401
    %v1421 = vpop.permute.xlu0 %1420
    %v1423 = vlaneseq
    %v1424 = vshrl.u32 %v1423, 7
    %v1425 = vsub.s32 1, %v1424
    %v1426 = vrot.slane %v1399, %v1425
    %v1427 = vlaneseq
    %v1428 = vshrl.u32 %v1427, 7
    %v1429 = vsub.s32 1, %v1428
    %v1430 = vrot.slane %v1400, %v1429
    %v1431 = vmul.f32 %v1421, %v1426
    %v1432 = vmul.f32 %v1421, %v1430
    %v1433 = vadd.f32 %v1417, %v1431
    %v1434 = vadd.f32 %v1418, %v1432
    %1435 = vset.pattern.permute.xlu0 2
    %1436 = vperm.xlu0 %1435, %v1401
    %v1437 = vpop.permute.xlu0 %1436
    %v1439 = vlaneseq
    %v1440 = vshrl.u32 %v1439, 7
    %v1441 = vsub.s32 2, %v1440
    %v1442 = vrot.slane %v1399, %v1441
    %v1443 = vlaneseq
    %v1444 = vshrl.u32 %v1443, 7
    %v1445 = vsub.s32 2, %v1444
    %v1446 = vrot.slane %v1400, %v1445
    %v1447 = vmul.f32 %v1437, %v1442
    %v1448 = vmul.f32 %v1437, %v1446
    %v1449 = vadd.f32 %v1433, %v1447
    %v1450 = vadd.f32 %v1434, %v1448
    %1451 = vset.pattern.permute.xlu0 3
    %1452 = vperm.xlu0 %1451, %v1401
    %v1453 = vpop.permute.xlu0 %1452
    %v1455 = vlaneseq
    %v1456 = vshrl.u32 %v1455, 7
    %v1457 = vsub.s32 3, %v1456
    %v1458 = vrot.slane %v1399, %v1457
    %v1459 = vlaneseq
    %v1460 = vshrl.u32 %v1459, 7
    %v1461 = vsub.s32 3, %v1460
    %v1462 = vrot.slane %v1400, %v1461
    %v1463 = vmul.f32 %v1453, %v1458
    %v1464 = vmul.f32 %v1453, %v1462
    %v1465 = vadd.f32 %v1449, %v1463
    %v1466 = vadd.f32 %v1450, %v1464
    %1467 = vset.pattern.permute.xlu0 4
    %1468 = vperm.xlu0 %1467, %v1401
    %v1469 = vpop.permute.xlu0 %1468
    %v1471 = vlaneseq
    %v1472 = vshrl.u32 %v1471, 7
    %v1473 = vsub.s32 4, %v1472
    %v1474 = vrot.slane %v1399, %v1473
    %v1475 = vlaneseq
    %v1476 = vshrl.u32 %v1475, 7
    %v1477 = vsub.s32 4, %v1476
    %v1478 = vrot.slane %v1400, %v1477
    %v1479 = vmul.f32 %v1469, %v1474
    %v1480 = vmul.f32 %v1469, %v1478
    %v1481 = vadd.f32 %v1465, %v1479
    %v1482 = vadd.f32 %v1466, %v1480
    %1483 = vset.pattern.permute.xlu0 5
    %1484 = vperm.xlu0 %1483, %v1401
    %v1485 = vpop.permute.xlu0 %1484
    %v1487 = vlaneseq
    %v1488 = vshrl.u32 %v1487, 7
    %v1489 = vsub.s32 5, %v1488
    %v1490 = vrot.slane %v1399, %v1489
    %v1491 = vlaneseq
    %v1492 = vshrl.u32 %v1491, 7
    %v1493 = vsub.s32 5, %v1492
    %v1494 = vrot.slane %v1400, %v1493
    %v1495 = vmul.f32 %v1485, %v1490
    %v1496 = vmul.f32 %v1485, %v1494
    %v1497 = vadd.f32 %v1481, %v1495
    %v1498 = vadd.f32 %v1482, %v1496
    %1499 = vset.pattern.permute.xlu0 6
    %1500 = vperm.xlu0 %1499, %v1401
    %v1501 = vpop.permute.xlu0 %1500
    %v1503 = vlaneseq
    %v1504 = vshrl.u32 %v1503, 7
    %v1505 = vsub.s32 6, %v1504
    %v1506 = vrot.slane %v1399, %v1505
    %v1507 = vlaneseq
    %v1508 = vshrl.u32 %v1507, 7
    %v1509 = vsub.s32 6, %v1508
    %v1510 = vrot.slane %v1400, %v1509
    %v1511 = vmul.f32 %v1501, %v1506
    %v1512 = vmul.f32 %v1501, %v1510
    %v1513 = vadd.f32 %v1497, %v1511
    %v1514 = vadd.f32 %v1498, %v1512
    %1515 = vset.pattern.permute.xlu0 7
    %1516 = vperm.xlu0 %1515, %v1401
    %v1517 = vpop.permute.xlu0 %1516
    %v1519 = vlaneseq
    %v1520 = vshrl.u32 %v1519, 7
    %v1521 = vsub.s32 7, %v1520
    %v1522 = vrot.slane %v1399, %v1521
    %v1523 = vlaneseq
    %v1524 = vshrl.u32 %v1523, 7
    %v1525 = vsub.s32 7, %v1524
    %v1526 = vrot.slane %v1400, %v1525
    %v1527 = vmul.f32 %v1517, %v1522
    %v1528 = vmul.f32 %v1517, %v1526
    %v1529 = vadd.f32 %v1513, %v1527
    %v1530 = vadd.f32 %v1514, %v1528
    %1531 = vrot.lane.b32.xlu0 %v1391, 16
    %v1532 = vpop.permute.xlu0 %1531
    %1533 = vrot.lane.b32.xlu0 %v1392, 16
    %v1534 = vpop.permute.xlu0 %1533
    %v1535 = vsel %vm181, %v1532, %v1534
    %v1536 = vsel %vm181, %v1534, %v1532
    %v1537 = vmul.f32 %v1536, %v187
    %v1538 = vmul.f32 %v1535, %v191
    %s1539 = scalar_lea.vmem %s2, 8
    %v1540 = vld [vmem:[%s1539] sm:$0xff]
    %1542 = vset.pattern.permute.xlu0 0
    %1543 = vperm.xlu0 %1542, %v1540
    %v1544 = vpop.permute.xlu0 %1543
    %v1546 = vlaneseq
    %v1547 = vshrl.u32 %v1546, 7
    %v1548 = vsub.s32 0, %v1547
    %v1549 = vrot.slane %v1537, %v1548
    %v1550 = vlaneseq
    %v1551 = vshrl.u32 %v1550, 7
    %v1552 = vsub.s32 0, %v1551
    %v1553 = vrot.slane %v1538, %v1552
    %v1554 = vmul.f32 %v1544, %v1549
    %v1555 = vmul.f32 %v1544, %v1553
    %v1556 = vadd.f32 %v1529, %v1554
    %v1557 = vadd.f32 %v1530, %v1555
    %1558 = vset.pattern.permute.xlu0 1
    %1559 = vperm.xlu0 %1558, %v1540
    %v1560 = vpop.permute.xlu0 %1559
    %v1562 = vlaneseq
    %v1563 = vshrl.u32 %v1562, 7
    %v1564 = vsub.s32 1, %v1563
    %v1565 = vrot.slane %v1537, %v1564
    %v1566 = vlaneseq
    %v1567 = vshrl.u32 %v1566, 7
    %v1568 = vsub.s32 1, %v1567
    %v1569 = vrot.slane %v1538, %v1568
    %v1570 = vmul.f32 %v1560, %v1565
    %v1571 = vmul.f32 %v1560, %v1569
    %v1572 = vadd.f32 %v1556, %v1570
    %v1573 = vadd.f32 %v1557, %v1571
    %1574 = vset.pattern.permute.xlu0 2
    %1575 = vperm.xlu0 %1574, %v1540
    %v1576 = vpop.permute.xlu0 %1575
    %v1578 = vlaneseq
    %v1579 = vshrl.u32 %v1578, 7
    %v1580 = vsub.s32 2, %v1579
    %v1581 = vrot.slane %v1537, %v1580
    %v1582 = vlaneseq
    %v1583 = vshrl.u32 %v1582, 7
    %v1584 = vsub.s32 2, %v1583
    %v1585 = vrot.slane %v1538, %v1584
    %v1586 = vmul.f32 %v1576, %v1581
    %v1587 = vmul.f32 %v1576, %v1585
    %v1588 = vadd.f32 %v1572, %v1586
    %v1589 = vadd.f32 %v1573, %v1587
    %1590 = vset.pattern.permute.xlu0 3
    %1591 = vperm.xlu0 %1590, %v1540
    %v1592 = vpop.permute.xlu0 %1591
    %v1594 = vlaneseq
    %v1595 = vshrl.u32 %v1594, 7
    %v1596 = vsub.s32 3, %v1595
    %v1597 = vrot.slane %v1537, %v1596
    %v1598 = vlaneseq
    %v1599 = vshrl.u32 %v1598, 7
    %v1600 = vsub.s32 3, %v1599
    %v1601 = vrot.slane %v1538, %v1600
    %v1602 = vmul.f32 %v1592, %v1597
    %v1603 = vmul.f32 %v1592, %v1601
    %v1604 = vadd.f32 %v1588, %v1602
    %v1605 = vadd.f32 %v1589, %v1603
    %1606 = vset.pattern.permute.xlu0 4
    %1607 = vperm.xlu0 %1606, %v1540
    %v1608 = vpop.permute.xlu0 %1607
    %v1610 = vlaneseq
    %v1611 = vshrl.u32 %v1610, 7
    %v1612 = vsub.s32 4, %v1611
    %v1613 = vrot.slane %v1537, %v1612
    %v1614 = vlaneseq
    %v1615 = vshrl.u32 %v1614, 7
    %v1616 = vsub.s32 4, %v1615
    %v1617 = vrot.slane %v1538, %v1616
    %v1618 = vmul.f32 %v1608, %v1613
    %v1619 = vmul.f32 %v1608, %v1617
    %v1620 = vadd.f32 %v1604, %v1618
    %v1621 = vadd.f32 %v1605, %v1619
    %1622 = vset.pattern.permute.xlu0 5
    %1623 = vperm.xlu0 %1622, %v1540
    %v1624 = vpop.permute.xlu0 %1623
    %v1626 = vlaneseq
    %v1627 = vshrl.u32 %v1626, 7
    %v1628 = vsub.s32 5, %v1627
    %v1629 = vrot.slane %v1537, %v1628
    %v1630 = vlaneseq
    %v1631 = vshrl.u32 %v1630, 7
    %v1632 = vsub.s32 5, %v1631
    %v1633 = vrot.slane %v1538, %v1632
    %v1634 = vmul.f32 %v1624, %v1629
    %v1635 = vmul.f32 %v1624, %v1633
    %v1636 = vadd.f32 %v1620, %v1634
    %v1637 = vadd.f32 %v1621, %v1635
    %1638 = vset.pattern.permute.xlu0 6
    %1639 = vperm.xlu0 %1638, %v1540
    %v1640 = vpop.permute.xlu0 %1639
    %v1642 = vlaneseq
    %v1643 = vshrl.u32 %v1642, 7
    %v1644 = vsub.s32 6, %v1643
    %v1645 = vrot.slane %v1537, %v1644
    %v1646 = vlaneseq
    %v1647 = vshrl.u32 %v1646, 7
    %v1648 = vsub.s32 6, %v1647
    %v1649 = vrot.slane %v1538, %v1648
    %v1650 = vmul.f32 %v1640, %v1645
    %v1651 = vmul.f32 %v1640, %v1649
    %v1652 = vadd.f32 %v1636, %v1650
    %v1653 = vadd.f32 %v1637, %v1651
    %1654 = vset.pattern.permute.xlu0 7
    %1655 = vperm.xlu0 %1654, %v1540
    %v1656 = vpop.permute.xlu0 %1655
    %v1658 = vlaneseq
    %v1659 = vshrl.u32 %v1658, 7
    %v1660 = vsub.s32 7, %v1659
    %v1661 = vrot.slane %v1537, %v1660
    %v1662 = vlaneseq
    %v1663 = vshrl.u32 %v1662, 7
    %v1664 = vsub.s32 7, %v1663
    %v1665 = vrot.slane %v1538, %v1664
    %v1666 = vmul.f32 %v1656, %v1661
    %v1667 = vmul.f32 %v1656, %v1665
    %v1668 = vadd.f32 %v1652, %v1666
    %v1669 = vadd.f32 %v1653, %v1667
    %1670 = vrot.lane.b32.xlu0 %v1391, 15
    %v1671 = vpop.permute.xlu0 %1670
    %1672 = vrot.lane.b32.xlu0 %v1392, 15
    %v1673 = vpop.permute.xlu0 %1672
    %v1674 = vsel %vm329, %v1671, %v1673
    %v1675 = vsel %vm329, %v1673, %v1671
    %v1676 = vmul.f32 %v1675, %v335
    %v1677 = vmul.f32 %v1674, %v339
    %s1678 = scalar_lea.vmem %s2, 16
    %v1679 = vld [vmem:[%s1678] sm:$0xff]
    %1681 = vset.pattern.permute.xlu0 0
    %1682 = vperm.xlu0 %1681, %v1679
    %v1683 = vpop.permute.xlu0 %1682
    %v1685 = vlaneseq
    %v1686 = vshrl.u32 %v1685, 7
    %v1687 = vsub.s32 0, %v1686
    %v1688 = vrot.slane %v1676, %v1687
    %v1689 = vlaneseq
    %v1690 = vshrl.u32 %v1689, 7
    %v1691 = vsub.s32 0, %v1690
    %v1692 = vrot.slane %v1677, %v1691
    %v1693 = vmul.f32 %v1683, %v1688
    %v1694 = vmul.f32 %v1683, %v1692
    %v1695 = vadd.f32 %v1668, %v1693
    %v1696 = vadd.f32 %v1669, %v1694
    %1697 = vset.pattern.permute.xlu0 1
    %1698 = vperm.xlu0 %1697, %v1679
    %v1699 = vpop.permute.xlu0 %1698
    %v1701 = vlaneseq
    %v1702 = vshrl.u32 %v1701, 7
    %v1703 = vsub.s32 1, %v1702
    %v1704 = vrot.slane %v1676, %v1703
    %v1705 = vlaneseq
    %v1706 = vshrl.u32 %v1705, 7
    %v1707 = vsub.s32 1, %v1706
    %v1708 = vrot.slane %v1677, %v1707
    %v1709 = vmul.f32 %v1699, %v1704
    %v1710 = vmul.f32 %v1699, %v1708
    %v1711 = vadd.f32 %v1695, %v1709
    %v1712 = vadd.f32 %v1696, %v1710
    %1713 = vset.pattern.permute.xlu0 2
    %1714 = vperm.xlu0 %1713, %v1679
    %v1715 = vpop.permute.xlu0 %1714
    %v1717 = vlaneseq
    %v1718 = vshrl.u32 %v1717, 7
    %v1719 = vsub.s32 2, %v1718
    %v1720 = vrot.slane %v1676, %v1719
    %v1721 = vlaneseq
    %v1722 = vshrl.u32 %v1721, 7
    %v1723 = vsub.s32 2, %v1722
    %v1724 = vrot.slane %v1677, %v1723
    %v1725 = vmul.f32 %v1715, %v1720
    %v1726 = vmul.f32 %v1715, %v1724
    %v1727 = vadd.f32 %v1711, %v1725
    %v1728 = vadd.f32 %v1712, %v1726
    %1729 = vset.pattern.permute.xlu0 3
    %1730 = vperm.xlu0 %1729, %v1679
    %v1731 = vpop.permute.xlu0 %1730
    %v1733 = vlaneseq
    %v1734 = vshrl.u32 %v1733, 7
    %v1735 = vsub.s32 3, %v1734
    %v1736 = vrot.slane %v1676, %v1735
    %v1737 = vlaneseq
    %v1738 = vshrl.u32 %v1737, 7
    %v1739 = vsub.s32 3, %v1738
    %v1740 = vrot.slane %v1677, %v1739
    %v1741 = vmul.f32 %v1731, %v1736
    %v1742 = vmul.f32 %v1731, %v1740
    %v1743 = vadd.f32 %v1727, %v1741
    %v1744 = vadd.f32 %v1728, %v1742
    %1745 = vset.pattern.permute.xlu0 4
    %1746 = vperm.xlu0 %1745, %v1679
    %v1747 = vpop.permute.xlu0 %1746
    %v1749 = vlaneseq
    %v1750 = vshrl.u32 %v1749, 7
    %v1751 = vsub.s32 4, %v1750
    %v1752 = vrot.slane %v1676, %v1751
    %v1753 = vlaneseq
    %v1754 = vshrl.u32 %v1753, 7
    %v1755 = vsub.s32 4, %v1754
    %v1756 = vrot.slane %v1677, %v1755
    %v1757 = vmul.f32 %v1747, %v1752
    %v1758 = vmul.f32 %v1747, %v1756
    %v1759 = vadd.f32 %v1743, %v1757
    %v1760 = vadd.f32 %v1744, %v1758
    %1761 = vset.pattern.permute.xlu0 5
    %1762 = vperm.xlu0 %1761, %v1679
    %v1763 = vpop.permute.xlu0 %1762
    %v1765 = vlaneseq
    %v1766 = vshrl.u32 %v1765, 7
    %v1767 = vsub.s32 5, %v1766
    %v1768 = vrot.slane %v1676, %v1767
    %v1769 = vlaneseq
    %v1770 = vshrl.u32 %v1769, 7
    %v1771 = vsub.s32 5, %v1770
    %v1772 = vrot.slane %v1677, %v1771
    %v1773 = vmul.f32 %v1763, %v1768
    %v1774 = vmul.f32 %v1763, %v1772
    %v1775 = vadd.f32 %v1759, %v1773
    %v1776 = vadd.f32 %v1760, %v1774
    %1777 = vset.pattern.permute.xlu0 6
    %1778 = vperm.xlu0 %1777, %v1679
    %v1779 = vpop.permute.xlu0 %1778
    %v1781 = vlaneseq
    %v1782 = vshrl.u32 %v1781, 7
    %v1783 = vsub.s32 6, %v1782
    %v1784 = vrot.slane %v1676, %v1783
    %v1785 = vlaneseq
    %v1786 = vshrl.u32 %v1785, 7
    %v1787 = vsub.s32 6, %v1786
    %v1788 = vrot.slane %v1677, %v1787
    %v1789 = vmul.f32 %v1779, %v1784
    %v1790 = vmul.f32 %v1779, %v1788
    %v1791 = vadd.f32 %v1775, %v1789
    %v1792 = vadd.f32 %v1776, %v1790
    %1793 = vset.pattern.permute.xlu0 7
    %1794 = vperm.xlu0 %1793, %v1679
    %v1795 = vpop.permute.xlu0 %1794
    %v1797 = vlaneseq
    %v1798 = vshrl.u32 %v1797, 7
    %v1799 = vsub.s32 7, %v1798
    %v1800 = vrot.slane %v1676, %v1799
    %v1801 = vlaneseq
    %v1802 = vshrl.u32 %v1801, 7
    %v1803 = vsub.s32 7, %v1802
    %v1804 = vrot.slane %v1677, %v1803
    %v1805 = vmul.f32 %v1795, %v1800
    %v1806 = vmul.f32 %v1795, %v1804
    %v1807 = vadd.f32 %v1791, %v1805
    %v1808 = vadd.f32 %v1792, %v1806
    %1809 = vrot.lane.b32.xlu0 %v1391, 1
    %v1810 = vpop.permute.xlu0 %1809
    %1811 = vrot.lane.b32.xlu0 %v1392, 1
    %v1812 = vpop.permute.xlu0 %1811
    %v1813 = vsel %vm477, %v1810, %v1812
    %v1814 = vsel %vm477, %v1812, %v1810
    %v1815 = vmul.f32 %v1814, %v483
    %v1816 = vmul.f32 %v1813, %v487
    %s1817 = scalar_lea.vmem %s2, 24
    %v1818 = vld [vmem:[%s1817] sm:$0xff]
    %1820 = vset.pattern.permute.xlu0 0
    %1821 = vperm.xlu0 %1820, %v1818
    %v1822 = vpop.permute.xlu0 %1821
    %v1824 = vlaneseq
    %v1825 = vshrl.u32 %v1824, 7
    %v1826 = vsub.s32 0, %v1825
    %v1827 = vrot.slane %v1815, %v1826
    %v1828 = vlaneseq
    %v1829 = vshrl.u32 %v1828, 7
    %v1830 = vsub.s32 0, %v1829
    %v1831 = vrot.slane %v1816, %v1830
    %v1832 = vmul.f32 %v1822, %v1827
    %v1833 = vmul.f32 %v1822, %v1831
    %v1834 = vadd.f32 %v1807, %v1832
    %v1835 = vadd.f32 %v1808, %v1833
    %1836 = vset.pattern.permute.xlu0 1
    %1837 = vperm.xlu0 %1836, %v1818
    %v1838 = vpop.permute.xlu0 %1837
    %v1840 = vlaneseq
    %v1841 = vshrl.u32 %v1840, 7
    %v1842 = vsub.s32 1, %v1841
    %v1843 = vrot.slane %v1815, %v1842
    %v1844 = vlaneseq
    %v1845 = vshrl.u32 %v1844, 7
    %v1846 = vsub.s32 1, %v1845
    %v1847 = vrot.slane %v1816, %v1846
    %v1848 = vmul.f32 %v1838, %v1843
    %v1849 = vmul.f32 %v1838, %v1847
    %v1850 = vadd.f32 %v1834, %v1848
    %v1851 = vadd.f32 %v1835, %v1849
    %1852 = vset.pattern.permute.xlu0 2
    %1853 = vperm.xlu0 %1852, %v1818
    %v1854 = vpop.permute.xlu0 %1853
    %v1856 = vlaneseq
    %v1857 = vshrl.u32 %v1856, 7
    %v1858 = vsub.s32 2, %v1857
    %v1859 = vrot.slane %v1815, %v1858
    %v1860 = vlaneseq
    %v1861 = vshrl.u32 %v1860, 7
    %v1862 = vsub.s32 2, %v1861
    %v1863 = vrot.slane %v1816, %v1862
    %v1864 = vmul.f32 %v1854, %v1859
    %v1865 = vmul.f32 %v1854, %v1863
    %v1866 = vadd.f32 %v1850, %v1864
    %v1867 = vadd.f32 %v1851, %v1865
    %1868 = vset.pattern.permute.xlu0 3
    %1869 = vperm.xlu0 %1868, %v1818
    %v1870 = vpop.permute.xlu0 %1869
    %v1872 = vlaneseq
    %v1873 = vshrl.u32 %v1872, 7
    %v1874 = vsub.s32 3, %v1873
    %v1875 = vrot.slane %v1815, %v1874
    %v1876 = vlaneseq
    %v1877 = vshrl.u32 %v1876, 7
    %v1878 = vsub.s32 3, %v1877
    %v1879 = vrot.slane %v1816, %v1878
    %v1880 = vmul.f32 %v1870, %v1875
    %v1881 = vmul.f32 %v1870, %v1879
    %v1882 = vadd.f32 %v1866, %v1880
    %v1883 = vadd.f32 %v1867, %v1881
    %1884 = vset.pattern.permute.xlu0 4
    %1885 = vperm.xlu0 %1884, %v1818
    %v1886 = vpop.permute.xlu0 %1885
    %v1888 = vlaneseq
    %v1889 = vshrl.u32 %v1888, 7
    %v1890 = vsub.s32 4, %v1889
    %v1891 = vrot.slane %v1815, %v1890
    %v1892 = vlaneseq
    %v1893 = vshrl.u32 %v1892, 7
    %v1894 = vsub.s32 4, %v1893
    %v1895 = vrot.slane %v1816, %v1894
    %v1896 = vmul.f32 %v1886, %v1891
    %v1897 = vmul.f32 %v1886, %v1895
    %v1898 = vadd.f32 %v1882, %v1896
    %v1899 = vadd.f32 %v1883, %v1897
    %1900 = vset.pattern.permute.xlu0 5
    %1901 = vperm.xlu0 %1900, %v1818
    %v1902 = vpop.permute.xlu0 %1901
    %v1904 = vlaneseq
    %v1905 = vshrl.u32 %v1904, 7
    %v1906 = vsub.s32 5, %v1905
    %v1907 = vrot.slane %v1815, %v1906
    %v1908 = vlaneseq
    %v1909 = vshrl.u32 %v1908, 7
    %v1910 = vsub.s32 5, %v1909
    %v1911 = vrot.slane %v1816, %v1910
    %v1912 = vmul.f32 %v1902, %v1907
    %v1913 = vmul.f32 %v1902, %v1911
    %v1914 = vadd.f32 %v1898, %v1912
    %v1915 = vadd.f32 %v1899, %v1913
    %1916 = vset.pattern.permute.xlu0 6
    %1917 = vperm.xlu0 %1916, %v1818
    %v1918 = vpop.permute.xlu0 %1917
    %v1920 = vlaneseq
    %v1921 = vshrl.u32 %v1920, 7
    %v1922 = vsub.s32 6, %v1921
    %v1923 = vrot.slane %v1815, %v1922
    %v1924 = vlaneseq
    %v1925 = vshrl.u32 %v1924, 7
    %v1926 = vsub.s32 6, %v1925
    %v1927 = vrot.slane %v1816, %v1926
    %v1928 = vmul.f32 %v1918, %v1923
    %v1929 = vmul.f32 %v1918, %v1927
    %v1930 = vadd.f32 %v1914, %v1928
    %v1931 = vadd.f32 %v1915, %v1929
    %1932 = vset.pattern.permute.xlu0 7
    %1933 = vperm.xlu0 %1932, %v1818
    %v1934 = vpop.permute.xlu0 %1933
    %v1936 = vlaneseq
    %v1937 = vshrl.u32 %v1936, 7
    %v1938 = vsub.s32 7, %v1937
    %v1939 = vrot.slane %v1815, %v1938
    %v1940 = vlaneseq
    %v1941 = vshrl.u32 %v1940, 7
    %v1942 = vsub.s32 7, %v1941
    %v1943 = vrot.slane %v1816, %v1942
    %v1944 = vmul.f32 %v1934, %v1939
    %v1945 = vmul.f32 %v1934, %v1943
    %v1946 = vadd.f32 %v1930, %v1944
    %v1947 = vadd.f32 %v1931, %v1945
    %s1948 = scalar_lea.vmem %s2, 32
    %v1949 = vld [vmem:[%s1948] sm:$0xff]
    %1951 = vset.pattern.permute.xlu0 0
    %1952 = vperm.xlu0 %1951, %v1949
    %v1953 = vpop.permute.xlu0 %1952
    %v1955 = vlaneseq
    %v1956 = vshrl.u32 %v1955, 7
    %v1957 = vsub.s32 0, %v1956
    %v1958 = vrot.slane %v1391, %v1957
    %v1959 = vlaneseq
    %v1960 = vshrl.u32 %v1959, 7
    %v1961 = vsub.s32 0, %v1960
    %v1962 = vrot.slane %v1392, %v1961
    %v1963 = vmul.f32 %v1953, %v1958
    %v1964 = vmul.f32 %v1953, %v1962
    %v1965 = vadd.f32 %v1946, %v1963
    %v1966 = vadd.f32 %v1947, %v1964
    %1967 = vset.pattern.permute.xlu0 1
    %1968 = vperm.xlu0 %1967, %v1949
    %v1969 = vpop.permute.xlu0 %1968
    %v1971 = vlaneseq
    %v1972 = vshrl.u32 %v1971, 7
    %v1973 = vsub.s32 1, %v1972
    %v1974 = vrot.slane %v1391, %v1973
    %v1975 = vlaneseq
    %v1976 = vshrl.u32 %v1975, 7
    %v1977 = vsub.s32 1, %v1976
    %v1978 = vrot.slane %v1392, %v1977
    %v1979 = vmul.f32 %v1969, %v1974
    %v1980 = vmul.f32 %v1969, %v1978
    %v1981 = vadd.f32 %v1965, %v1979
    %v1982 = vadd.f32 %v1966, %v1980
    %1983 = vset.pattern.permute.xlu0 2
    %1984 = vperm.xlu0 %1983, %v1949
    %v1985 = vpop.permute.xlu0 %1984
    %v1987 = vlaneseq
    %v1988 = vshrl.u32 %v1987, 7
    %v1989 = vsub.s32 2, %v1988
    %v1990 = vrot.slane %v1391, %v1989
    %v1991 = vlaneseq
    %v1992 = vshrl.u32 %v1991, 7
    %v1993 = vsub.s32 2, %v1992
    %v1994 = vrot.slane %v1392, %v1993
    %v1995 = vmul.f32 %v1985, %v1990
    %v1996 = vmul.f32 %v1985, %v1994
    %v1997 = vadd.f32 %v1981, %v1995
    %v1998 = vadd.f32 %v1982, %v1996
    %1999 = vset.pattern.permute.xlu0 3
    %2000 = vperm.xlu0 %1999, %v1949
    %v2001 = vpop.permute.xlu0 %2000
    %v2003 = vlaneseq
    %v2004 = vshrl.u32 %v2003, 7
    %v2005 = vsub.s32 3, %v2004
    %v2006 = vrot.slane %v1391, %v2005
    %v2007 = vlaneseq
    %v2008 = vshrl.u32 %v2007, 7
    %v2009 = vsub.s32 3, %v2008
    %v2010 = vrot.slane %v1392, %v2009
    %v2011 = vmul.f32 %v2001, %v2006
    %v2012 = vmul.f32 %v2001, %v2010
    %v2013 = vadd.f32 %v1997, %v2011
    %v2014 = vadd.f32 %v1998, %v2012
    %2015 = vset.pattern.permute.xlu0 4
    %2016 = vperm.xlu0 %2015, %v1949
    %v2017 = vpop.permute.xlu0 %2016
    %v2019 = vlaneseq
    %v2020 = vshrl.u32 %v2019, 7
    %v2021 = vsub.s32 4, %v2020
    %v2022 = vrot.slane %v1391, %v2021
    %v2023 = vlaneseq
    %v2024 = vshrl.u32 %v2023, 7
    %v2025 = vsub.s32 4, %v2024
    %v2026 = vrot.slane %v1392, %v2025
    %v2027 = vmul.f32 %v2017, %v2022
    %v2028 = vmul.f32 %v2017, %v2026
    %v2029 = vadd.f32 %v2013, %v2027
    %v2030 = vadd.f32 %v2014, %v2028
    %2031 = vset.pattern.permute.xlu0 5
    %2032 = vperm.xlu0 %2031, %v1949
    %v2033 = vpop.permute.xlu0 %2032
    %v2035 = vlaneseq
    %v2036 = vshrl.u32 %v2035, 7
    %v2037 = vsub.s32 5, %v2036
    %v2038 = vrot.slane %v1391, %v2037
    %v2039 = vlaneseq
    %v2040 = vshrl.u32 %v2039, 7
    %v2041 = vsub.s32 5, %v2040
    %v2042 = vrot.slane %v1392, %v2041
    %v2043 = vmul.f32 %v2033, %v2038
    %v2044 = vmul.f32 %v2033, %v2042
    %v2045 = vadd.f32 %v2029, %v2043
    %v2046 = vadd.f32 %v2030, %v2044
    %2047 = vset.pattern.permute.xlu0 6
    %2048 = vperm.xlu0 %2047, %v1949
    %v2049 = vpop.permute.xlu0 %2048
    %v2051 = vlaneseq
    %v2052 = vshrl.u32 %v2051, 7
    %v2053 = vsub.s32 6, %v2052
    %v2054 = vrot.slane %v1391, %v2053
    %v2055 = vlaneseq
    %v2056 = vshrl.u32 %v2055, 7
    %v2057 = vsub.s32 6, %v2056
    %v2058 = vrot.slane %v1392, %v2057
    %v2059 = vmul.f32 %v2049, %v2054
    %v2060 = vmul.f32 %v2049, %v2058
    %v2061 = vadd.f32 %v2045, %v2059
    %v2062 = vadd.f32 %v2046, %v2060
    %2063 = vset.pattern.permute.xlu0 7
    %2064 = vperm.xlu0 %2063, %v1949
    %v2065 = vpop.permute.xlu0 %2064
    %v2067 = vlaneseq
    %v2068 = vshrl.u32 %v2067, 7
    %v2069 = vsub.s32 7, %v2068
    %v2070 = vrot.slane %v1391, %v2069
    %v2071 = vlaneseq
    %v2072 = vshrl.u32 %v2071, 7
    %v2073 = vsub.s32 7, %v2072
    %v2074 = vrot.slane %v1392, %v2073
    %v2075 = vmul.f32 %v2065, %v2070
    %v2076 = vmul.f32 %v2065, %v2074
    %v2077 = vadd.f32 %v2061, %v2075
    %v2078 = vadd.f32 %v2062, %v2076
    %2079 = vrot.lane.b32.xlu0 %v1391, 127
    %v2080 = vpop.permute.xlu0 %2079
    %2081 = vrot.lane.b32.xlu0 %v1392, 127
    %v2082 = vpop.permute.xlu0 %2081
    %v2083 = vsel %vm756, %v2080, %v2082
    %v2084 = vsel %vm756, %v2082, %v2080
    %v2085 = vmul.f32 %v2083, %v762
    %v2086 = vmul.f32 %v2084, %v766
    %s2087 = scalar_lea.vmem %s2, 40
    %v2088 = vld [vmem:[%s2087] sm:$0xff]
    %2090 = vset.pattern.permute.xlu0 0
    %2091 = vperm.xlu0 %2090, %v2088
    %v2092 = vpop.permute.xlu0 %2091
    %v2094 = vlaneseq
    %v2095 = vshrl.u32 %v2094, 7
    %v2096 = vsub.s32 0, %v2095
    %v2097 = vrot.slane %v2085, %v2096
    %v2098 = vlaneseq
    %v2099 = vshrl.u32 %v2098, 7
    %v2100 = vsub.s32 0, %v2099
    %v2101 = vrot.slane %v2086, %v2100
    %v2102 = vmul.f32 %v2092, %v2097
    %v2103 = vmul.f32 %v2092, %v2101
    %v2104 = vadd.f32 %v2077, %v2102
    %v2105 = vadd.f32 %v2078, %v2103
    %2106 = vset.pattern.permute.xlu0 1
    %2107 = vperm.xlu0 %2106, %v2088
    %v2108 = vpop.permute.xlu0 %2107
    %v2110 = vlaneseq
    %v2111 = vshrl.u32 %v2110, 7
    %v2112 = vsub.s32 1, %v2111
    %v2113 = vrot.slane %v2085, %v2112
    %v2114 = vlaneseq
    %v2115 = vshrl.u32 %v2114, 7
    %v2116 = vsub.s32 1, %v2115
    %v2117 = vrot.slane %v2086, %v2116
    %v2118 = vmul.f32 %v2108, %v2113
    %v2119 = vmul.f32 %v2108, %v2117
    %v2120 = vadd.f32 %v2104, %v2118
    %v2121 = vadd.f32 %v2105, %v2119
    %2122 = vset.pattern.permute.xlu0 2
    %2123 = vperm.xlu0 %2122, %v2088
    %v2124 = vpop.permute.xlu0 %2123
    %v2126 = vlaneseq
    %v2127 = vshrl.u32 %v2126, 7
    %v2128 = vsub.s32 2, %v2127
    %v2129 = vrot.slane %v2085, %v2128
    %v2130 = vlaneseq
    %v2131 = vshrl.u32 %v2130, 7
    %v2132 = vsub.s32 2, %v2131
    %v2133 = vrot.slane %v2086, %v2132
    %v2134 = vmul.f32 %v2124, %v2129
    %v2135 = vmul.f32 %v2124, %v2133
    %v2136 = vadd.f32 %v2120, %v2134
    %v2137 = vadd.f32 %v2121, %v2135
    %2138 = vset.pattern.permute.xlu0 3
    %2139 = vperm.xlu0 %2138, %v2088
    %v2140 = vpop.permute.xlu0 %2139
    %v2142 = vlaneseq
    %v2143 = vshrl.u32 %v2142, 7
    %v2144 = vsub.s32 3, %v2143
    %v2145 = vrot.slane %v2085, %v2144
    %v2146 = vlaneseq
    %v2147 = vshrl.u32 %v2146, 7
    %v2148 = vsub.s32 3, %v2147
    %v2149 = vrot.slane %v2086, %v2148
    %v2150 = vmul.f32 %v2140, %v2145
    %v2151 = vmul.f32 %v2140, %v2149
    %v2152 = vadd.f32 %v2136, %v2150
    %v2153 = vadd.f32 %v2137, %v2151
    %2154 = vset.pattern.permute.xlu0 4
    %2155 = vperm.xlu0 %2154, %v2088
    %v2156 = vpop.permute.xlu0 %2155
    %v2158 = vlaneseq
    %v2159 = vshrl.u32 %v2158, 7
    %v2160 = vsub.s32 4, %v2159
    %v2161 = vrot.slane %v2085, %v2160
    %v2162 = vlaneseq
    %v2163 = vshrl.u32 %v2162, 7
    %v2164 = vsub.s32 4, %v2163
    %v2165 = vrot.slane %v2086, %v2164
    %v2166 = vmul.f32 %v2156, %v2161
    %v2167 = vmul.f32 %v2156, %v2165
    %v2168 = vadd.f32 %v2152, %v2166
    %v2169 = vadd.f32 %v2153, %v2167
    %2170 = vset.pattern.permute.xlu0 5
    %2171 = vperm.xlu0 %2170, %v2088
    %v2172 = vpop.permute.xlu0 %2171
    %v2174 = vlaneseq
    %v2175 = vshrl.u32 %v2174, 7
    %v2176 = vsub.s32 5, %v2175
    %v2177 = vrot.slane %v2085, %v2176
    %v2178 = vlaneseq
    %v2179 = vshrl.u32 %v2178, 7
    %v2180 = vsub.s32 5, %v2179
    %v2181 = vrot.slane %v2086, %v2180
    %v2182 = vmul.f32 %v2172, %v2177
    %v2183 = vmul.f32 %v2172, %v2181
    %v2184 = vadd.f32 %v2168, %v2182
    %v2185 = vadd.f32 %v2169, %v2183
    %2186 = vset.pattern.permute.xlu0 6
    %2187 = vperm.xlu0 %2186, %v2088
    %v2188 = vpop.permute.xlu0 %2187
    %v2190 = vlaneseq
    %v2191 = vshrl.u32 %v2190, 7
    %v2192 = vsub.s32 6, %v2191
    %v2193 = vrot.slane %v2085, %v2192
    %v2194 = vlaneseq
    %v2195 = vshrl.u32 %v2194, 7
    %v2196 = vsub.s32 6, %v2195
    %v2197 = vrot.slane %v2086, %v2196
    %v2198 = vmul.f32 %v2188, %v2193
    %v2199 = vmul.f32 %v2188, %v2197
    %v2200 = vadd.f32 %v2184, %v2198
    %v2201 = vadd.f32 %v2185, %v2199
    %2202 = vset.pattern.permute.xlu0 7
    %2203 = vperm.xlu0 %2202, %v2088
    %v2204 = vpop.permute.xlu0 %2203
    %v2206 = vlaneseq
    %v2207 = vshrl.u32 %v2206, 7
    %v2208 = vsub.s32 7, %v2207
    %v2209 = vrot.slane %v2085, %v2208
    %v2210 = vlaneseq
    %v2211 = vshrl.u32 %v2210, 7
    %v2212 = vsub.s32 7, %v2211
    %v2213 = vrot.slane %v2086, %v2212
    %v2214 = vmul.f32 %v2204, %v2209
    %v2215 = vmul.f32 %v2204, %v2213
    %v2216 = vadd.f32 %v2200, %v2214
    %v2217 = vadd.f32 %v2201, %v2215
    %2218 = vrot.lane.b32.xlu0 %v1391, 113
    %v2219 = vpop.permute.xlu0 %2218
    %2220 = vrot.lane.b32.xlu0 %v1392, 113
    %v2221 = vpop.permute.xlu0 %2220
    %v2222 = vsel %vm904, %v2219, %v2221
    %v2223 = vsel %vm904, %v2221, %v2219
    %v2224 = vmul.f32 %v2222, %v910
    %v2225 = vmul.f32 %v2223, %v914
    %s2226 = scalar_lea.vmem %s2, 48
    %v2227 = vld [vmem:[%s2226] sm:$0xff]
    %2229 = vset.pattern.permute.xlu0 0
    %2230 = vperm.xlu0 %2229, %v2227
    %v2231 = vpop.permute.xlu0 %2230
    %v2233 = vlaneseq
    %v2234 = vshrl.u32 %v2233, 7
    %v2235 = vsub.s32 0, %v2234
    %v2236 = vrot.slane %v2224, %v2235
    %v2237 = vlaneseq
    %v2238 = vshrl.u32 %v2237, 7
    %v2239 = vsub.s32 0, %v2238
    %v2240 = vrot.slane %v2225, %v2239
    %v2241 = vmul.f32 %v2231, %v2236
    %v2242 = vmul.f32 %v2231, %v2240
    %v2243 = vadd.f32 %v2216, %v2241
    %v2244 = vadd.f32 %v2217, %v2242
    %2245 = vset.pattern.permute.xlu0 1
    %2246 = vperm.xlu0 %2245, %v2227
    %v2247 = vpop.permute.xlu0 %2246
    %v2249 = vlaneseq
    %v2250 = vshrl.u32 %v2249, 7
    %v2251 = vsub.s32 1, %v2250
    %v2252 = vrot.slane %v2224, %v2251
    %v2253 = vlaneseq
    %v2254 = vshrl.u32 %v2253, 7
    %v2255 = vsub.s32 1, %v2254
    %v2256 = vrot.slane %v2225, %v2255
    %v2257 = vmul.f32 %v2247, %v2252
    %v2258 = vmul.f32 %v2247, %v2256
    %v2259 = vadd.f32 %v2243, %v2257
    %v2260 = vadd.f32 %v2244, %v2258
    %2261 = vset.pattern.permute.xlu0 2
    %2262 = vperm.xlu0 %2261, %v2227
    %v2263 = vpop.permute.xlu0 %2262
    %v2265 = vlaneseq
    %v2266 = vshrl.u32 %v2265, 7
    %v2267 = vsub.s32 2, %v2266
    %v2268 = vrot.slane %v2224, %v2267
    %v2269 = vlaneseq
    %v2270 = vshrl.u32 %v2269, 7
    %v2271 = vsub.s32 2, %v2270
    %v2272 = vrot.slane %v2225, %v2271
    %v2273 = vmul.f32 %v2263, %v2268
    %v2274 = vmul.f32 %v2263, %v2272
    %v2275 = vadd.f32 %v2259, %v2273
    %v2276 = vadd.f32 %v2260, %v2274
    %2277 = vset.pattern.permute.xlu0 3
    %2278 = vperm.xlu0 %2277, %v2227
    %v2279 = vpop.permute.xlu0 %2278
    %v2281 = vlaneseq
    %v2282 = vshrl.u32 %v2281, 7
    %v2283 = vsub.s32 3, %v2282
    %v2284 = vrot.slane %v2224, %v2283
    %v2285 = vlaneseq
    %v2286 = vshrl.u32 %v2285, 7
    %v2287 = vsub.s32 3, %v2286
    %v2288 = vrot.slane %v2225, %v2287
    %v2289 = vmul.f32 %v2279, %v2284
    %v2290 = vmul.f32 %v2279, %v2288
    %v2291 = vadd.f32 %v2275, %v2289
    %v2292 = vadd.f32 %v2276, %v2290
    %2293 = vset.pattern.permute.xlu0 4
    %2294 = vperm.xlu0 %2293, %v2227
    %v2295 = vpop.permute.xlu0 %2294
    %v2297 = vlaneseq
    %v2298 = vshrl.u32 %v2297, 7
    %v2299 = vsub.s32 4, %v2298
    %v2300 = vrot.slane %v2224, %v2299
    %v2301 = vlaneseq
    %v2302 = vshrl.u32 %v2301, 7
    %v2303 = vsub.s32 4, %v2302
    %v2304 = vrot.slane %v2225, %v2303
    %v2305 = vmul.f32 %v2295, %v2300
    %v2306 = vmul.f32 %v2295, %v2304
    %v2307 = vadd.f32 %v2291, %v2305
    %v2308 = vadd.f32 %v2292, %v2306
    %2309 = vset.pattern.permute.xlu0 5
    %2310 = vperm.xlu0 %2309, %v2227
    %v2311 = vpop.permute.xlu0 %2310
    %v2313 = vlaneseq
    %v2314 = vshrl.u32 %v2313, 7
    %v2315 = vsub.s32 5, %v2314
    %v2316 = vrot.slane %v2224, %v2315
    %v2317 = vlaneseq
    %v2318 = vshrl.u32 %v2317, 7
    %v2319 = vsub.s32 5, %v2318
    %v2320 = vrot.slane %v2225, %v2319
    %v2321 = vmul.f32 %v2311, %v2316
    %v2322 = vmul.f32 %v2311, %v2320
    %v2323 = vadd.f32 %v2307, %v2321
    %v2324 = vadd.f32 %v2308, %v2322
    %2325 = vset.pattern.permute.xlu0 6
    %2326 = vperm.xlu0 %2325, %v2227
    %v2327 = vpop.permute.xlu0 %2326
    %v2329 = vlaneseq
    %v2330 = vshrl.u32 %v2329, 7
    %v2331 = vsub.s32 6, %v2330
    %v2332 = vrot.slane %v2224, %v2331
    %v2333 = vlaneseq
    %v2334 = vshrl.u32 %v2333, 7
    %v2335 = vsub.s32 6, %v2334
    %v2336 = vrot.slane %v2225, %v2335
    %v2337 = vmul.f32 %v2327, %v2332
    %v2338 = vmul.f32 %v2327, %v2336
    %v2339 = vadd.f32 %v2323, %v2337
    %v2340 = vadd.f32 %v2324, %v2338
    %2341 = vset.pattern.permute.xlu0 7
    %2342 = vperm.xlu0 %2341, %v2227
    %v2343 = vpop.permute.xlu0 %2342
    %v2345 = vlaneseq
    %v2346 = vshrl.u32 %v2345, 7
    %v2347 = vsub.s32 7, %v2346
    %v2348 = vrot.slane %v2224, %v2347
    %v2349 = vlaneseq
    %v2350 = vshrl.u32 %v2349, 7
    %v2351 = vsub.s32 7, %v2350
    %v2352 = vrot.slane %v2225, %v2351
    %v2353 = vmul.f32 %v2343, %v2348
    %v2354 = vmul.f32 %v2343, %v2352
    %v2355 = vadd.f32 %v2339, %v2353
    %v2356 = vadd.f32 %v2340, %v2354
    %2357 = vrot.lane.b32.xlu0 %v1391, 112
    %v2358 = vpop.permute.xlu0 %2357
    %2359 = vrot.lane.b32.xlu0 %v1392, 112
    %v2360 = vpop.permute.xlu0 %2359
    %v2361 = vsel %vm1052, %v2358, %v2360
    %v2362 = vsel %vm1052, %v2360, %v2358
    %v2363 = vmul.f32 %v2361, %v1058
    %v2364 = vmul.f32 %v2362, %v1062
    %s2365 = scalar_lea.vmem %s2, 56
    %v2366 = vld [vmem:[%s2365] sm:$0xff]
    %2368 = vset.pattern.permute.xlu0 0
    %2369 = vperm.xlu0 %2368, %v2366
    %v2370 = vpop.permute.xlu0 %2369
    %v2372 = vlaneseq
    %v2373 = vshrl.u32 %v2372, 7
    %v2374 = vsub.s32 0, %v2373
    %v2375 = vrot.slane %v2363, %v2374
    %v2376 = vlaneseq
    %v2377 = vshrl.u32 %v2376, 7
    %v2378 = vsub.s32 0, %v2377
    %v2379 = vrot.slane %v2364, %v2378
    %v2380 = vmul.f32 %v2370, %v2375
    %v2381 = vmul.f32 %v2370, %v2379
    %v2382 = vadd.f32 %v2355, %v2380
    %v2383 = vadd.f32 %v2356, %v2381
    %2384 = vset.pattern.permute.xlu0 1
    %2385 = vperm.xlu0 %2384, %v2366
    %v2386 = vpop.permute.xlu0 %2385
    %v2388 = vlaneseq
    %v2389 = vshrl.u32 %v2388, 7
    %v2390 = vsub.s32 1, %v2389
    %v2391 = vrot.slane %v2363, %v2390
    %v2392 = vlaneseq
    %v2393 = vshrl.u32 %v2392, 7
    %v2394 = vsub.s32 1, %v2393
    %v2395 = vrot.slane %v2364, %v2394
    %v2396 = vmul.f32 %v2386, %v2391
    %v2397 = vmul.f32 %v2386, %v2395
    %v2398 = vadd.f32 %v2382, %v2396
    %v2399 = vadd.f32 %v2383, %v2397
    %2400 = vset.pattern.permute.xlu0 2
    %2401 = vperm.xlu0 %2400, %v2366
    %v2402 = vpop.permute.xlu0 %2401
    %v2404 = vlaneseq
    %v2405 = vshrl.u32 %v2404, 7
    %v2406 = vsub.s32 2, %v2405
    %v2407 = vrot.slane %v2363, %v2406
    %v2408 = vlaneseq
    %v2409 = vshrl.u32 %v2408, 7
    %v2410 = vsub.s32 2, %v2409
    %v2411 = vrot.slane %v2364, %v2410
    %v2412 = vmul.f32 %v2402, %v2407
    %v2413 = vmul.f32 %v2402, %v2411
    %v2414 = vadd.f32 %v2398, %v2412
    %v2415 = vadd.f32 %v2399, %v2413
    %2416 = vset.pattern.permute.xlu0 3
    %2417 = vperm.xlu0 %2416, %v2366
    %v2418 = vpop.permute.xlu0 %2417
    %v2420 = vlaneseq
    %v2421 = vshrl.u32 %v2420, 7
    %v2422 = vsub.s32 3, %v2421
    %v2423 = vrot.slane %v2363, %v2422
    %v2424 = vlaneseq
    %v2425 = vshrl.u32 %v2424, 7
    %v2426 = vsub.s32 3, %v2425
    %v2427 = vrot.slane %v2364, %v2426
    %v2428 = vmul.f32 %v2418, %v2423
    %v2429 = vmul.f32 %v2418, %v2427
    %v2430 = vadd.f32 %v2414, %v2428
    %v2431 = vadd.f32 %v2415, %v2429
    %2432 = vset.pattern.permute.xlu0 4
    %2433 = vperm.xlu0 %2432, %v2366
    %v2434 = vpop.permute.xlu0 %2433
    %v2436 = vlaneseq
    %v2437 = vshrl.u32 %v2436, 7
    %v2438 = vsub.s32 4, %v2437
    %v2439 = vrot.slane %v2363, %v2438
    %v2440 = vlaneseq
    %v2441 = vshrl.u32 %v2440, 7
    %v2442 = vsub.s32 4, %v2441
    %v2443 = vrot.slane %v2364, %v2442
    %v2444 = vmul.f32 %v2434, %v2439
    %v2445 = vmul.f32 %v2434, %v2443
    %v2446 = vadd.f32 %v2430, %v2444
    %v2447 = vadd.f32 %v2431, %v2445
    %2448 = vset.pattern.permute.xlu0 5
    %2449 = vperm.xlu0 %2448, %v2366
    %v2450 = vpop.permute.xlu0 %2449
    %v2452 = vlaneseq
    %v2453 = vshrl.u32 %v2452, 7
    %v2454 = vsub.s32 5, %v2453
    %v2455 = vrot.slane %v2363, %v2454
    %v2456 = vlaneseq
    %v2457 = vshrl.u32 %v2456, 7
    %v2458 = vsub.s32 5, %v2457
    %v2459 = vrot.slane %v2364, %v2458
    %v2460 = vmul.f32 %v2450, %v2455
    %v2461 = vmul.f32 %v2450, %v2459
    %v2462 = vadd.f32 %v2446, %v2460
    %v2463 = vadd.f32 %v2447, %v2461
    %2464 = vset.pattern.permute.xlu0 6
    %2465 = vperm.xlu0 %2464, %v2366
    %v2466 = vpop.permute.xlu0 %2465
    %v2468 = vlaneseq
    %v2469 = vshrl.u32 %v2468, 7
    %v2470 = vsub.s32 6, %v2469
    %v2471 = vrot.slane %v2363, %v2470
    %v2472 = vlaneseq
    %v2473 = vshrl.u32 %v2472, 7
    %v2474 = vsub.s32 6, %v2473
    %v2475 = vrot.slane %v2364, %v2474
    %v2476 = vmul.f32 %v2466, %v2471
    %v2477 = vmul.f32 %v2466, %v2475
    %v2478 = vadd.f32 %v2462, %v2476
    %v2479 = vadd.f32 %v2463, %v2477
    %2480 = vset.pattern.permute.xlu0 7
    %2481 = vperm.xlu0 %2480, %v2366
    %v2482 = vpop.permute.xlu0 %2481
    %v2484 = vlaneseq
    %v2485 = vshrl.u32 %v2484, 7
    %v2486 = vsub.s32 7, %v2485
    %v2487 = vrot.slane %v2363, %v2486
    %v2488 = vlaneseq
    %v2489 = vshrl.u32 %v2488, 7
    %v2490 = vsub.s32 7, %v2489
    %v2491 = vrot.slane %v2364, %v2490
    %v2492 = vmul.f32 %v2482, %v2487
    %v2493 = vmul.f32 %v2482, %v2491
    %v2494 = vadd.f32 %v2478, %v2492
    %v2495 = vadd.f32 %v2479, %v2493
    %2496 = vrot.lane.b32.xlu0 %v1391, 111
    %v2497 = vpop.permute.xlu0 %2496
    %2498 = vrot.lane.b32.xlu0 %v1392, 111
    %v2499 = vpop.permute.xlu0 %2498
    %v2500 = vsel %vm1200, %v2497, %v2499
    %v2501 = vsel %vm1200, %v2499, %v2497
    %v2502 = vmul.f32 %v2500, %v1206
    %v2503 = vmul.f32 %v2501, %v1210
    %s2504 = scalar_lea.vmem %s2, 64
    %v2505 = vld [vmem:[%s2504] sm:$0xff]
    %2507 = vset.pattern.permute.xlu0 0
    %2508 = vperm.xlu0 %2507, %v2505
    %v2509 = vpop.permute.xlu0 %2508
    %v2511 = vlaneseq
    %v2512 = vshrl.u32 %v2511, 7
    %v2513 = vsub.s32 0, %v2512
    %v2514 = vrot.slane %v2502, %v2513
    %v2515 = vlaneseq
    %v2516 = vshrl.u32 %v2515, 7
    %v2517 = vsub.s32 0, %v2516
    %v2518 = vrot.slane %v2503, %v2517
    %v2519 = vmul.f32 %v2509, %v2514
    %v2520 = vmul.f32 %v2509, %v2518
    %v2521 = vadd.f32 %v2494, %v2519
    %v2522 = vadd.f32 %v2495, %v2520
    %2523 = vset.pattern.permute.xlu0 1
    %2524 = vperm.xlu0 %2523, %v2505
    %v2525 = vpop.permute.xlu0 %2524
    %v2527 = vlaneseq
    %v2528 = vshrl.u32 %v2527, 7
    %v2529 = vsub.s32 1, %v2528
    %v2530 = vrot.slane %v2502, %v2529
    %v2531 = vlaneseq
    %v2532 = vshrl.u32 %v2531, 7
    %v2533 = vsub.s32 1, %v2532
    %v2534 = vrot.slane %v2503, %v2533
    %v2535 = vmul.f32 %v2525, %v2530
    %v2536 = vmul.f32 %v2525, %v2534
    %v2537 = vadd.f32 %v2521, %v2535
    %v2538 = vadd.f32 %v2522, %v2536
    %2539 = vset.pattern.permute.xlu0 2
    %2540 = vperm.xlu0 %2539, %v2505
    %v2541 = vpop.permute.xlu0 %2540
    %v2543 = vlaneseq
    %v2544 = vshrl.u32 %v2543, 7
    %v2545 = vsub.s32 2, %v2544
    %v2546 = vrot.slane %v2502, %v2545
    %v2547 = vlaneseq
    %v2548 = vshrl.u32 %v2547, 7
    %v2549 = vsub.s32 2, %v2548
    %v2550 = vrot.slane %v2503, %v2549
    %v2551 = vmul.f32 %v2541, %v2546
    %v2552 = vmul.f32 %v2541, %v2550
    %v2553 = vadd.f32 %v2537, %v2551
    %v2554 = vadd.f32 %v2538, %v2552
    %2555 = vset.pattern.permute.xlu0 3
    %2556 = vperm.xlu0 %2555, %v2505
    %v2557 = vpop.permute.xlu0 %2556
    %v2559 = vlaneseq
    %v2560 = vshrl.u32 %v2559, 7
    %v2561 = vsub.s32 3, %v2560
    %v2562 = vrot.slane %v2502, %v2561
    %v2563 = vlaneseq
    %v2564 = vshrl.u32 %v2563, 7
    %v2565 = vsub.s32 3, %v2564
    %v2566 = vrot.slane %v2503, %v2565
    %v2567 = vmul.f32 %v2557, %v2562
    %v2568 = vmul.f32 %v2557, %v2566
    %v2569 = vadd.f32 %v2553, %v2567
    %v2570 = vadd.f32 %v2554, %v2568
    %2571 = vset.pattern.permute.xlu0 4
    %2572 = vperm.xlu0 %2571, %v2505
    %v2573 = vpop.permute.xlu0 %2572
    %v2575 = vlaneseq
    %v2576 = vshrl.u32 %v2575, 7
    %v2577 = vsub.s32 4, %v2576
    %v2578 = vrot.slane %v2502, %v2577
    %v2579 = vlaneseq
    %v2580 = vshrl.u32 %v2579, 7
    %v2581 = vsub.s32 4, %v2580
    %v2582 = vrot.slane %v2503, %v2581
    %v2583 = vmul.f32 %v2573, %v2578
    %v2584 = vmul.f32 %v2573, %v2582
    %v2585 = vadd.f32 %v2569, %v2583
    %v2586 = vadd.f32 %v2570, %v2584
    %2587 = vset.pattern.permute.xlu0 5
    %2588 = vperm.xlu0 %2587, %v2505
    %v2589 = vpop.permute.xlu0 %2588
    %v2591 = vlaneseq
    %v2592 = vshrl.u32 %v2591, 7
    %v2593 = vsub.s32 5, %v2592
    %v2594 = vrot.slane %v2502, %v2593
    %v2595 = vlaneseq
    %v2596 = vshrl.u32 %v2595, 7
    %v2597 = vsub.s32 5, %v2596
    %v2598 = vrot.slane %v2503, %v2597
    %v2599 = vmul.f32 %v2589, %v2594
    %v2600 = vmul.f32 %v2589, %v2598
    %v2601 = vadd.f32 %v2585, %v2599
    %v2602 = vadd.f32 %v2586, %v2600
    %2603 = vset.pattern.permute.xlu0 6
    %2604 = vperm.xlu0 %2603, %v2505
    %v2605 = vpop.permute.xlu0 %2604
    %v2607 = vlaneseq
    %v2608 = vshrl.u32 %v2607, 7
    %v2609 = vsub.s32 6, %v2608
    %v2610 = vrot.slane %v2502, %v2609
    %v2611 = vlaneseq
    %v2612 = vshrl.u32 %v2611, 7
    %v2613 = vsub.s32 6, %v2612
    %v2614 = vrot.slane %v2503, %v2613
    %v2615 = vmul.f32 %v2605, %v2610
    %v2616 = vmul.f32 %v2605, %v2614
    %v2617 = vadd.f32 %v2601, %v2615
    %v2618 = vadd.f32 %v2602, %v2616
    %2619 = vset.pattern.permute.xlu0 7
    %2620 = vperm.xlu0 %2619, %v2505
    %v2621 = vpop.permute.xlu0 %2620
    %v2623 = vlaneseq
    %v2624 = vshrl.u32 %v2623, 7
    %v2625 = vsub.s32 7, %v2624
    %v2626 = vrot.slane %v2502, %v2625
    %v2627 = vlaneseq
    %v2628 = vshrl.u32 %v2627, 7
    %v2629 = vsub.s32 7, %v2628
    %v2630 = vrot.slane %v2503, %v2629
    %v2631 = vmul.f32 %v2621, %v2626
    %v2632 = vmul.f32 %v2621, %v2630
    %v2633 = vadd.f32 %v2617, %v2631
    %v2634 = vadd.f32 %v2618, %v2632
    %2635 = vset.pattern.permute.xlu0 3
    %2636 = vperm.xlu0 %2635, %v23
    %v2637 = vpop.permute.xlu0 %2636
    %v2639 = vadd.f32 %v2633, %v2637
    %v2640 = vadd.f32 %v2634, %v2637
    %v2641 = vadd.f32 %v2639, %v2640
    %2642 = vadd.xlane.f32.xlu0 %v2641
    %v2643 = vpop.xlane.xlu0 %2642
    %v2644 = vrot.slane %v2643, 4
    %v2645 = vadd.f32 %v2643, %v2644
    %v2646 = vmul.f32 %v2645, 0.001953125
    %2648 = vset.pattern.permute.xlu0 0
    %2649 = vperm.xlu0 %2648, %v2646
    %v2650 = vpop.permute.xlu0 %2649
    %v2652 = vsub.f32 %v2639, %v2650
    %v2653 = vsub.f32 %v2640, %v2650
    %v2654 = vmul.f32 %v2652, %v2652
    %v2655 = vmul.f32 %v2653, %v2653
    %v2656 = vadd.f32 %v2654, %v2655
    %2657 = vadd.xlane.f32.xlu0 %v2656
    %v2658 = vpop.xlane.xlu0 %2657
    %v2659 = vrot.slane %v2658, 4
    %v2660 = vadd.f32 %v2658, %v2659
    %v2661 = vmul.f32 %v2660, 0.001953125
    %v2662 = vadd.f32 %v2661, 1e-05
    %v2663 = vrsqrt.pop %v2662
    %2664 = vrot.lane.b32.xlu0 %v23, 124
    %v2665 = vpop.permute.xlu0 %2664
    %v2667 = vmul.f32 %v2663, %v2665
    %2669 = vset.pattern.permute.xlu0 0
    %2670 = vperm.xlu0 %2669, %v2667
    %v2671 = vpop.permute.xlu0 %2670
    %v2673 = vmul.f32 %v2652, %v2671
    %v2674 = vmul.f32 %v2653, %v2671
    %2675 = vset.pattern.permute.xlu0 5
    %2676 = vperm.xlu0 %2675, %v23
    %v2677 = vpop.permute.xlu0 %2676
    %v2679 = vadd.f32 %v2673, %v2677
    %v2680 = vadd.f32 %v2674, %v2677
    %v2681 = vadd.f32 %v2679, %v21
    %v2682 = vadd.f32 %v2680, %v22
    %v2683 = vmax.f32 %v2681, 0.0
    %v2684 = vmax.f32 %v2682, 0.0
    %2685 = vst [vmem:[#allocation2] sm:$0xff] %v2683
    %2686 = vst [vmem:[#allocation2 + $0x8] sm:$0xff] %v2684
    // Predicated region
    $region22: #{tpu_custom_call.1} parent=1 // pred_check
      _
    $region23: #{tpu_custom_call.1} parent=1 // pred_check_branch
      %2688 = sbr.rel (0) target = $region25
    $region24: #{tpu_custom_call.1} parent=1 // pred_region
      %s2690 = ssub.s32 256, 256
      %2691 = vsyncadd [#allocation3], %s2690
      %s2693 = sshll.u32 [#allocation2], 4
      %s2694 = int_to_ptr.vmem [resolvable:$true] %s2693
      %2696 = dma.vmem_to_hbm [thread:$0]  %s2694, 256, %s5, [#allocation3]
    $region25: #{tpu_custom_call.1} parent=1 // pred_fallthru
      _
    // Predicated region
    $region26: #{tpu_custom_call.1} parent=1 // pred_check
      _
    $region27: #{tpu_custom_call.1} parent=1 // pred_check_branch
      %2698 = sbr.rel (0) target = $region29
    $region28: #{tpu_custom_call.1} parent=1 // pred_region
      %2699 = dma.done [#allocation3], 256
    $region29: #{tpu_custom_call.1} parent=1 // pred_fallthru
      _
    %2700 = vsyncpa [#allocation3], 1

</llo_original>
